<compile_context>
chip_gen: v6e
topology: v6e:2x2x1
jax: 0.10.0
libtpu: 0.0.40
codegen_flags: <defaults>
</compile_context>

<pallas_src>
import functools

import jax
import jax.numpy as jnp
import numpy as np
from jax.experimental import pallas as pl
from jax.experimental.pallas import tpu as pltpu

VERY_NEG_NUMBER = -100000000000.0


# ----------------------------------------------------------------------------
# Pallas kernel: TB batch elements per grid step.
# ----------------------------------------------------------------------------
def kvmem_kernel(
    leT_ref,     # (TB, WD, E_pad)   bf16  local-entity word embs, transposed (E on lanes)
    ehv_ref,     # (TB, 2F_pad, WD)  bf16  fused [head | tail] word embs
    rel_ref,     # (TB, F_pad, 2WD)  bf16  relation word embs
    qw_ref,      # (TB, Q, WD)       bf16  query word embs
    tmask_ref,   # (TB, F_pad)       f32   triplet mask (fact axis on lanes)
    lmask_ref,   # (TB, E_pad)       f32   local-entity mask
    ans_ref,     # (TB, E_pad)       f32   answer distribution (targets)
    we_ref,      # (WD, D)           bf16  entity_linear weight (transposed)
    be_ref,      # (1, D)            f32   entity_linear bias
    weT_ref,     # (D, WD)           f32   entity_linear weight (original orientation)
    wr_ref,      # (2WD, D)          bf16  relation_linear weight (transposed)
    br_ref,      # (1, D)            f32   relation_linear bias
    wih_ref,     # (WD, 4D)          bf16  LSTM input->gates weight (transposed, [i|f|o|g])
    whh_ref,     # (D, 4D)           f32   LSTM hidden->gates weight (transposed, [i|f|o|g])
    blstm_ref,   # (1, 4D)           f32   LSTM combined bias (b_ih + b_hh, [i|f|o|g])
    bce_ref,     # out (TB, E_pad)   f32   per-element BCE-with-logits loss
    mscore_ref,  # out (TB, E_pad)   f32   masked score (logits + padding penalty)
    pdist_ref,   # out (TB, E_pad)   f32   sigmoid(masked score) * entity mask
    *,
    num_layer: int,
):
    f32 = jnp.float32
    TB, Q, WD = qw_ref.shape
    D = whh_ref.shape[0]
    E_pad = lmask_ref.shape[1]
    F_pad = tmask_ref.shape[1]

    # ---- LSTM query encoder -------------------------------------------------
    # Hoist the input->gates matmul out of the recurrence (bf16 MXU, f32 acc);
    # the serial chain only carries the (TB,D)x(D,4D) hidden matmul + one
    # fused sigmoid over (TB,3D) and one tanh per step (gate order [i|f|o|g]).
    qw_flat = qw_ref[...].reshape(TB * Q, WD)
    gates_x = jnp.dot(qw_flat, wih_ref[...], preferred_element_type=f32)
    gates_x = gates_x.reshape(TB, Q, 4 * D) + blstm_ref[...]        # (TB, Q, 4D)

    whh = whh_ref[...]
    h = jnp.zeros((TB, D), f32)
    c = jnp.zeros((TB, D), f32)
    for t in range(Q):                              # short, fully unrolled
        gates = gates_x[:, t, :] + jnp.dot(h, whh, preferred_element_type=f32)
        sig = jax.nn.sigmoid(gates[:, :3 * D])      # one EUP pass for i, f, o
        i_g = sig[:, 0 * D:1 * D]
        f_g = sig[:, 1 * D:2 * D]
        o_g = sig[:, 2 * D:3 * D]
        g_g = jnp.tanh(gates[:, 3 * D:4 * D])
        c = f_g * c + i_g * g_g
        h = o_g * jnp.tanh(c)
    q = h                                            # query_node_emb, (TB, D)

    # ---- linear projections (word_dim != entity_dim branch) -----------------
    # head / tail share entity_linear -> one fused matmul; local entities are
    # handled algebraically at the scoring step (no (TB,E_pad,D) intermediate).
    ehv = ehv_ref[...].reshape(TB * 2 * F_pad, WD)                   # bf16
    proj = jnp.dot(ehv, we_ref[...], preferred_element_type=f32)     # (TB*2F, D)
    proj = proj.reshape(TB, 2 * F_pad, D) + be_ref[...]
    key_head = proj[:, :F_pad, :]                                    # (TB, F_pad, D)
    value = proj[:, F_pad:, :]                                       # (TB, F_pad, D)

    rel = rel_ref[...].reshape(TB * F_pad, rel_ref.shape[2])         # bf16
    key_rel = jnp.dot(rel, wr_ref[...], preferred_element_type=f32)  # (TB*F, D)
    key_rel = key_rel.reshape(TB, F_pad, D) + br_ref[...]
    key = key_head + key_rel                                         # (TB, F_pad, D)

    # ---- kv-memory attention layers (lane-dense 2-D softmax) ---------------
    attn_bias = (1.0 - tmask_ref[...]) * -10000000000.0              # (TB, F_pad)
    inv_sqrt_d = 1.0 / float(np.sqrt(D))
    for _ in range(num_layer):
        # s[b, f] = sum_d q[b, d] * key[b, f, d]
        s = jnp.sum(q[:, None, :] * key, axis=-1)                    # (TB, F_pad)
        s = (s + attn_bias) * inv_sqrt_d
        s = s - jnp.max(s, axis=-1, keepdims=True)
        e = jnp.exp(s)
        p = e * pl.reciprocal(jnp.sum(e, axis=-1, keepdims=True), approx=True)
        v = jnp.sum(p[:, :, None] * value, axis=1)                   # (TB, D)
        q = q + v

    # ---- scoring over local entities (algebraic fold, E_pad on lanes) ------
    # score[b,e] = (le_raw[b,e,:] @ We + be) . q[b,:]
    #            = le_raw[b,e,:] @ (We @ q[b,:]) + be . q[b,:]
    wq = jnp.dot(q, weT_ref[...], preferred_element_type=f32)        # (TB, WD)
    bq = jnp.sum(q * be_ref[...], axis=1, keepdims=True)             # (TB, 1)
    score = jnp.sum(leT_ref[...] * wq[:, :, None], axis=1) + bq      # (TB, E_pad)

    ans = ans_ref[...]
    lmask = lmask_ref[...]

    # One exp(-|x|) pass feeds both the stable BCE-with-logits and sigmoid.
    t = jnp.exp(-jnp.abs(score))
    bce_ref[...] = jnp.maximum(score, 0.0) - score * ans + jnp.log1p(t)

    masked = score + (1.0 - lmask) * VERY_NEG_NUMBER
    mscore_ref[...] = masked

    inv = 1.0 / (1.0 + t)
    sig = jnp.where(score >= 0.0, inv, t * inv)      # == sigmoid(score)
    pdist_ref[...] = sig * lmask                     # == sigmoid(masked) * lmask


# ----------------------------------------------------------------------------
# Wrapper: embeddings (gather) + padding in JAX, hot path in the Pallas kernel.
# ----------------------------------------------------------------------------
def kvmem_forward(params, config, local_entity, head_ids, rel_ids, tail_ids,
                  tripet_mask, query_text, answer_dist, *, batch_tile=64,
                  vmem_limit_bytes=48 * 1024 * 1024):
    B, E = local_entity.shape
    _, F = head_ids.shape
    _, Q = query_text.shape
    WD = config["word_dim"]
    D = config["entity_dim"]

    f32, bf16 = jnp.float32, jnp.bfloat16

    def rup(x, m):
        return ((x + m - 1) // m) * m

    # Batch tile: multiple of 8 sublanes, clamped to the (padded) batch so tiny
    # demo batches don't over-pad.  For real workloads keep B_pad // TB >= 4 on
    # v7x so both TensorCores get pipelined work under dimension_semantics.
    TB = max(8, min(rup(batch_tile, 8), rup(B, 8)))
    B_pad = rup(B, TB)
    E_pad = rup(E, 128)        # lane-dense outputs / entity axis
    F_pad = rup(F, 16)         # whole bf16 sublane tiles per batch slab

    local_entity_mask = (local_entity != config["num_entity"]).astype(f32)

    # ---- embedding gathers (heavy streamed tensors in bf16) ----------------
    ent_tab = params["entity_embedding"].astype(bf16)
    rel_tab = params["relation_embedding"].astype(bf16)
    word_tab = params["word_embedding"].astype(bf16)
    le_raw = jnp.take(ent_tab, local_entity, axis=0)            # (B, E, WD)
    head_raw = jnp.take(ent_tab, head_ids, axis=0)              # (B, F, WD)
    rel_raw = jnp.take(rel_tab, rel_ids, axis=0)                # (B, F, 2WD)
    tail_raw = jnp.take(ent_tab, tail_ids, axis=0)              # (B, F, WD)
    qw = jnp.take(word_tab, query_text, axis=0)                 # (B, Q, WD)

    def pad_axis(x, axis, target):
        if x.shape[axis] == target:
            return x
        widths = [(0, 0)] * x.ndim
        widths[axis] = (0, target - x.shape[axis])
        return jnp.pad(x, widths)

    # Entity / fact padding (padded facts carry tripet_mask = 0 -> zero attn
    # weight; padded entities are sliced off before loss / argmax).
    le_raw = pad_axis(le_raw, 1, E_pad)                              # (B, E_pad, WD)
    leT = jnp.transpose(le_raw, (0, 2, 1))                           # (B, WD, E_pad)
    head_raw = pad_axis(head_raw, 1, F_pad)
    tail_raw = pad_axis(tail_raw, 1, F_pad)
    rel_raw = pad_axis(rel_raw, 1, F_pad)

    # Fused entity_linear input: [head | tail] rows share the weight (the
    # local-entity branch is folded algebraically into the scoring step).
    ehv = jnp.concatenate([head_raw, tail_raw], axis=1)              # (B, 2F_pad, WD)

    tmask = pad_axis(tripet_mask.astype(f32), 1, F_pad)              # (B, F_pad)
    lmask = pad_axis(local_entity_mask, 1, E_pad)                    # (B, E_pad)
    ans = pad_axis(answer_dist.astype(f32), 1, E_pad)                # (B, E_pad)

    # Batch padding up to a multiple of the batch tile.
    leT = pad_axis(leT, 0, B_pad)
    ehv = pad_axis(ehv, 0, B_pad)
    rel_raw = pad_axis(rel_raw, 0, B_pad)
    qw = pad_axis(qw, 0, B_pad)
    tmask = pad_axis(tmask, 0, B_pad)
    lmask = pad_axis(lmask, 0, B_pad)
    ans = pad_axis(ans, 0, B_pad)

    # LSTM weights: PyTorch gate order [i|f|g|o] -> [i|f|o|g] so the kernel
    # fuses the three sigmoids into one EUP pass per recurrence step.
    def reorder_gates(w):
        return jnp.concatenate(
            [w[..., :2 * D], w[..., 3 * D:4 * D], w[..., 2 * D:3 * D]], axis=-1)

    wih = reorder_gates(params["lstm_w_ih"]).astype(bf16)
    whh = reorder_gates(params["lstm_w_hh"])
    blstm = reorder_gates(params["lstm_b"])

    kernel = functools.partial(kvmem_kernel, num_layer=config["num_layer"])

    tile3 = lambda shp: pl.BlockSpec(shp, lambda g: (g, 0, 0))
    tile2 = lambda shp: pl.BlockSpec(shp, lambda g: (g, 0))
    shared = lambda shp: pl.BlockSpec(shp, lambda g: (0, 0))

    bce, score_masked, pred_dist = pl.pallas_call(
        kernel,
        out_shape=(
            jax.ShapeDtypeStruct((B_pad, E_pad), f32),
            jax.ShapeDtypeStruct((B_pad, E_pad), f32),
            jax.ShapeDtypeStruct((B_pad, E_pad), f32),
        ),
        grid_spec=pltpu.PrefetchScalarGridSpec(
            num_scalar_prefetch=0,
            grid=(B_pad // TB,),
            in_specs=[
                tile3((TB, WD, E_pad)),         # local word embs, transposed (bf16)
                tile3((TB, 2 * F_pad, WD)),     # fused [head|tail] word embs (bf16)
                tile3((TB, F_pad, 2 * WD)),     # relation embs (bf16)
                tile3((TB, Q, WD)),             # query word embs (bf16)
                tile2((TB, F_pad)),             # triplet mask (2-D, lane-dense softmax)
                tile2((TB, E_pad)),             # local-entity mask
                tile2((TB, E_pad)),             # answer dist
                shared((WD, D)),                # entity_linear W^T (bf16)
                shared((1, D)),                 # entity_linear b
                shared((D, WD)),                # entity_linear W (for score fold, f32)
                shared((2 * WD, D)),            # relation_linear W^T (bf16)
                shared((1, D)),                 # relation_linear b
                shared((WD, 4 * D)),            # LSTM W_ih^T (bf16, [i|f|o|g])
                shared((D, 4 * D)),             # LSTM W_hh^T ([i|f|o|g])
                shared((1, 4 * D)),             # LSTM bias (b_ih + b_hh, [i|f|o|g])
            ],
            out_specs=[
                tile2((TB, E_pad)),
                tile2((TB, E_pad)),
                tile2((TB, E_pad)),
            ],
        ),
        compiler_params=pltpu.CompilerParams(
            dimension_semantics=("parallel",),
            vmem_limit_bytes=vmem_limit_bytes,   # 48 MiB: safe on v5e/v6e/v7x
        ),
    )(
        leT, ehv, rel_raw, qw, tmask, lmask, ans,
        params["entity_linear_w"].astype(bf16), params["entity_linear_b"],
        params["entity_linear_w"].T.astype(f32),
        params["relation_linear_w"].astype(bf16), params["relation_linear_b"],
        wih, whh, blstm,
    )

    # Drop batch / entity padding before the reductions.
    bce = bce[:B, :E]
    score_masked = score_masked[:B, :E]
    pred_dist = pred_dist[:B, :E]

    loss = jnp.mean(bce)                     # BCEWithLogitsLoss (mean over B*E)
    pred = jnp.argmax(score_masked, axis=1)
    return loss, pred, pred_dist


# ----------------------------------------------------------------------------
# Deterministic parameter initialization (synthetic; no checkpoint load).
# ----------------------------------------------------------------------------
def init_params(key, config):
    WD = config["word_dim"]
    D = config["entity_dim"]
    NE = config["num_entity"]
    NR = config["num_relation"]
    NW = config["num_word"]
    ks = jax.random.split(key, 10)

    def nrm(k, shape, scale=0.1):
        return scale * jax.random.normal(k, shape, dtype=jnp.float32)

    ent_tab = nrm(ks[0], (NE + 1, WD)).at[NE].set(0.0)        # padding_idx row = 0
    rel_tab = nrm(ks[1], (NR + 1, 2 * WD)).at[NR].set(0.0)
    word_tab = nrm(ks[2], (NW + 1, WD)).at[NW].set(0.0)

    params = {
        "entity_embedding": ent_tab,
        "relation_embedding": rel_tab,
        "word_embedding": word_tab,
        "entity_linear_w": nrm(ks[3], (WD, D)),               # stored pre-transposed
        "entity_linear_b": nrm(ks[4], (1, D)),
        "relation_linear_w": nrm(ks[5], (2 * WD, D)),
        "relation_linear_b": nrm(ks[6], (1, D)),
        "lstm_w_ih": nrm(ks[7], (WD, 4 * D)),                 # PyTorch gate order i,f,g,o
        "lstm_w_hh": nrm(ks[8], (D, 4 * D)),
        "lstm_b": nrm(ks[9], (1, 4 * D)),                     # b_ih + b_hh combined
    }
    return params


if __name__ == "__main__":
    config = {
        "num_layer": 3,
        "num_relation": 10,
        "num_entity": 50,
        "num_word": 40,
        "entity_dim": 32,
        "word_dim": 16,   # word_dim != entity_dim -> linear projections are used
        "lstm_dropout": 0.0,
        "linear_dropout": 0.0,
    }
    B, E, F, Q = 2, 32, 16, 8   # batch, max_local_entity, max_fact, max_query_word

    key = jax.random.PRNGKey(0)
    kp, kd = jax.random.split(key)
    params = init_params(kp, config)

    d = jax.random.split(kd, 7)
    local_entity = jax.random.randint(d[0], (B, E), 0, config["num_entity"] + 1,
                                      dtype=jnp.int32)
    head_ids = jax.random.randint(d[1], (B, F), 0, config["num_entity"],
                                  dtype=jnp.int32)
    rel_ids = jax.random.randint(d[2], (B, F), 0, config["num_relation"],
                                 dtype=jnp.int32)
    tail_ids = jax.random.randint(d[3], (B, F), 0, config["num_entity"],
                                  dtype=jnp.int32)
    tripet_mask = jax.random.bernoulli(d[4], 0.8, (B, F)).astype(jnp.float32)
    tripet_mask = tripet_mask.at[:, 0].set(1.0)   # keep at least one live fact
    query_text = jax.random.randint(d[5], (B, Q), 0, config["num_word"] + 1,
                                    dtype=jnp.int32)
    answer_dist = jax.random.bernoulli(d[6], 0.1, (B, E)).astype(jnp.float32)

    fwd = jax.jit(functools.partial(kvmem_forward, params, config))
    loss, pred, pred_dist = fwd(local_entity, head_ids, rel_ids, tail_ids,
                                tripet_mask, query_text, answer_dist)
    jax.block_until_ready((loss, pred, pred_dist))
    assert pred_dist.shape == (B, E) and pred.shape == (B,)
    assert bool(jnp.isfinite(loss))
    print("KERNEL_OK")
</pallas_src>

<mosaic_0001>
module attributes {stable_mosaic.version = 11 : i64} {
  func.func @kvmem_kernel(%arg0: i32, %arg1: memref<8x16x128xbf16, #tpu.memory_space<vmem>>, %arg2: memref<8x32x16xbf16, #tpu.memory_space<vmem>>, %arg3: memref<8x16x32xbf16, #tpu.memory_space<vmem>>, %arg4: memref<8x8x16xbf16, #tpu.memory_space<vmem>>, %arg5: memref<8x16xf32, #tpu.memory_space<vmem>>, %arg6: memref<8x128xf32, #tpu.memory_space<vmem>>, %arg7: memref<8x128xf32, #tpu.memory_space<vmem>>, %arg8: memref<16x32xbf16, #tpu.memory_space<vmem>>, %arg9: memref<1x32xf32, #tpu.memory_space<vmem>>, %arg10: memref<32x16xf32, #tpu.memory_space<vmem>>, %arg11: memref<32x32xbf16, #tpu.memory_space<vmem>>, %arg12: memref<1x32xf32, #tpu.memory_space<vmem>>, %arg13: memref<16x128xbf16, #tpu.memory_space<vmem>>, %arg14: memref<32x128xf32, #tpu.memory_space<vmem>>, %arg15: memref<1x128xf32, #tpu.memory_space<vmem>>, %arg16: memref<8x128xf32, #tpu.memory_space<vmem>>, %arg17: memref<8x128xf32, #tpu.memory_space<vmem>>, %arg18: memref<8x128xf32, #tpu.memory_space<vmem>>) attributes {dimension_semantics = [#tpu.dimension_semantics<parallel>], iteration_bounds = array<i64: 1>, scalar_prefetch = 0 : i64, scratch_operands = 0 : i64, tpu.core_type = #tpu.core_type<tc>, window_params = [{transform_indices = @transform_0, window_bounds = array<i64: 8, 16, 128>}, {transform_indices = @transform_1, window_bounds = array<i64: 8, 32, 16>}, {transform_indices = @transform_2, window_bounds = array<i64: 8, 16, 32>}, {transform_indices = @transform_3, window_bounds = array<i64: 8, 8, 16>}, {transform_indices = @transform_4, window_bounds = array<i64: 8, 16>}, {transform_indices = @transform_5, window_bounds = array<i64: 8, 128>}, {transform_indices = @transform_6, window_bounds = array<i64: 8, 128>}, {pipeline_mode = #tpu.pipeline_mode<synchronous>, transform_indices = @transform_7, window_bounds = array<i64: 16, 32>}, {pipeline_mode = #tpu.pipeline_mode<synchronous>, transform_indices = @transform_8, window_bounds = array<i64: 1, 32>}, {pipeline_mode = #tpu.pipeline_mode<synchronous>, transform_indices = @transform_9, window_bounds = array<i64: 32, 16>}, {pipeline_mode = #tpu.pipeline_mode<synchronous>, transform_indices = @transform_10, window_bounds = array<i64: 32, 32>}, {pipeline_mode = #tpu.pipeline_mode<synchronous>, transform_indices = @transform_11, window_bounds = array<i64: 1, 32>}, {pipeline_mode = #tpu.pipeline_mode<synchronous>, transform_indices = @transform_12, window_bounds = array<i64: 16, 128>}, {pipeline_mode = #tpu.pipeline_mode<synchronous>, transform_indices = @transform_13, window_bounds = array<i64: 32, 128>}, {pipeline_mode = #tpu.pipeline_mode<synchronous>, transform_indices = @transform_14, window_bounds = array<i64: 1, 128>}, {transform_indices = @transform_15, window_bounds = array<i64: 8, 128>}, {transform_indices = @transform_16, window_bounds = array<i64: 8, 128>}, {transform_indices = @transform_17, window_bounds = array<i64: 8, 128>}]} {
    %c0 = arith.constant 0 : index
    %c0_0 = arith.constant 0 : index
    %c0_1 = arith.constant 0 : index
    %0 = vector.load %arg4[%c0, %c0_0, %c0_1] : memref<8x8x16xbf16, #tpu.memory_space<vmem>>, vector<8x8x16xbf16>
    %1 = vector.shape_cast %0 : vector<8x8x16xbf16> to vector<64x16xbf16>
    %c0_2 = arith.constant 0 : index
    %c0_3 = arith.constant 0 : index
    %2 = vector.load %arg13[%c0_2, %c0_3] : memref<16x128xbf16, #tpu.memory_space<vmem>>, vector<16x128xbf16>
    %cst = arith.constant dense<0.000000e+00> : vector<64x128xf32>
    %3 = tpu.matmul %1, %2, %cst {dimension_numbers = #tpu.dot_dimension_numbers<[1], [0], [0], [1], [0, 0, 1, 1], [], []>} : vector<64x16xbf16>, vector<16x128xbf16>, vector<64x128xf32> -> vector<64x128xf32>
    %4 = vector.shape_cast %3 : vector<64x128xf32> to vector<8x8x128xf32>
    %c0_4 = arith.constant 0 : index
    %c0_5 = arith.constant 0 : index
    %5 = vector.load %arg15[%c0_4, %c0_5] : memref<1x128xf32, #tpu.memory_space<vmem>>, vector<1x128xf32>
    %6 = vector.shape_cast %5 : vector<1x128xf32> to vector<1x1x128xf32>
    %7 = vector.broadcast %6 : vector<1x1x128xf32> to vector<8x8x128xf32>
    %8 = arith.addf %4, %7 : vector<8x8x128xf32>
    %c0_6 = arith.constant 0 : index
    %c0_7 = arith.constant 0 : index
    %9 = vector.load %arg14[%c0_6, %c0_7] : memref<32x128xf32, #tpu.memory_space<vmem>>, vector<32x128xf32>
    %cst_8 = arith.constant 0.000000e+00 : f32
    %10 = vector.broadcast %cst_8 : f32 to vector<8x32xf32>
    %cst_9 = arith.constant 0.000000e+00 : f32
    %11 = vector.broadcast %cst_9 : f32 to vector<8x32xf32>
    %12 = vector.extract_strided_slice %8 {offsets = [0, 0, 0], sizes = [8, 1, 128], strides = [1, 1, 1]} : vector<8x8x128xf32> to vector<8x1x128xf32>
    %13 = vector.shape_cast %12 : vector<8x1x128xf32> to vector<8x128xf32>
    %cst_10 = arith.constant dense<0.000000e+00> : vector<8x128xf32>
    %14 = tpu.matmul %10, %9, %cst_10 {dimension_numbers = #tpu.dot_dimension_numbers<[1], [0], [0], [1], [0, 0, 1, 1], [], []>} : vector<8x32xf32>, vector<32x128xf32>, vector<8x128xf32> -> vector<8x128xf32>
    %15 = arith.addf %13, %14 : vector<8x128xf32>
    %16 = vector.extract_strided_slice %15 {offsets = [0, 0], sizes = [8, 96], strides = [1, 1]} : vector<8x128xf32> to vector<8x96xf32>
    %17 = arith.negf %16 : vector<8x96xf32>
    %18 = math.exp %17 : vector<8x96xf32>
    %cst_11 = arith.constant 1.000000e+00 : f32
    %19 = vector.broadcast %cst_11 : f32 to vector<8x96xf32>
    %20 = arith.addf %19, %18 : vector<8x96xf32>
    %21 = arith.divf %19, %20 : vector<8x96xf32>
    %22 = vector.extract_strided_slice %21 {offsets = [0, 0], sizes = [8, 32], strides = [1, 1]} : vector<8x96xf32> to vector<8x32xf32>
    %23 = vector.extract_strided_slice %21 {offsets = [0, 32], sizes = [8, 32], strides = [1, 1]} : vector<8x96xf32> to vector<8x32xf32>
    %24 = vector.extract_strided_slice %21 {offsets = [0, 64], sizes = [8, 32], strides = [1, 1]} : vector<8x96xf32> to vector<8x32xf32>
    %25 = vector.extract_strided_slice %15 {offsets = [0, 96], sizes = [8, 32], strides = [1, 1]} : vector<8x128xf32> to vector<8x32xf32>
    %26 = math.tanh %25 : vector<8x32xf32>
    %27 = arith.mulf %23, %11 : vector<8x32xf32>
    %28 = arith.mulf %22, %26 : vector<8x32xf32>
    %29 = arith.addf %27, %28 : vector<8x32xf32>
    %30 = math.tanh %29 : vector<8x32xf32>
    %31 = arith.mulf %24, %30 : vector<8x32xf32>
    %32 = vector.extract_strided_slice %8 {offsets = [0, 1, 0], sizes = [8, 1, 128], strides = [1, 1, 1]} : vector<8x8x128xf32> to vector<8x1x128xf32>
    %33 = vector.shape_cast %32 : vector<8x1x128xf32> to vector<8x128xf32>
    %cst_12 = arith.constant dense<0.000000e+00> : vector<8x128xf32>
    %34 = tpu.matmul %31, %9, %cst_12 {dimension_numbers = #tpu.dot_dimension_numbers<[1], [0], [0], [1], [0, 0, 1, 1], [], []>} : vector<8x32xf32>, vector<32x128xf32>, vector<8x128xf32> -> vector<8x128xf32>
    %35 = arith.addf %33, %34 : vector<8x128xf32>
    %36 = vector.extract_strided_slice %35 {offsets = [0, 0], sizes = [8, 96], strides = [1, 1]} : vector<8x128xf32> to vector<8x96xf32>
    %37 = arith.negf %36 : vector<8x96xf32>
    %38 = math.exp %37 : vector<8x96xf32>
    %cst_13 = arith.constant 1.000000e+00 : f32
    %39 = vector.broadcast %cst_13 : f32 to vector<8x96xf32>
    %40 = arith.addf %39, %38 : vector<8x96xf32>
    %41 = arith.divf %39, %40 : vector<8x96xf32>
    %42 = vector.extract_strided_slice %41 {offsets = [0, 0], sizes = [8, 32], strides = [1, 1]} : vector<8x96xf32> to vector<8x32xf32>
    %43 = vector.extract_strided_slice %41 {offsets = [0, 32], sizes = [8, 32], strides = [1, 1]} : vector<8x96xf32> to vector<8x32xf32>
    %44 = vector.extract_strided_slice %41 {offsets = [0, 64], sizes = [8, 32], strides = [1, 1]} : vector<8x96xf32> to vector<8x32xf32>
    %45 = vector.extract_strided_slice %35 {offsets = [0, 96], sizes = [8, 32], strides = [1, 1]} : vector<8x128xf32> to vector<8x32xf32>
    %46 = math.tanh %45 : vector<8x32xf32>
    %47 = arith.mulf %43, %29 : vector<8x32xf32>
    %48 = arith.mulf %42, %46 : vector<8x32xf32>
    %49 = arith.addf %47, %48 : vector<8x32xf32>
    %50 = math.tanh %49 : vector<8x32xf32>
    %51 = arith.mulf %44, %50 : vector<8x32xf32>
    %52 = vector.extract_strided_slice %8 {offsets = [0, 2, 0], sizes = [8, 1, 128], strides = [1, 1, 1]} : vector<8x8x128xf32> to vector<8x1x128xf32>
    %53 = vector.shape_cast %52 : vector<8x1x128xf32> to vector<8x128xf32>
    %cst_14 = arith.constant dense<0.000000e+00> : vector<8x128xf32>
    %54 = tpu.matmul %51, %9, %cst_14 {dimension_numbers = #tpu.dot_dimension_numbers<[1], [0], [0], [1], [0, 0, 1, 1], [], []>} : vector<8x32xf32>, vector<32x128xf32>, vector<8x128xf32> -> vector<8x128xf32>
    %55 = arith.addf %53, %54 : vector<8x128xf32>
    %56 = vector.extract_strided_slice %55 {offsets = [0, 0], sizes = [8, 96], strides = [1, 1]} : vector<8x128xf32> to vector<8x96xf32>
    %57 = arith.negf %56 : vector<8x96xf32>
    %58 = math.exp %57 : vector<8x96xf32>
    %cst_15 = arith.constant 1.000000e+00 : f32
    %59 = vector.broadcast %cst_15 : f32 to vector<8x96xf32>
    %60 = arith.addf %59, %58 : vector<8x96xf32>
    %61 = arith.divf %59, %60 : vector<8x96xf32>
    %62 = vector.extract_strided_slice %61 {offsets = [0, 0], sizes = [8, 32], strides = [1, 1]} : vector<8x96xf32> to vector<8x32xf32>
    %63 = vector.extract_strided_slice %61 {offsets = [0, 32], sizes = [8, 32], strides = [1, 1]} : vector<8x96xf32> to vector<8x32xf32>
    %64 = vector.extract_strided_slice %61 {offsets = [0, 64], sizes = [8, 32], strides = [1, 1]} : vector<8x96xf32> to vector<8x32xf32>
    %65 = vector.extract_strided_slice %55 {offsets = [0, 96], sizes = [8, 32], strides = [1, 1]} : vector<8x128xf32> to vector<8x32xf32>
    %66 = math.tanh %65 : vector<8x32xf32>
    %67 = arith.mulf %63, %49 : vector<8x32xf32>
    %68 = arith.mulf %62, %66 : vector<8x32xf32>
    %69 = arith.addf %67, %68 : vector<8x32xf32>
    %70 = math.tanh %69 : vector<8x32xf32>
    %71 = arith.mulf %64, %70 : vector<8x32xf32>
    %72 = vector.extract_strided_slice %8 {offsets = [0, 3, 0], sizes = [8, 1, 128], strides = [1, 1, 1]} : vector<8x8x128xf32> to vector<8x1x128xf32>
    %73 = vector.shape_cast %72 : vector<8x1x128xf32> to vector<8x128xf32>
    %cst_16 = arith.constant dense<0.000000e+00> : vector<8x128xf32>
    %74 = tpu.matmul %71, %9, %cst_16 {dimension_numbers = #tpu.dot_dimension_numbers<[1], [0], [0], [1], [0, 0, 1, 1], [], []>} : vector<8x32xf32>, vector<32x128xf32>, vector<8x128xf32> -> vector<8x128xf32>
    %75 = arith.addf %73, %74 : vector<8x128xf32>
    %76 = vector.extract_strided_slice %75 {offsets = [0, 0], sizes = [8, 96], strides = [1, 1]} : vector<8x128xf32> to vector<8x96xf32>
    %77 = arith.negf %76 : vector<8x96xf32>
    %78 = math.exp %77 : vector<8x96xf32>
    %cst_17 = arith.constant 1.000000e+00 : f32
    %79 = vector.broadcast %cst_17 : f32 to vector<8x96xf32>
    %80 = arith.addf %79, %78 : vector<8x96xf32>
    %81 = arith.divf %79, %80 : vector<8x96xf32>
    %82 = vector.extract_strided_slice %81 {offsets = [0, 0], sizes = [8, 32], strides = [1, 1]} : vector<8x96xf32> to vector<8x32xf32>
    %83 = vector.extract_strided_slice %81 {offsets = [0, 32], sizes = [8, 32], strides = [1, 1]} : vector<8x96xf32> to vector<8x32xf32>
    %84 = vector.extract_strided_slice %81 {offsets = [0, 64], sizes = [8, 32], strides = [1, 1]} : vector<8x96xf32> to vector<8x32xf32>
    %85 = vector.extract_strided_slice %75 {offsets = [0, 96], sizes = [8, 32], strides = [1, 1]} : vector<8x128xf32> to vector<8x32xf32>
    %86 = math.tanh %85 : vector<8x32xf32>
    %87 = arith.mulf %83, %69 : vector<8x32xf32>
    %88 = arith.mulf %82, %86 : vector<8x32xf32>
    %89 = arith.addf %87, %88 : vector<8x32xf32>
    %90 = math.tanh %89 : vector<8x32xf32>
    %91 = arith.mulf %84, %90 : vector<8x32xf32>
    %92 = vector.extract_strided_slice %8 {offsets = [0, 4, 0], sizes = [8, 1, 128], strides = [1, 1, 1]} : vector<8x8x128xf32> to vector<8x1x128xf32>
    %93 = vector.shape_cast %92 : vector<8x1x128xf32> to vector<8x128xf32>
    %cst_18 = arith.constant dense<0.000000e+00> : vector<8x128xf32>
    %94 = tpu.matmul %91, %9, %cst_18 {dimension_numbers = #tpu.dot_dimension_numbers<[1], [0], [0], [1], [0, 0, 1, 1], [], []>} : vector<8x32xf32>, vector<32x128xf32>, vector<8x128xf32> -> vector<8x128xf32>
    %95 = arith.addf %93, %94 : vector<8x128xf32>
    %96 = vector.extract_strided_slice %95 {offsets = [0, 0], sizes = [8, 96], strides = [1, 1]} : vector<8x128xf32> to vector<8x96xf32>
    %97 = arith.negf %96 : vector<8x96xf32>
    %98 = math.exp %97 : vector<8x96xf32>
    %cst_19 = arith.constant 1.000000e+00 : f32
    %99 = vector.broadcast %cst_19 : f32 to vector<8x96xf32>
    %100 = arith.addf %99, %98 : vector<8x96xf32>
    %101 = arith.divf %99, %100 : vector<8x96xf32>
    %102 = vector.extract_strided_slice %101 {offsets = [0, 0], sizes = [8, 32], strides = [1, 1]} : vector<8x96xf32> to vector<8x32xf32>
    %103 = vector.extract_strided_slice %101 {offsets = [0, 32], sizes = [8, 32], strides = [1, 1]} : vector<8x96xf32> to vector<8x32xf32>
    %104 = vector.extract_strided_slice %101 {offsets = [0, 64], sizes = [8, 32], strides = [1, 1]} : vector<8x96xf32> to vector<8x32xf32>
    %105 = vector.extract_strided_slice %95 {offsets = [0, 96], sizes = [8, 32], strides = [1, 1]} : vector<8x128xf32> to vector<8x32xf32>
    %106 = math.tanh %105 : vector<8x32xf32>
    %107 = arith.mulf %103, %89 : vector<8x32xf32>
    %108 = arith.mulf %102, %106 : vector<8x32xf32>
    %109 = arith.addf %107, %108 : vector<8x32xf32>
    %110 = math.tanh %109 : vector<8x32xf32>
    %111 = arith.mulf %104, %110 : vector<8x32xf32>
    %112 = vector.extract_strided_slice %8 {offsets = [0, 5, 0], sizes = [8, 1, 128], strides = [1, 1, 1]} : vector<8x8x128xf32> to vector<8x1x128xf32>
    %113 = vector.shape_cast %112 : vector<8x1x128xf32> to vector<8x128xf32>
    %cst_20 = arith.constant dense<0.000000e+00> : vector<8x128xf32>
    %114 = tpu.matmul %111, %9, %cst_20 {dimension_numbers = #tpu.dot_dimension_numbers<[1], [0], [0], [1], [0, 0, 1, 1], [], []>} : vector<8x32xf32>, vector<32x128xf32>, vector<8x128xf32> -> vector<8x128xf32>
    %115 = arith.addf %113, %114 : vector<8x128xf32>
    %116 = vector.extract_strided_slice %115 {offsets = [0, 0], sizes = [8, 96], strides = [1, 1]} : vector<8x128xf32> to vector<8x96xf32>
    %117 = arith.negf %116 : vector<8x96xf32>
    %118 = math.exp %117 : vector<8x96xf32>
    %cst_21 = arith.constant 1.000000e+00 : f32
    %119 = vector.broadcast %cst_21 : f32 to vector<8x96xf32>
    %120 = arith.addf %119, %118 : vector<8x96xf32>
    %121 = arith.divf %119, %120 : vector<8x96xf32>
    %122 = vector.extract_strided_slice %121 {offsets = [0, 0], sizes = [8, 32], strides = [1, 1]} : vector<8x96xf32> to vector<8x32xf32>
    %123 = vector.extract_strided_slice %121 {offsets = [0, 32], sizes = [8, 32], strides = [1, 1]} : vector<8x96xf32> to vector<8x32xf32>
    %124 = vector.extract_strided_slice %121 {offsets = [0, 64], sizes = [8, 32], strides = [1, 1]} : vector<8x96xf32> to vector<8x32xf32>
    %125 = vector.extract_strided_slice %115 {offsets = [0, 96], sizes = [8, 32], strides = [1, 1]} : vector<8x128xf32> to vector<8x32xf32>
    %126 = math.tanh %125 : vector<8x32xf32>
    %127 = arith.mulf %123, %109 : vector<8x32xf32>
    %128 = arith.mulf %122, %126 : vector<8x32xf32>
    %129 = arith.addf %127, %128 : vector<8x32xf32>
    %130 = math.tanh %129 : vector<8x32xf32>
    %131 = arith.mulf %124, %130 : vector<8x32xf32>
    %132 = vector.extract_strided_slice %8 {offsets = [0, 6, 0], sizes = [8, 1, 128], strides = [1, 1, 1]} : vector<8x8x128xf32> to vector<8x1x128xf32>
    %133 = vector.shape_cast %132 : vector<8x1x128xf32> to vector<8x128xf32>
    %cst_22 = arith.constant dense<0.000000e+00> : vector<8x128xf32>
    %134 = tpu.matmul %131, %9, %cst_22 {dimension_numbers = #tpu.dot_dimension_numbers<[1], [0], [0], [1], [0, 0, 1, 1], [], []>} : vector<8x32xf32>, vector<32x128xf32>, vector<8x128xf32> -> vector<8x128xf32>
    %135 = arith.addf %133, %134 : vector<8x128xf32>
    %136 = vector.extract_strided_slice %135 {offsets = [0, 0], sizes = [8, 96], strides = [1, 1]} : vector<8x128xf32> to vector<8x96xf32>
    %137 = arith.negf %136 : vector<8x96xf32>
    %138 = math.exp %137 : vector<8x96xf32>
    %cst_23 = arith.constant 1.000000e+00 : f32
    %139 = vector.broadcast %cst_23 : f32 to vector<8x96xf32>
    %140 = arith.addf %139, %138 : vector<8x96xf32>
    %141 = arith.divf %139, %140 : vector<8x96xf32>
    %142 = vector.extract_strided_slice %141 {offsets = [0, 0], sizes = [8, 32], strides = [1, 1]} : vector<8x96xf32> to vector<8x32xf32>
    %143 = vector.extract_strided_slice %141 {offsets = [0, 32], sizes = [8, 32], strides = [1, 1]} : vector<8x96xf32> to vector<8x32xf32>
    %144 = vector.extract_strided_slice %141 {offsets = [0, 64], sizes = [8, 32], strides = [1, 1]} : vector<8x96xf32> to vector<8x32xf32>
    %145 = vector.extract_strided_slice %135 {offsets = [0, 96], sizes = [8, 32], strides = [1, 1]} : vector<8x128xf32> to vector<8x32xf32>
    %146 = math.tanh %145 : vector<8x32xf32>
    %147 = arith.mulf %143, %129 : vector<8x32xf32>
    %148 = arith.mulf %142, %146 : vector<8x32xf32>
    %149 = arith.addf %147, %148 : vector<8x32xf32>
    %150 = math.tanh %149 : vector<8x32xf32>
    %151 = arith.mulf %144, %150 : vector<8x32xf32>
    %152 = vector.extract_strided_slice %8 {offsets = [0, 7, 0], sizes = [8, 1, 128], strides = [1, 1, 1]} : vector<8x8x128xf32> to vector<8x1x128xf32>
    %153 = vector.shape_cast %152 : vector<8x1x128xf32> to vector<8x128xf32>
    %cst_24 = arith.constant dense<0.000000e+00> : vector<8x128xf32>
    %154 = tpu.matmul %151, %9, %cst_24 {dimension_numbers = #tpu.dot_dimension_numbers<[1], [0], [0], [1], [0, 0, 1, 1], [], []>} : vector<8x32xf32>, vector<32x128xf32>, vector<8x128xf32> -> vector<8x128xf32>
    %155 = arith.addf %153, %154 : vector<8x128xf32>
    %156 = vector.extract_strided_slice %155 {offsets = [0, 0], sizes = [8, 96], strides = [1, 1]} : vector<8x128xf32> to vector<8x96xf32>
    %157 = arith.negf %156 : vector<8x96xf32>
    %158 = math.exp %157 : vector<8x96xf32>
    %cst_25 = arith.constant 1.000000e+00 : f32
    %159 = vector.broadcast %cst_25 : f32 to vector<8x96xf32>
    %160 = arith.addf %159, %158 : vector<8x96xf32>
    %161 = arith.divf %159, %160 : vector<8x96xf32>
    %162 = vector.extract_strided_slice %161 {offsets = [0, 0], sizes = [8, 32], strides = [1, 1]} : vector<8x96xf32> to vector<8x32xf32>
    %163 = vector.extract_strided_slice %161 {offsets = [0, 32], sizes = [8, 32], strides = [1, 1]} : vector<8x96xf32> to vector<8x32xf32>
    %164 = vector.extract_strided_slice %161 {offsets = [0, 64], sizes = [8, 32], strides = [1, 1]} : vector<8x96xf32> to vector<8x32xf32>
    %165 = vector.extract_strided_slice %155 {offsets = [0, 96], sizes = [8, 32], strides = [1, 1]} : vector<8x128xf32> to vector<8x32xf32>
    %166 = math.tanh %165 : vector<8x32xf32>
    %167 = arith.mulf %163, %149 : vector<8x32xf32>
    %168 = arith.mulf %162, %166 : vector<8x32xf32>
    %169 = arith.addf %167, %168 : vector<8x32xf32>
    %170 = math.tanh %169 : vector<8x32xf32>
    %171 = arith.mulf %164, %170 : vector<8x32xf32>
    %c0_26 = arith.constant 0 : index
    %c0_27 = arith.constant 0 : index
    %c0_28 = arith.constant 0 : index
    %172 = vector.load %arg2[%c0_26, %c0_27, %c0_28] : memref<8x32x16xbf16, #tpu.memory_space<vmem>>, vector<8x32x16xbf16>
    %173 = vector.shape_cast %172 : vector<8x32x16xbf16> to vector<256x16xbf16>
    %c0_29 = arith.constant 0 : index
    %c0_30 = arith.constant 0 : index
    %174 = vector.load %arg8[%c0_29, %c0_30] : memref<16x32xbf16, #tpu.memory_space<vmem>>, vector<16x32xbf16>
    %cst_31 = arith.constant dense<0.000000e+00> : vector<256x32xf32>
    %175 = tpu.matmul %173, %174, %cst_31 {dimension_numbers = #tpu.dot_dimension_numbers<[1], [0], [0], [1], [0, 0, 1, 1], [], []>} : vector<256x16xbf16>, vector<16x32xbf16>, vector<256x32xf32> -> vector<256x32xf32>
    %176 = vector.shape_cast %175 : vector<256x32xf32> to vector<8x32x32xf32>
    %c0_32 = arith.constant 0 : index
    %c0_33 = arith.constant 0 : index
    %177 = vector.load %arg9[%c0_32, %c0_33] : memref<1x32xf32, #tpu.memory_space<vmem>>, vector<1x32xf32>
    %178 = vector.shape_cast %177 : vector<1x32xf32> to vector<1x1x32xf32>
    %179 = vector.broadcast %178 : vector<1x1x32xf32> to vector<8x32x32xf32>
    %180 = arith.addf %176, %179 : vector<8x32x32xf32>
    %181 = vector.extract_strided_slice %180 {offsets = [0, 0, 0], sizes = [8, 16, 32], strides = [1, 1, 1]} : vector<8x32x32xf32> to vector<8x16x32xf32>
    %182 = vector.extract_strided_slice %180 {offsets = [0, 16, 0], sizes = [8, 16, 32], strides = [1, 1, 1]} : vector<8x32x32xf32> to vector<8x16x32xf32>
    %c0_34 = arith.constant 0 : index
    %c0_35 = arith.constant 0 : index
    %c0_36 = arith.constant 0 : index
    %183 = vector.load %arg3[%c0_34, %c0_35, %c0_36] : memref<8x16x32xbf16, #tpu.memory_space<vmem>>, vector<8x16x32xbf16>
    %184 = vector.shape_cast %183 : vector<8x16x32xbf16> to vector<128x32xbf16>
    %c0_37 = arith.constant 0 : index
    %c0_38 = arith.constant 0 : index
    %185 = vector.load %arg11[%c0_37, %c0_38] : memref<32x32xbf16, #tpu.memory_space<vmem>>, vector<32x32xbf16>
    %cst_39 = arith.constant dense<0.000000e+00> : vector<128x32xf32>
    %186 = tpu.matmul %184, %185, %cst_39 {dimension_numbers = #tpu.dot_dimension_numbers<[1], [0], [0], [1], [0, 0, 1, 1], [], []>} : vector<128x32xbf16>, vector<32x32xbf16>, vector<128x32xf32> -> vector<128x32xf32>
    %187 = vector.shape_cast %186 : vector<128x32xf32> to vector<8x16x32xf32>
    %c0_40 = arith.constant 0 : index
    %c0_41 = arith.constant 0 : index
    %188 = vector.load %arg12[%c0_40, %c0_41] : memref<1x32xf32, #tpu.memory_space<vmem>>, vector<1x32xf32>
    %189 = vector.shape_cast %188 : vector<1x32xf32> to vector<1x1x32xf32>
    %190 = vector.broadcast %189 : vector<1x1x32xf32> to vector<8x16x32xf32>
    %191 = arith.addf %187, %190 : vector<8x16x32xf32>
    %192 = arith.addf %181, %191 : vector<8x16x32xf32>
    %c0_42 = arith.constant 0 : index
    %c0_43 = arith.constant 0 : index
    %193 = vector.load %arg5[%c0_42, %c0_43] : memref<8x16xf32, #tpu.memory_space<vmem>>, vector<8x16xf32>
    %cst_44 = arith.constant 1.000000e+00 : f32
    %194 = vector.broadcast %cst_44 : f32 to vector<8x16xf32>
    %195 = arith.subf %194, %193 : vector<8x16xf32>
    %cst_45 = arith.constant -1.000000e+10 : f32
    %196 = vector.broadcast %cst_45 : f32 to vector<8x16xf32>
    %197 = arith.mulf %195, %196 : vector<8x16xf32>
    %198 = vector.shape_cast %171 : vector<8x32xf32> to vector<8x1x32xf32>
    %199 = vector.broadcast %198 : vector<8x1x32xf32> to vector<8x16x32xf32>
    %200 = arith.mulf %199, %192 : vector<8x16x32xf32>
    %cst_46 = arith.constant dense<0.000000e+00> : vector<8x16xf32>
    %201 = vector.multi_reduction <add>, %200, %cst_46 [2] : vector<8x16x32xf32> to vector<8x16xf32>
    %202 = arith.addf %201, %197 : vector<8x16xf32>
    %cst_47 = arith.constant 0.176776692 : f32
    %203 = vector.broadcast %cst_47 : f32 to vector<8x16xf32>
    %204 = arith.mulf %202, %203 : vector<8x16xf32>
    %cst_48 = arith.constant dense<0xFF800000> : vector<8xf32>
    %205 = vector.multi_reduction <maximumf>, %204, %cst_48 [1] : vector<8x16xf32> to vector<8xf32>
    %206 = vector.shape_cast %205 : vector<8xf32> to vector<8x1xf32>
    %207 = vector.broadcast %206 : vector<8x1xf32> to vector<8x16xf32>
    %208 = arith.subf %204, %207 : vector<8x16xf32>
    %209 = math.exp %208 : vector<8x16xf32>
    %cst_49 = arith.constant dense<0.000000e+00> : vector<8xf32>
    %210 = vector.multi_reduction <add>, %209, %cst_49 [1] : vector<8x16xf32> to vector<8xf32>
    %211 = vector.shape_cast %210 : vector<8xf32> to vector<8x1xf32>
    %212 = tpu.reciprocal %211 {approx = true} : vector<8x1xf32> -> vector<8x1xf32>
    %213 = vector.broadcast %212 : vector<8x1xf32> to vector<8x16xf32>
    %214 = arith.mulf %209, %213 : vector<8x16xf32>
    %215 = vector.shape_cast %214 : vector<8x16xf32> to vector<8x16x1xf32>
    %216 = vector.broadcast %215 : vector<8x16x1xf32> to vector<8x16x32xf32>
    %217 = arith.mulf %216, %182 : vector<8x16x32xf32>
    %cst_50 = arith.constant dense<0.000000e+00> : vector<8x32xf32>
    %218 = vector.multi_reduction <add>, %217, %cst_50 [1] : vector<8x16x32xf32> to vector<8x32xf32>
    %219 = arith.addf %171, %218 : vector<8x32xf32>
    %220 = vector.shape_cast %219 : vector<8x32xf32> to vector<8x1x32xf32>
    %221 = vector.broadcast %220 : vector<8x1x32xf32> to vector<8x16x32xf32>
    %222 = arith.mulf %221, %192 : vector<8x16x32xf32>
    %cst_51 = arith.constant dense<0.000000e+00> : vector<8x16xf32>
    %223 = vector.multi_reduction <add>, %222, %cst_51 [2] : vector<8x16x32xf32> to vector<8x16xf32>
    %224 = arith.addf %223, %197 : vector<8x16xf32>
    %cst_52 = arith.constant 0.176776692 : f32
    %225 = vector.broadcast %cst_52 : f32 to vector<8x16xf32>
    %226 = arith.mulf %224, %225 : vector<8x16xf32>
    %cst_53 = arith.constant dense<0xFF800000> : vector<8xf32>
    %227 = vector.multi_reduction <maximumf>, %226, %cst_53 [1] : vector<8x16xf32> to vector<8xf32>
    %228 = vector.shape_cast %227 : vector<8xf32> to vector<8x1xf32>
    %229 = vector.broadcast %228 : vector<8x1xf32> to vector<8x16xf32>
    %230 = arith.subf %226, %229 : vector<8x16xf32>
    %231 = math.exp %230 : vector<8x16xf32>
    %cst_54 = arith.constant dense<0.000000e+00> : vector<8xf32>
    %232 = vector.multi_reduction <add>, %231, %cst_54 [1] : vector<8x16xf32> to vector<8xf32>
    %233 = vector.shape_cast %232 : vector<8xf32> to vector<8x1xf32>
    %234 = tpu.reciprocal %233 {approx = true} : vector<8x1xf32> -> vector<8x1xf32>
    %235 = vector.broadcast %234 : vector<8x1xf32> to vector<8x16xf32>
    %236 = arith.mulf %231, %235 : vector<8x16xf32>
    %237 = vector.shape_cast %236 : vector<8x16xf32> to vector<8x16x1xf32>
    %238 = vector.broadcast %237 : vector<8x16x1xf32> to vector<8x16x32xf32>
    %239 = arith.mulf %238, %182 : vector<8x16x32xf32>
    %cst_55 = arith.constant dense<0.000000e+00> : vector<8x32xf32>
    %240 = vector.multi_reduction <add>, %239, %cst_55 [1] : vector<8x16x32xf32> to vector<8x32xf32>
    %241 = arith.addf %219, %240 : vector<8x32xf32>
    %242 = vector.shape_cast %241 : vector<8x32xf32> to vector<8x1x32xf32>
    %243 = vector.broadcast %242 : vector<8x1x32xf32> to vector<8x16x32xf32>
    %244 = arith.mulf %243, %192 : vector<8x16x32xf32>
    %cst_56 = arith.constant dense<0.000000e+00> : vector<8x16xf32>
    %245 = vector.multi_reduction <add>, %244, %cst_56 [2] : vector<8x16x32xf32> to vector<8x16xf32>
    %246 = arith.addf %245, %197 : vector<8x16xf32>
    %cst_57 = arith.constant 0.176776692 : f32
    %247 = vector.broadcast %cst_57 : f32 to vector<8x16xf32>
    %248 = arith.mulf %246, %247 : vector<8x16xf32>
    %cst_58 = arith.constant dense<0xFF800000> : vector<8xf32>
    %249 = vector.multi_reduction <maximumf>, %248, %cst_58 [1] : vector<8x16xf32> to vector<8xf32>
    %250 = vector.shape_cast %249 : vector<8xf32> to vector<8x1xf32>
    %251 = vector.broadcast %250 : vector<8x1xf32> to vector<8x16xf32>
    %252 = arith.subf %248, %251 : vector<8x16xf32>
    %253 = math.exp %252 : vector<8x16xf32>
    %cst_59 = arith.constant dense<0.000000e+00> : vector<8xf32>
    %254 = vector.multi_reduction <add>, %253, %cst_59 [1] : vector<8x16xf32> to vector<8xf32>
    %255 = vector.shape_cast %254 : vector<8xf32> to vector<8x1xf32>
    %256 = tpu.reciprocal %255 {approx = true} : vector<8x1xf32> -> vector<8x1xf32>
    %257 = vector.broadcast %256 : vector<8x1xf32> to vector<8x16xf32>
    %258 = arith.mulf %253, %257 : vector<8x16xf32>
    %259 = vector.shape_cast %258 : vector<8x16xf32> to vector<8x16x1xf32>
    %260 = vector.broadcast %259 : vector<8x16x1xf32> to vector<8x16x32xf32>
    %261 = arith.mulf %260, %182 : vector<8x16x32xf32>
    %cst_60 = arith.constant dense<0.000000e+00> : vector<8x32xf32>
    %262 = vector.multi_reduction <add>, %261, %cst_60 [1] : vector<8x16x32xf32> to vector<8x32xf32>
    %263 = arith.addf %241, %262 : vector<8x32xf32>
    %c0_61 = arith.constant 0 : index
    %c0_62 = arith.constant 0 : index
    %264 = vector.load %arg10[%c0_61, %c0_62] : memref<32x16xf32, #tpu.memory_space<vmem>>, vector<32x16xf32>
    %cst_63 = arith.constant dense<0.000000e+00> : vector<8x16xf32>
    %265 = tpu.matmul %263, %264, %cst_63 {dimension_numbers = #tpu.dot_dimension_numbers<[1], [0], [0], [1], [0, 0, 1, 1], [], []>} : vector<8x32xf32>, vector<32x16xf32>, vector<8x16xf32> -> vector<8x16xf32>
    %c0_64 = arith.constant 0 : index
    %c0_65 = arith.constant 0 : index
    %266 = vector.load %arg9[%c0_64, %c0_65] : memref<1x32xf32, #tpu.memory_space<vmem>>, vector<1x32xf32>
    %267 = vector.broadcast %266 : vector<1x32xf32> to vector<8x32xf32>
    %268 = arith.mulf %263, %267 : vector<8x32xf32>
    %cst_66 = arith.constant dense<0.000000e+00> : vector<8xf32>
    %269 = vector.multi_reduction <add>, %268, %cst_66 [1] : vector<8x32xf32> to vector<8xf32>
    %270 = vector.shape_cast %269 : vector<8xf32> to vector<8x1xf32>
    %c0_67 = arith.constant 0 : index
    %c0_68 = arith.constant 0 : index
    %c0_69 = arith.constant 0 : index
    %271 = vector.load %arg1[%c0_67, %c0_68, %c0_69] : memref<8x16x128xbf16, #tpu.memory_space<vmem>>, vector<8x16x128xbf16>
    %272 = vector.shape_cast %265 : vector<8x16xf32> to vector<8x16x1xf32>
    %273 = arith.extf %271 : vector<8x16x128xbf16> to vector<8x16x128xf32>
    %274 = vector.broadcast %272 : vector<8x16x1xf32> to vector<8x16x128xf32>
    %275 = arith.mulf %273, %274 : vector<8x16x128xf32>
    %cst_70 = arith.constant dense<0.000000e+00> : vector<8x128xf32>
    %276 = vector.multi_reduction <add>, %275, %cst_70 [1] : vector<8x16x128xf32> to vector<8x128xf32>
    %277 = vector.broadcast %270 : vector<8x1xf32> to vector<8x128xf32>
    %278 = arith.addf %276, %277 : vector<8x128xf32>
    %c0_71 = arith.constant 0 : index
    %c0_72 = arith.constant 0 : index
    %279 = vector.load %arg7[%c0_71, %c0_72] : memref<8x128xf32, #tpu.memory_space<vmem>>, vector<8x128xf32>
    %c0_73 = arith.constant 0 : index
    %c0_74 = arith.constant 0 : index
    %280 = vector.load %arg6[%c0_73, %c0_74] : memref<8x128xf32, #tpu.memory_space<vmem>>, vector<8x128xf32>
    %281 = math.absf %278 : vector<8x128xf32>
    %cst_75 = arith.constant 0.000000e+00 : f32
    %282 = vector.broadcast %cst_75 : f32 to vector<8x128xf32>
    %283 = arith.subf %282, %281 : vector<8x128xf32>
    %284 = math.exp %283 : vector<8x128xf32>
    %cst_76 = arith.constant 0.000000e+00 : f32
    %285 = vector.broadcast %cst_76 : f32 to vector<8x128xf32>
    %286 = arith.maximumf %278, %285 : vector<8x128xf32>
    %287 = arith.mulf %278, %279 : vector<8x128xf32>
    %288 = arith.subf %286, %287 : vector<8x128xf32>
    %289 = math.log1p %284 : vector<8x128xf32>
    %290 = arith.addf %288, %289 : vector<8x128xf32>
    %c0_77 = arith.constant 0 : index
    %c0_78 = arith.constant 0 : index
    %291 = vector.load %arg16[%c0_77, %c0_78] : memref<8x128xf32, #tpu.memory_space<vmem>>, vector<8x128xf32>
    tpu.vector_store %arg16[%c0_77, %c0_78], %290 {strides = array<i32>} : memref<8x128xf32, #tpu.memory_space<vmem>>, vector<8x128xf32>,
    %cst_79 = arith.constant 1.000000e+00 : f32
    %292 = vector.broadcast %cst_79 : f32 to vector<8x128xf32>
    %293 = arith.subf %292, %280 : vector<8x128xf32>
    %cst_80 = arith.constant -9.99999979E+10 : f32
    %294 = vector.broadcast %cst_80 : f32 to vector<8x128xf32>
    %295 = arith.mulf %293, %294 : vector<8x128xf32>
    %296 = arith.addf %278, %295 : vector<8x128xf32>
    %c0_81 = arith.constant 0 : index
    %c0_82 = arith.constant 0 : index
    %297 = vector.load %arg17[%c0_81, %c0_82] : memref<8x128xf32, #tpu.memory_space<vmem>>, vector<8x128xf32>
    tpu.vector_store %arg17[%c0_81, %c0_82], %296 {strides = array<i32>} : memref<8x128xf32, #tpu.memory_space<vmem>>, vector<8x128xf32>,
    %cst_83 = arith.constant 1.000000e+00 : f32
    %298 = vector.broadcast %cst_83 : f32 to vector<8x128xf32>
    %299 = arith.addf %298, %284 : vector<8x128xf32>
    %cst_84 = arith.constant 1.000000e+00 : f32
    %300 = vector.broadcast %cst_84 : f32 to vector<8x128xf32>
    %301 = arith.divf %300, %299 : vector<8x128xf32>
    %cst_85 = arith.constant 0.000000e+00 : f32
    %302 = vector.broadcast %cst_85 : f32 to vector<8x128xf32>
    %303 = arith.cmpf oge, %278, %302 : vector<8x128xf32>
    %304 = arith.mulf %284, %301 : vector<8x128xf32>
    %305 = arith.select %303, %301, %304 : vector<8x128xi1>, vector<8x128xf32>
    %306 = arith.mulf %305, %280 : vector<8x128xf32>
    %c0_86 = arith.constant 0 : index
    %c0_87 = arith.constant 0 : index
    %307 = vector.load %arg18[%c0_86, %c0_87] : memref<8x128xf32, #tpu.memory_space<vmem>>, vector<8x128xf32>
    tpu.vector_store %arg18[%c0_86, %c0_87], %306 {strides = array<i32>} : memref<8x128xf32, #tpu.memory_space<vmem>>, vector<8x128xf32>,
    return
  }
  func.func @transform_0(%arg0: i32) -> (i32, i32, i32) {
    %c0_i32 = arith.constant 0 : i32
    %c0_i32_0 = arith.constant 0 : i32
    %c0_i32_1 = arith.constant 0 : i32
    return %arg0, %c0_i32, %c0_i32_0 : i32, i32, i32
  }
  func.func @transform_1(%arg0: i32) -> (i32, i32, i32) {
    %c0_i32 = arith.constant 0 : i32
    %c0_i32_0 = arith.constant 0 : i32
    %c0_i32_1 = arith.constant 0 : i32
    return %arg0, %c0_i32, %c0_i32_0 : i32, i32, i32
  }
  func.func @transform_2(%arg0: i32) -> (i32, i32, i32) {
    %c0_i32 = arith.constant 0 : i32
    %c0_i32_0 = arith.constant 0 : i32
    %c0_i32_1 = arith.constant 0 : i32
    return %arg0, %c0_i32, %c0_i32_0 : i32, i32, i32
  }
  func.func @transform_3(%arg0: i32) -> (i32, i32, i32) {
    %c0_i32 = arith.constant 0 : i32
    %c0_i32_0 = arith.constant 0 : i32
    %c0_i32_1 = arith.constant 0 : i32
    return %arg0, %c0_i32, %c0_i32_0 : i32, i32, i32
  }
  func.func @transform_4(%arg0: i32) -> (i32, i32) {
    %c0_i32 = arith.constant 0 : i32
    %c0_i32_0 = arith.constant 0 : i32
    return %arg0, %c0_i32 : i32, i32
  }
  func.func @transform_5(%arg0: i32) -> (i32, i32) {
    %c0_i32 = arith.constant 0 : i32
    %c0_i32_0 = arith.constant 0 : i32
    return %arg0, %c0_i32 : i32, i32
  }
  func.func @transform_6(%arg0: i32) -> (i32, i32) {
    %c0_i32 = arith.constant 0 : i32
    %c0_i32_0 = arith.constant 0 : i32
    return %arg0, %c0_i32 : i32, i32
  }
  func.func @transform_7(%arg0: i32) -> (i32, i32) {
    %c0_i32 = arith.constant 0 : i32
    %c0_i32_0 = arith.constant 0 : i32
    %c0_i32_1 = arith.constant 0 : i32
    return %c0_i32, %c0_i32_0 : i32, i32
  }
  func.func @transform_8(%arg0: i32) -> (i32, i32) {
    %c0_i32 = arith.constant 0 : i32
    %c0_i32_0 = arith.constant 0 : i32
    %c0_i32_1 = arith.constant 0 : i32
    return %c0_i32, %c0_i32_0 : i32, i32
  }
  func.func @transform_9(%arg0: i32) -> (i32, i32) {
    %c0_i32 = arith.constant 0 : i32
    %c0_i32_0 = arith.constant 0 : i32
    %c0_i32_1 = arith.constant 0 : i32
    return %c0_i32, %c0_i32_0 : i32, i32
  }
  func.func @transform_10(%arg0: i32) -> (i32, i32) {
    %c0_i32 = arith.constant 0 : i32
    %c0_i32_0 = arith.constant 0 : i32
    %c0_i32_1 = arith.constant 0 : i32
    return %c0_i32, %c0_i32_0 : i32, i32
  }
  func.func @transform_11(%arg0: i32) -> (i32, i32) {
    %c0_i32 = arith.constant 0 : i32
    %c0_i32_0 = arith.constant 0 : i32
    %c0_i32_1 = arith.constant 0 : i32
    return %c0_i32, %c0_i32_0 : i32, i32
  }
  func.func @transform_12(%arg0: i32) -> (i32, i32) {
    %c0_i32 = arith.constant 0 : i32
    %c0_i32_0 = arith.constant 0 : i32
    %c0_i32_1 = arith.constant 0 : i32
    return %c0_i32, %c0_i32_0 : i32, i32
  }
  func.func @transform_13(%arg0: i32) -> (i32, i32) {
    %c0_i32 = arith.constant 0 : i32
    %c0_i32_0 = arith.constant 0 : i32
    %c0_i32_1 = arith.constant 0 : i32
    return %c0_i32, %c0_i32_0 : i32, i32
  }
  func.func @transform_14(%arg0: i32) -> (i32, i32) {
    %c0_i32 = arith.constant 0 : i32
    %c0_i32_0 = arith.constant 0 : i32
    %c0_i32_1 = arith.constant 0 : i32
    return %c0_i32, %c0_i32_0 : i32, i32
  }
  func.func @transform_15(%arg0: i32) -> (i32, i32) {
    %c0_i32 = arith.constant 0 : i32
    %c0_i32_0 = arith.constant 0 : i32
    return %arg0, %c0_i32 : i32, i32
  }
  func.func @transform_16(%arg0: i32) -> (i32, i32) {
    %c0_i32 = arith.constant 0 : i32
    %c0_i32_0 = arith.constant 0 : i32
    return %arg0, %c0_i32 : i32, i32
  }
  func.func @transform_17(%arg0: i32) -> (i32, i32) {
    %c0_i32 = arith.constant 0 : i32
    %c0_i32_0 = arith.constant 0 : i32
    return %arg0, %c0_i32 : i32, i32
  }
}

</mosaic_0001>

<llo_original>
// kernel: kvmem_forward.1
$region0: #{kvmem_forward.1}
  #allocation0 [shape = 'u32[]', space=smem, size = 0x4, offset = 0x4, fixed_abs, tag = 'smem constant byte address 0x4 - core index']
  #allocation1 [shape = 'u32[144,128]{1,0:T(1,128)}', space=vmem, size = 0x12000, scoped, tag = 'internal scratch']
  %s0 = inlined_call_operand.vmem [shape: bf16[8,16,128], index: 0, kind: input, shape index: {}]
  %s1 = inlined_call_operand.vmem [shape: bf16[8,32,16], index: 1, kind: input, shape index: {}]
  %s2 = inlined_call_operand.vmem [shape: bf16[8,16,32], index: 2, kind: input, shape index: {}]
  %s3 = inlined_call_operand.vmem [shape: bf16[8,8,16], index: 3, kind: input, shape index: {}]
  %s4 = inlined_call_operand.vmem [shape: f32[8,16], index: 4, kind: input, shape index: {}]
  %s5 = inlined_call_operand.vmem [shape: f32[8,128], index: 5, kind: input, shape index: {}]
  %s6 = inlined_call_operand.vmem [shape: f32[8,128], index: 6, kind: input, shape index: {}]
  %s7 = inlined_call_operand.vmem [shape: bf16[16,32], index: 7, kind: input, shape index: {}]
  %s8 = inlined_call_operand.vmem [shape: f32[1,32], index: 8, kind: input, shape index: {}]
  %s9 = inlined_call_operand.vmem [shape: f32[32,16], index: 9, kind: input, shape index: {}]
  %s10 = inlined_call_operand.vmem [shape: bf16[32,32], index: 10, kind: input, shape index: {}]
  %s11 = inlined_call_operand.vmem [shape: f32[1,32], index: 11, kind: input, shape index: {}]
  %s12 = inlined_call_operand.vmem [shape: bf16[16,128], index: 12, kind: input, shape index: {}]
  %s13 = inlined_call_operand.vmem [shape: f32[32,128], index: 13, kind: input, shape index: {}]
  %s14 = inlined_call_operand.vmem [shape: f32[1,128], index: 14, kind: input, shape index: {}]
  %s15 = inlined_call_operand.vmem [shape: f32[8,128], index: 15, kind: output, shape index: {0}]
  %s16 = inlined_call_operand.vmem [shape: f32[8,128], index: 16, kind: output, shape index: {1}]
  %s17 = inlined_call_operand.vmem [shape: f32[8,128], index: 17, kind: output, shape index: {2}]
  %18 = xla_tuple %s15, %s16, %s17
  %s19 = sld [smem:[#allocation0]]
  $region86: #{kvmem_forward.1} parent=0
    _
  %s21 = ssub.s32 1, %s19
  %s22 = scalar_select 0, %s21, %s19
  // Predicated region
  $region2: #{kvmem_forward.1} parent=0 // pred_check
    _
  $region3: #{kvmem_forward.1} parent=0 // pred_check_branch
    %24 = sbr.rel (0) target = $region5
  $region4: #{kvmem_forward.1} parent=0 // pred_region
    _
  $region5: #{kvmem_forward.1} parent=0 // pred_fallthru
    _
  // Predicated region
  $region6: #{kvmem_forward.1} parent=0 // pred_check
    _
  $region7: #{kvmem_forward.1} parent=0 // pred_check_branch
    %26 = sbr.rel (0) target = $region9
  $region8: #{kvmem_forward.1} parent=0 // pred_region
    _
  $region9: #{kvmem_forward.1} parent=0 // pred_fallthru
    _
  // Predicated region
  $region10: #{kvmem_forward.1} parent=0 // pred_check
    _
  $region11: #{kvmem_forward.1} parent=0 // pred_check_branch
    %28 = sbr.rel (0) target = $region13
  $region12: #{kvmem_forward.1} parent=0 // pred_region
    _
  $region13: #{kvmem_forward.1} parent=0 // pred_fallthru
    _
  // Predicated region
  $region14: #{kvmem_forward.1} parent=0 // pred_check
    _
  $region15: #{kvmem_forward.1} parent=0 // pred_check_branch
    %30 = sbr.rel (0) target = $region17
  $region16: #{kvmem_forward.1} parent=0 // pred_region
    _
  $region17: #{kvmem_forward.1} parent=0 // pred_fallthru
    _
  // Predicated region
  $region18: #{kvmem_forward.1} parent=0 // pred_check
    _
  $region19: #{kvmem_forward.1} parent=0 // pred_check_branch
    %32 = sbr.rel (0) target = $region21
  $region20: #{kvmem_forward.1} parent=0 // pred_region
    _
  $region21: #{kvmem_forward.1} parent=0 // pred_fallthru
    _
  // Predicated region
  $region22: #{kvmem_forward.1} parent=0 // pred_check
    _
  $region23: #{kvmem_forward.1} parent=0 // pred_check_branch
    %34 = sbr.rel (0) target = $region25
  $region24: #{kvmem_forward.1} parent=0 // pred_region
    _
  $region25: #{kvmem_forward.1} parent=0 // pred_fallthru
    _
  // Predicated region
  $region26: #{kvmem_forward.1} parent=0 // pred_check
    _
  $region27: #{kvmem_forward.1} parent=0 // pred_check_branch
    %36 = sbr.rel (0) target = $region29
  $region28: #{kvmem_forward.1} parent=0 // pred_region
    _
  $region29: #{kvmem_forward.1} parent=0 // pred_fallthru
    _
  // Predicated region
  $region30: #{kvmem_forward.1} parent=0 // pred_check
    _
  $region31: #{kvmem_forward.1} parent=0 // pred_check_branch
    %38 = sbr.rel (0) target = $region33
  $region32: #{kvmem_forward.1} parent=0 // pred_region
    _
  $region33: #{kvmem_forward.1} parent=0 // pred_fallthru
    _
  // Predicated region
  $region34: #{kvmem_forward.1} parent=0 // pred_check
    _
  $region35: #{kvmem_forward.1} parent=0 // pred_check_branch
    %40 = sbr.rel (0) target = $region37
  $region36: #{kvmem_forward.1} parent=0 // pred_region
    _
  $region37: #{kvmem_forward.1} parent=0 // pred_fallthru
    _
  // Predicated region
  $region38: #{kvmem_forward.1} parent=0 // pred_check
    _
  $region39: #{kvmem_forward.1} parent=0 // pred_check_branch
    %42 = sbr.rel (0) target = $region41
  $region40: #{kvmem_forward.1} parent=0 // pred_region
    _
  $region41: #{kvmem_forward.1} parent=0 // pred_fallthru
    _
  // Predicated region
  $region42: #{kvmem_forward.1} parent=0 // pred_check
    _
  $region43: #{kvmem_forward.1} parent=0 // pred_check_branch
    %44 = sbr.rel (0) target = $region45
  $region44: #{kvmem_forward.1} parent=0 // pred_region
    _
  $region45: #{kvmem_forward.1} parent=0 // pred_fallthru
    _
  // Predicated region
  $region46: #{kvmem_forward.1} parent=0 // pred_check
    _
  $region47: #{kvmem_forward.1} parent=0 // pred_check_branch
    %46 = sbr.rel (0) target = $region49
  $region48: #{kvmem_forward.1} parent=0 // pred_region
    _
  $region49: #{kvmem_forward.1} parent=0 // pred_fallthru
    _
  // Predicated region
  $region50: #{kvmem_forward.1} parent=0 // pred_check
    _
  $region51: #{kvmem_forward.1} parent=0 // pred_check_branch
    %48 = sbr.rel (0) target = $region53
  $region52: #{kvmem_forward.1} parent=0 // pred_region
    _
  $region53: #{kvmem_forward.1} parent=0 // pred_fallthru
    _
  // Predicated region
  $region54: #{kvmem_forward.1} parent=0 // pred_check
    _
  $region55: #{kvmem_forward.1} parent=0 // pred_check_branch
    %50 = sbr.rel (0) target = $region57
  $region56: #{kvmem_forward.1} parent=0 // pred_region
    _
  $region57: #{kvmem_forward.1} parent=0 // pred_fallthru
    _
  // Predicated region
  $region58: #{kvmem_forward.1} parent=0 // pred_check
    _
  $region59: #{kvmem_forward.1} parent=0 // pred_check_branch
    %52 = sbr.rel (0) target = $region61
  $region60: #{kvmem_forward.1} parent=0 // pred_region
    _
  $region61: #{kvmem_forward.1} parent=0 // pred_fallthru
    _
  %v54 = vld [vmem:[%s3] sm:$0xf]
  %v55 = vld [vmem:[%s3 + $0x4] sm:$0xf]
  %v56 = vld [vmem:[%s3 + $0x8] sm:$0xf]
  %v57 = vld [vmem:[%s3 + $0xc] sm:$0xf]
  %v58 = vld [vmem:[%s3 + $0x10] sm:$0xf]
  %v59 = vld [vmem:[%s3 + $0x14] sm:$0xf]
  %v60 = vld [vmem:[%s3 + $0x18] sm:$0xf]
  %v61 = vld [vmem:[%s3 + $0x1c] sm:$0xf]
  %v62 = vld [vmem:[%s12] sm:$0xf]
  %v63 = vld [vmem:[%s12 + $0x4] sm:$0xf]
  %v72 = vunpack.c.l.b16 %v54
  %v73 = vunpack.c.l.b16 %v55
  %v74 = vunpack.c.l.b16 %v56
  %v75 = vunpack.c.l.b16 %v57
  %v76 = vunpack.c.l.b16 %v58
  %v77 = vunpack.c.l.b16 %v59
  %v78 = vunpack.c.l.b16 %v60
  %v79 = vunpack.c.l.b16 %v61
  %v80 = vpack.c.b16 %v73, %v72
  %v81 = vpack.c.b16 %v75, %v74
  %v82 = vpack.c.b16 %v77, %v76
  %v83 = vpack.c.b16 %v79, %v78
  %v86 = vunpack.c.l.b16 %v62
  %v87 = vunpack.c.l.b16 %v63
  %v88 = vpack.c.b16 %v87, %v86
  %vm90 = vcmask 130048
  %v92 = vsel %vm90, %v80, 0
  %v95 = vsel %vm90, %v81, 0
  %v98 = vsel %vm90, %v82, 0
  %v101 = vsel %vm90, %v83, 0
  %103 = vmatprep.subr.bf16.mxu0 0
  %104 = vmatpush1.bf16.msra.mxu0 0
  %105 = vmatprep.subr.bf16.mxu0 0
  %106 = vmatpush1.bf16.msra.mxu0 0
  %107 = vmatprep.subr.bf16.mxu0 0
  %108 = vmatpush1.bf16.msra.mxu0 0
  %109 = vmatprep.subr.bf16.mxu0 0
  %110 = vmatpush1.bf16.msra.mxu0 0
  %111 = vmatprep.subr.bf16.mxu0 0
  %112 = vmatpush1.bf16.msra.mxu0 0
  %113 = vmatprep.subr.bf16.mxu0 0
  %114 = vmatpush1.bf16.msra.mxu0 0
  %115 = vmatprep.subr.bf16.mxu0 0
  %116 = vmatpush1.bf16.msra.mxu0 0
  %117 = vmatprep.subr.bf16.mxu0 0
  %118 = vmatpush1.bf16.msra.mxu0 %v88
  %119 = vmatprep.subr.bf16.mxu0 0
  %120 = vmatpush2.bf16.msra.mxu0 0
  %121 = vmatprep.subr.bf16.mxu0 0
  %122 = vmatpush2.bf16.msra.mxu0 0
  %123 = vmatprep.subr.bf16.mxu0 0
  %124 = vmatpush2.bf16.msra.mxu0 0
  %125 = vmatprep.subr.bf16.mxu0 0
  %126 = vmatpush2.bf16.msra.mxu0 0
  %127 = vmatprep.subr.bf16.mxu0 0
  %128 = vmatpush2.bf16.msra.mxu0 0
  %129 = vmatprep.subr.bf16.mxu0 0
  %130 = vmatpush2.bf16.msra.mxu0 0
  %131 = vmatprep.subr.bf16.mxu0 0
  %132 = vmatpush2.bf16.msra.mxu0 0
  %133 = vmatprep.subr.bf16.mxu0 0
  %134 = vmatpush2.bf16.msra.mxu0 0
  %135 = vmatprep.mubr.bf16.mxu0 0
  %136 = vmatmul.mubr.bf16.gmra.mxu0 %v92
  %v137 = vpop.f32.mrf.mxu0
  %v138 = vadd.f32 0.0, %v137
  %v139 = vpop.f32.mrf.mxu0
  %v140 = vpop.f32.mrf.mxu0
  %v141 = vadd.f32 0.0, %v140
  %v142 = vpop.f32.mrf.mxu0
  %143 = vmatprep.mubr.bf16.mxu0 0
  %144 = vmatmul.mubr.bf16.gmra.mxu0 %v95
  %v145 = vpop.f32.mrf.mxu0
  %v146 = vadd.f32 0.0, %v145
  %v147 = vpop.f32.mrf.mxu0
  %v148 = vpop.f32.mrf.mxu0
  %v149 = vadd.f32 0.0, %v148
  %v150 = vpop.f32.mrf.mxu0
  %151 = vmatprep.mubr.bf16.mxu0 0
  %152 = vmatmul.mubr.bf16.gmra.mxu0 %v98
  %v153 = vpop.f32.mrf.mxu0
  %v154 = vadd.f32 0.0, %v153
  %v155 = vpop.f32.mrf.mxu0
  %v156 = vpop.f32.mrf.mxu0
  %v157 = vadd.f32 0.0, %v156
  %v158 = vpop.f32.mrf.mxu0
  %159 = vmatprep.mubr.bf16.mxu0 0
  %160 = vmatmul.mubr.bf16.gmra.mxu0 %v101
  %v161 = vpop.f32.mrf.mxu0
  %v162 = vadd.f32 0.0, %v161
  %v163 = vpop.f32.mrf.mxu0
  %v164 = vpop.f32.mrf.mxu0
  %v165 = vadd.f32 0.0, %v164
  %v166 = vpop.f32.mrf.mxu0
  %167 = vdwg.mxu0
  %v168 = vld [vmem:[%s14] sm:$0x1]
  %v170 = vlaneseq
  %v171 = vshrl.u32 %v170, 7
  %v172 = vsub.s32 0, %v171
  %v173 = vrot.slane %v168, %v172
  %v175 = vadd.f32 %v138, %v173
  %v176 = vadd.f32 %v141, %v173
  %v177 = vadd.f32 %v146, %v173
  %v178 = vadd.f32 %v149, %v173
  %v179 = vadd.f32 %v154, %v173
  %v180 = vadd.f32 %v157, %v173
  %v181 = vadd.f32 %v162, %v173
  %v182 = vadd.f32 %v165, %v173
  %v183 = vld [vmem:[%s13] sm:$0xff]
  %v184 = vld [vmem:[%s13 + $0x8] sm:$0xff]
  %v185 = vld [vmem:[%s13 + $0x10] sm:$0xff]
  %v186 = vld [vmem:[%s13 + $0x18] sm:$0xff]
  %vm187 = vcmask 261120
  %v189 = vsel %vm187, 0.0, 0
  %191 = vmatprep.subr.mxu0 0.0
  %192 = vmatpush1.msra.mxu0 0.0
  %193 = vmatprep.subr.mxu0 0.0
  %194 = vmatpush1.msra.mxu0 0.0
  %195 = vmatprep.subr.mxu0 0.0
  %196 = vmatpush1.msra.mxu0 0.0
  %197 = vmatprep.subr.mxu0 0.0
  %198 = vmatpush1.msra.mxu0 0.0
  %199 = vmatprep.subr.mxu0 0.0
  %200 = vmatpush1.msra.mxu0 0.0
  %201 = vmatprep.subr.mxu0 0.0
  %202 = vmatpush1.msra.mxu0 0.0
  %203 = vmatprep.subr.mxu0 0.0
  %204 = vmatpush1.msra.mxu0 0.0
  %205 = vmatprep.subr.mxu0 0.0
  %206 = vmatpush1.msra.mxu0 0.0
  %207 = vmatprep.subr.mxu0 0.0
  %208 = vmatpush1.msra.mxu0 0.0
  %209 = vmatprep.subr.mxu0 0.0
  %210 = vmatpush1.msra.mxu0 0.0
  %211 = vmatprep.subr.mxu0 0.0
  %212 = vmatpush1.msra.mxu0 0.0
  %213 = vmatprep.subr.mxu0 0.0
  %214 = vmatpush1.msra.mxu0 0.0
  %215 = vmatprep.subr.mxu0 0.0
  %216 = vmatpush1.msra.mxu0 %v186
  %217 = vmatprep.subr.mxu0 0.0
  %218 = vmatpush1.msra.mxu0 %v185
  %219 = vmatprep.subr.mxu0 0.0
  %220 = vmatpush1.msra.mxu0 %v184
  %221 = vmatprep.subr.mxu0 0.0
  %222 = vmatpush1.msra.mxu0 %v183
  %223 = vmatprep.subr.mxu0 0.0
  %224 = vmatpush2.msra.mxu0 0.0
  %225 = vmatprep.subr.mxu0 0.0
  %226 = vmatpush2.msra.mxu0 0.0
  %227 = vmatprep.subr.mxu0 0.0
  %228 = vmatpush2.msra.mxu0 0.0
  %229 = vmatprep.subr.mxu0 0.0
  %230 = vmatpush2.msra.mxu0 0.0
  %231 = vmatprep.subr.mxu0 0.0
  %232 = vmatpush2.msra.mxu0 0.0
  %233 = vmatprep.subr.mxu0 0.0
  %234 = vmatpush2.msra.mxu0 0.0
  %235 = vmatprep.subr.mxu0 0.0
  %236 = vmatpush2.msra.mxu0 0.0
  %237 = vmatprep.subr.mxu0 0.0
  %238 = vmatpush2.msra.mxu0 0.0
  %239 = vmatprep.subr.mxu0 0.0
  %240 = vmatpush2.msra.mxu0 0.0
  %241 = vmatprep.subr.mxu0 0.0
  %242 = vmatpush2.msra.mxu0 0.0
  %243 = vmatprep.subr.mxu0 0.0
  %244 = vmatpush2.msra.mxu0 0.0
  %245 = vmatprep.subr.mxu0 0.0
  %246 = vmatpush2.msra.mxu0 0.0
  %247 = vmatprep.subr.mxu0 0.0
  %248 = vmatpush2.msra.mxu0 0.0
  %249 = vmatprep.subr.mxu0 0.0
  %250 = vmatpush2.msra.mxu0 0.0
  %251 = vmatprep.subr.mxu0 0.0
  %252 = vmatpush2.msra.mxu0 0.0
  %253 = vmatprep.subr.mxu0 0.0
  %254 = vmatpush2.msra.mxu0 0.0
  %255 = vmatprep.mubr.f32.mxu0 0.0
  %256 = vmatmul.mubr.f32.gmra.mxu0 %v189
  %v257 = vpop.f32.mrf.mxu0
  %v258 = vadd.f32 0.0, %v257
  %v259 = vpop.f32.mrf.mxu0
  %260 = vdwg.mxu0
  %v262 = vrot.slane %v258, 1
  %v263 = vrot.slane %v258, 2
  %v264 = vrot.slane %v258, 3
  %v265 = vrot.slane %v258, 4
  %v266 = vrot.slane %v258, 5
  %v267 = vrot.slane %v258, 6
  %v268 = vrot.slane %v258, 7
  %v277 = vadd.f32 %v175, %v258
  %v278 = vadd.f32 %v176, %v262
  %v279 = vadd.f32 %v177, %v263
  %v280 = vadd.f32 %v178, %v264
  %v281 = vadd.f32 %v179, %v265
  %v282 = vadd.f32 %v180, %v266
  %v283 = vadd.f32 %v181, %v267
  %v284 = vadd.f32 %v182, %v268
  %v285 = vxor.u32 %v277, 2147483648
  %v286 = vxor.u32 %v278, 2147483648
  %v287 = vxor.u32 %v279, 2147483648
  %v288 = vxor.u32 %v280, 2147483648
  %v289 = vxor.u32 %v281, 2147483648
  %v290 = vxor.u32 %v282, 2147483648
  %v291 = vxor.u32 %v283, 2147483648
  %v292 = vxor.u32 %v284, 2147483648
  %v293 = vmul.f32 %v285, 1.442695
  %v294 = vpow.pop %v293
  %v295 = vmul.f32 %v286, 1.442695
  %v296 = vpow.pop %v295
  %v297 = vmul.f32 %v287, 1.442695
  %v298 = vpow.pop %v297
  %v299 = vmul.f32 %v288, 1.442695
  %v300 = vpow.pop %v299
  %v301 = vmul.f32 %v289, 1.442695
  %v302 = vpow.pop %v301
  %v303 = vmul.f32 %v290, 1.442695
  %v304 = vpow.pop %v303
  %v305 = vmul.f32 %v291, 1.442695
  %v306 = vpow.pop %v305
  %v307 = vmul.f32 %v292, 1.442695
  %v308 = vpow.pop %v307
  %v309 = vadd.f32 %v294, 1.0
  %v310 = vadd.f32 %v296, 1.0
  %v311 = vadd.f32 %v298, 1.0
  %v312 = vadd.f32 %v300, 1.0
  %v313 = vadd.f32 %v302, 1.0
  %v314 = vadd.f32 %v304, 1.0
  %v315 = vadd.f32 %v306, 1.0
  %v316 = vadd.f32 %v308, 1.0
  %v317 = vrcp.pop %v309
  %v318 = vmul.f32 1.0, %v317
  %v319 = vrcp.pop %v310
  %v320 = vmul.f32 1.0, %v319
  %v321 = vrcp.pop %v311
  %v322 = vmul.f32 1.0, %v321
  %v323 = vrcp.pop %v312
  %v324 = vmul.f32 1.0, %v323
  %v325 = vrcp.pop %v313
  %v326 = vmul.f32 1.0, %v325
  %v327 = vrcp.pop %v314
  %v328 = vmul.f32 1.0, %v327
  %v329 = vrcp.pop %v315
  %v330 = vmul.f32 1.0, %v329
  %v331 = vrcp.pop %v316
  %v332 = vmul.f32 1.0, %v331
  %v333 = vtanh.pop %v277
  %v334 = vtanh.pop %v278
  %v335 = vtanh.pop %v279
  %v336 = vtanh.pop %v280
  %v337 = vtanh.pop %v281
  %v338 = vtanh.pop %v282
  %v339 = vtanh.pop %v283
  %v340 = vtanh.pop %v284
  %v341 = vmul.f32 %v318, 0.0
  %v342 = vmul.f32 %v320, 0.0
  %v343 = vmul.f32 %v322, 0.0
  %v344 = vmul.f32 %v324, 0.0
  %v345 = vmul.f32 %v326, 0.0
  %v346 = vmul.f32 %v328, 0.0
  %v347 = vmul.f32 %v330, 0.0
  %v348 = vmul.f32 %v332, 0.0
  %357 = vrot.lane.b32.xlu0 %v333, 32
  %v358 = vpop.permute.xlu0 %357
  %359 = vrot.lane.b32.xlu0 %v334, 32
  %v360 = vpop.permute.xlu0 %359
  %361 = vrot.lane.b32.xlu0 %v335, 32
  %v362 = vpop.permute.xlu0 %361
  %363 = vrot.lane.b32.xlu0 %v336, 32
  %v364 = vpop.permute.xlu0 %363
  %365 = vrot.lane.b32.xlu0 %v337, 32
  %v366 = vpop.permute.xlu0 %365
  %367 = vrot.lane.b32.xlu0 %v338, 32
  %v368 = vpop.permute.xlu0 %367
  %369 = vrot.lane.b32.xlu0 %v339, 32
  %v370 = vpop.permute.xlu0 %369
  %371 = vrot.lane.b32.xlu0 %v340, 32
  %v372 = vpop.permute.xlu0 %371
  %v381 = vmul.f32 %v318, %v358
  %v382 = vmul.f32 %v320, %v360
  %v383 = vmul.f32 %v322, %v362
  %v384 = vmul.f32 %v324, %v364
  %v385 = vmul.f32 %v326, %v366
  %v386 = vmul.f32 %v328, %v368
  %v387 = vmul.f32 %v330, %v370
  %v388 = vmul.f32 %v332, %v372
  %397 = vrot.lane.b32.xlu0 %v381, 32
  %v398 = vpop.permute.xlu0 %397
  %399 = vrot.lane.b32.xlu0 %v382, 32
  %v400 = vpop.permute.xlu0 %399
  %401 = vrot.lane.b32.xlu0 %v383, 32
  %v402 = vpop.permute.xlu0 %401
  %403 = vrot.lane.b32.xlu0 %v384, 32
  %v404 = vpop.permute.xlu0 %403
  %405 = vrot.lane.b32.xlu0 %v385, 32
  %v406 = vpop.permute.xlu0 %405
  %407 = vrot.lane.b32.xlu0 %v386, 32
  %v408 = vpop.permute.xlu0 %407
  %409 = vrot.lane.b32.xlu0 %v387, 32
  %v410 = vpop.permute.xlu0 %409
  %411 = vrot.lane.b32.xlu0 %v388, 32
  %v412 = vpop.permute.xlu0 %411
  %v421 = vadd.f32 %v341, %v398
  %v422 = vadd.f32 %v342, %v400
  %v423 = vadd.f32 %v343, %v402
  %v424 = vadd.f32 %v344, %v404
  %v425 = vadd.f32 %v345, %v406
  %v426 = vadd.f32 %v346, %v408
  %v427 = vadd.f32 %v347, %v410
  %v428 = vadd.f32 %v348, %v412
  %v429 = vtanh.pop %v421
  %v430 = vtanh.pop %v422
  %v431 = vtanh.pop %v423
  %v432 = vtanh.pop %v424
  %v433 = vtanh.pop %v425
  %v434 = vtanh.pop %v426
  %v435 = vtanh.pop %v427
  %v436 = vtanh.pop %v428
  %445 = vrot.lane.b32.xlu0 %v429, 32
  %v446 = vpop.permute.xlu0 %445
  %447 = vrot.lane.b32.xlu0 %v430, 32
  %v448 = vpop.permute.xlu0 %447
  %449 = vrot.lane.b32.xlu0 %v431, 32
  %v450 = vpop.permute.xlu0 %449
  %451 = vrot.lane.b32.xlu0 %v432, 32
  %v452 = vpop.permute.xlu0 %451
  %453 = vrot.lane.b32.xlu0 %v433, 32
  %v454 = vpop.permute.xlu0 %453
  %455 = vrot.lane.b32.xlu0 %v434, 32
  %v456 = vpop.permute.xlu0 %455
  %457 = vrot.lane.b32.xlu0 %v435, 32
  %v458 = vpop.permute.xlu0 %457
  %459 = vrot.lane.b32.xlu0 %v436, 32
  %v460 = vpop.permute.xlu0 %459
  %v469 = vmul.f32 %v318, %v446
  %v470 = vmul.f32 %v320, %v448
  %v471 = vmul.f32 %v322, %v450
  %v472 = vmul.f32 %v324, %v452
  %v473 = vmul.f32 %v326, %v454
  %v474 = vmul.f32 %v328, %v456
  %v475 = vmul.f32 %v330, %v458
  %v476 = vmul.f32 %v332, %v460
  %v485 = vrot.slane %v470, 7
  %vm486 = vcmask 1041409
  %v487 = vsel %vm486, %v485, %v469
  %v488 = vrot.slane %v471, 6
  %vm489 = vcmask 1042434
  %v490 = vsel %vm489, %v488, %v487
  %v491 = vrot.slane %v472, 5
  %vm492 = vcmask 1043459
  %v493 = vsel %vm492, %v491, %v490
  %v494 = vrot.slane %v473, 4
  %vm495 = vcmask 1044484
  %v496 = vsel %vm495, %v494, %v493
  %v497 = vrot.slane %v474, 3
  %vm498 = vcmask 1045509
  %v499 = vsel %vm498, %v497, %v496
  %v500 = vrot.slane %v475, 2
  %vm501 = vcmask 1046534
  %v502 = vsel %vm501, %v500, %v499
  %v503 = vrot.slane %v476, 1
  %vm504 = vcmask 1047559
  %v505 = vsel %vm504, %v503, %v502
  %506 = vrot.lane.b32.xlu0 %v505, 64
  %v507 = vpop.permute.xlu0 %506
  %v508 = vsel %vm187, %v507, 0
  %510 = vmatprep.subr.mxu0 0.0
  %511 = vmatpush1.msra.mxu0 0.0
  %512 = vmatprep.subr.mxu0 0.0
  %513 = vmatpush1.msra.mxu0 0.0
  %514 = vmatprep.subr.mxu0 0.0
  %515 = vmatpush1.msra.mxu0 0.0
  %516 = vmatprep.subr.mxu0 0.0
  %517 = vmatpush1.msra.mxu0 0.0
  %518 = vmatprep.subr.mxu0 0.0
  %519 = vmatpush1.msra.mxu0 0.0
  %520 = vmatprep.subr.mxu0 0.0
  %521 = vmatpush1.msra.mxu0 0.0
  %522 = vmatprep.subr.mxu0 0.0
  %523 = vmatpush1.msra.mxu0 0.0
  %524 = vmatprep.subr.mxu0 0.0
  %525 = vmatpush1.msra.mxu0 0.0
  %526 = vmatprep.subr.mxu0 0.0
  %527 = vmatpush1.msra.mxu0 0.0
  %528 = vmatprep.subr.mxu0 0.0
  %529 = vmatpush1.msra.mxu0 0.0
  %530 = vmatprep.subr.mxu0 0.0
  %531 = vmatpush1.msra.mxu0 0.0
  %532 = vmatprep.subr.mxu0 0.0
  %533 = vmatpush1.msra.mxu0 0.0
  %534 = vmatprep.subr.mxu0 0.0
  %535 = vmatpush1.msra.mxu0 %v186
  %536 = vmatprep.subr.mxu0 0.0
  %537 = vmatpush1.msra.mxu0 %v185
  %538 = vmatprep.subr.mxu0 0.0
  %539 = vmatpush1.msra.mxu0 %v184
  %540 = vmatprep.subr.mxu0 0.0
  %541 = vmatpush1.msra.mxu0 %v183
  %542 = vmatprep.subr.mxu0 0.0
  %543 = vmatpush2.msra.mxu0 0.0
  %544 = vmatprep.subr.mxu0 0.0
  %545 = vmatpush2.msra.mxu0 0.0
  %546 = vmatprep.subr.mxu0 0.0
  %547 = vmatpush2.msra.mxu0 0.0
  %548 = vmatprep.subr.mxu0 0.0
  %549 = vmatpush2.msra.mxu0 0.0
  %550 = vmatprep.subr.mxu0 0.0
  %551 = vmatpush2.msra.mxu0 0.0
  %552 = vmatprep.subr.mxu0 0.0
  %553 = vmatpush2.msra.mxu0 0.0
  %554 = vmatprep.subr.mxu0 0.0
  %555 = vmatpush2.msra.mxu0 0.0
  %556 = vmatprep.subr.mxu0 0.0
  %557 = vmatpush2.msra.mxu0 0.0
  %558 = vmatprep.subr.mxu0 0.0
  %559 = vmatpush2.msra.mxu0 0.0
  %560 = vmatprep.subr.mxu0 0.0
  %561 = vmatpush2.msra.mxu0 0.0
  %562 = vmatprep.subr.mxu0 0.0
  %563 = vmatpush2.msra.mxu0 0.0
  %564 = vmatprep.subr.mxu0 0.0
  %565 = vmatpush2.msra.mxu0 0.0
  %566 = vmatprep.subr.mxu0 0.0
  %567 = vmatpush2.msra.mxu0 0.0
  %568 = vmatprep.subr.mxu0 0.0
  %569 = vmatpush2.msra.mxu0 0.0
  %570 = vmatprep.subr.mxu0 0.0
  %571 = vmatpush2.msra.mxu0 0.0
  %572 = vmatprep.subr.mxu0 0.0
  %573 = vmatpush2.msra.mxu0 0.0
  %574 = vmatprep.mubr.f32.mxu0 0.0
  %575 = vmatmul.mubr.f32.gmra.mxu0 %v508
  %v576 = vpop.f32.mrf.mxu0
  %v577 = vadd.f32 0.0, %v576
  %v578 = vpop.f32.mrf.mxu0
  %579 = vdwg.mxu0
  %v581 = vrot.slane %v577, 7
  %v582 = vrot.slane %v577, 1
  %v583 = vrot.slane %v577, 2
  %v584 = vrot.slane %v577, 3
  %v585 = vrot.slane %v577, 4
  %v586 = vrot.slane %v577, 5
  %v587 = vrot.slane %v577, 6
  %v596 = vadd.f32 %v175, %v581
  %v597 = vadd.f32 %v176, %v577
  %v598 = vadd.f32 %v177, %v582
  %v599 = vadd.f32 %v178, %v583
  %v600 = vadd.f32 %v179, %v584
  %v601 = vadd.f32 %v180, %v585
  %v602 = vadd.f32 %v181, %v586
  %v603 = vadd.f32 %v182, %v587
  %v604 = vxor.u32 %v596, 2147483648
  %v605 = vxor.u32 %v597, 2147483648
  %v606 = vxor.u32 %v598, 2147483648
  %v607 = vxor.u32 %v599, 2147483648
  %v608 = vxor.u32 %v600, 2147483648
  %v609 = vxor.u32 %v601, 2147483648
  %v610 = vxor.u32 %v602, 2147483648
  %v611 = vxor.u32 %v603, 2147483648
  %v612 = vmul.f32 %v604, 1.442695
  %v613 = vpow.pop %v612
  %v614 = vmul.f32 %v605, 1.442695
  %v615 = vpow.pop %v614
  %v616 = vmul.f32 %v606, 1.442695
  %v617 = vpow.pop %v616
  %v618 = vmul.f32 %v607, 1.442695
  %v619 = vpow.pop %v618
  %v620 = vmul.f32 %v608, 1.442695
  %v621 = vpow.pop %v620
  %v622 = vmul.f32 %v609, 1.442695
  %v623 = vpow.pop %v622
  %v624 = vmul.f32 %v610, 1.442695
  %v625 = vpow.pop %v624
  %v626 = vmul.f32 %v611, 1.442695
  %v627 = vpow.pop %v626
  %v628 = vadd.f32 %v613, 1.0
  %v629 = vadd.f32 %v615, 1.0
  %v630 = vadd.f32 %v617, 1.0
  %v631 = vadd.f32 %v619, 1.0
  %v632 = vadd.f32 %v621, 1.0
  %v633 = vadd.f32 %v623, 1.0
  %v634 = vadd.f32 %v625, 1.0
  %v635 = vadd.f32 %v627, 1.0
  %v636 = vrcp.pop %v628
  %v637 = vmul.f32 1.0, %v636
  %v638 = vrcp.pop %v629
  %v639 = vmul.f32 1.0, %v638
  %v640 = vrcp.pop %v630
  %v641 = vmul.f32 1.0, %v640
  %v642 = vrcp.pop %v631
  %v643 = vmul.f32 1.0, %v642
  %v644 = vrcp.pop %v632
  %v645 = vmul.f32 1.0, %v644
  %v646 = vrcp.pop %v633
  %v647 = vmul.f32 1.0, %v646
  %v648 = vrcp.pop %v634
  %v649 = vmul.f32 1.0, %v648
  %v650 = vrcp.pop %v635
  %v651 = vmul.f32 1.0, %v650
  %v652 = vtanh.pop %v596
  %v653 = vtanh.pop %v597
  %v654 = vtanh.pop %v598
  %v655 = vtanh.pop %v599
  %v656 = vtanh.pop %v600
  %v657 = vtanh.pop %v601
  %v658 = vtanh.pop %v602
  %v659 = vtanh.pop %v603
  %v668 = vrot.slane %v421, 7
  %v669 = vrot.slane %v422, 7
  %v670 = vrot.slane %v423, 7
  %v671 = vrot.slane %v424, 7
  %v672 = vrot.slane %v425, 7
  %v673 = vrot.slane %v426, 7
  %v674 = vrot.slane %v427, 7
  %v675 = vrot.slane %v428, 7
  %v684 = vmul.f32 %v637, %v668
  %v685 = vmul.f32 %v639, %v669
  %v686 = vmul.f32 %v641, %v670
  %v687 = vmul.f32 %v643, %v671
  %v688 = vmul.f32 %v645, %v672
  %v689 = vmul.f32 %v647, %v673
  %v690 = vmul.f32 %v649, %v674
  %v691 = vmul.f32 %v651, %v675
  %700 = vrot.lane.b32.xlu0 %v652, 32
  %v701 = vpop.permute.xlu0 %700
  %702 = vrot.lane.b32.xlu0 %v653, 32
  %v703 = vpop.permute.xlu0 %702
  %704 = vrot.lane.b32.xlu0 %v654, 32
  %v705 = vpop.permute.xlu0 %704
  %706 = vrot.lane.b32.xlu0 %v655, 32
  %v707 = vpop.permute.xlu0 %706
  %708 = vrot.lane.b32.xlu0 %v656, 32
  %v709 = vpop.permute.xlu0 %708
  %710 = vrot.lane.b32.xlu0 %v657, 32
  %v711 = vpop.permute.xlu0 %710
  %712 = vrot.lane.b32.xlu0 %v658, 32
  %v713 = vpop.permute.xlu0 %712
  %714 = vrot.lane.b32.xlu0 %v659, 32
  %v715 = vpop.permute.xlu0 %714
  %v724 = vmul.f32 %v637, %v701
  %v725 = vmul.f32 %v639, %v703
  %v726 = vmul.f32 %v641, %v705
  %v727 = vmul.f32 %v643, %v707
  %v728 = vmul.f32 %v645, %v709
  %v729 = vmul.f32 %v647, %v711
  %v730 = vmul.f32 %v649, %v713
  %v731 = vmul.f32 %v651, %v715
  %740 = vrot.lane.b32.xlu0 %v724, 32
  %v741 = vpop.permute.xlu0 %740
  %742 = vrot.lane.b32.xlu0 %v725, 32
  %v743 = vpop.permute.xlu0 %742
  %744 = vrot.lane.b32.xlu0 %v726, 32
  %v745 = vpop.permute.xlu0 %744
  %746 = vrot.lane.b32.xlu0 %v727, 32
  %v747 = vpop.permute.xlu0 %746
  %748 = vrot.lane.b32.xlu0 %v728, 32
  %v749 = vpop.permute.xlu0 %748
  %750 = vrot.lane.b32.xlu0 %v729, 32
  %v751 = vpop.permute.xlu0 %750
  %752 = vrot.lane.b32.xlu0 %v730, 32
  %v753 = vpop.permute.xlu0 %752
  %754 = vrot.lane.b32.xlu0 %v731, 32
  %v755 = vpop.permute.xlu0 %754
  %v764 = vadd.f32 %v684, %v741
  %v765 = vadd.f32 %v685, %v743
  %v766 = vadd.f32 %v686, %v745
  %v767 = vadd.f32 %v687, %v747
  %v768 = vadd.f32 %v688, %v749
  %v769 = vadd.f32 %v689, %v751
  %v770 = vadd.f32 %v690, %v753
  %v771 = vadd.f32 %v691, %v755
  %v772 = vtanh.pop %v764
  %v773 = vtanh.pop %v765
  %v774 = vtanh.pop %v766
  %v775 = vtanh.pop %v767
  %v776 = vtanh.pop %v768
  %v777 = vtanh.pop %v769
  %v778 = vtanh.pop %v770
  %v779 = vtanh.pop %v771
  %788 = vrot.lane.b32.xlu0 %v772, 32
  %v789 = vpop.permute.xlu0 %788
  %790 = vrot.lane.b32.xlu0 %v773, 32
  %v791 = vpop.permute.xlu0 %790
  %792 = vrot.lane.b32.xlu0 %v774, 32
  %v793 = vpop.permute.xlu0 %792
  %794 = vrot.lane.b32.xlu0 %v775, 32
  %v795 = vpop.permute.xlu0 %794
  %796 = vrot.lane.b32.xlu0 %v776, 32
  %v797 = vpop.permute.xlu0 %796
  %798 = vrot.lane.b32.xlu0 %v777, 32
  %v799 = vpop.permute.xlu0 %798
  %800 = vrot.lane.b32.xlu0 %v778, 32
  %v801 = vpop.permute.xlu0 %800
  %802 = vrot.lane.b32.xlu0 %v779, 32
  %v803 = vpop.permute.xlu0 %802
  %v812 = vmul.f32 %v637, %v789
  %v813 = vmul.f32 %v639, %v791
  %v814 = vmul.f32 %v641, %v793
  %v815 = vmul.f32 %v643, %v795
  %v816 = vmul.f32 %v645, %v797
  %v817 = vmul.f32 %v647, %v799
  %v818 = vmul.f32 %v649, %v801
  %v819 = vmul.f32 %v651, %v803
  %v828 = vrot.slane %v812, 1
  %v829 = vsel %vm486, %v813, %v828
  %v830 = vrot.slane %v814, 7
  %v831 = vsel %vm489, %v830, %v829
  %v832 = vrot.slane %v815, 6
  %v833 = vsel %vm492, %v832, %v831
  %v834 = vrot.slane %v816, 5
  %v835 = vsel %vm495, %v834, %v833
  %v836 = vrot.slane %v817, 4
  %v837 = vsel %vm498, %v836, %v835
  %v838 = vrot.slane %v818, 3
  %v839 = vsel %vm501, %v838, %v837
  %v840 = vrot.slane %v819, 2
  %v841 = vsel %vm504, %v840, %v839
  %842 = vrot.lane.b32.xlu0 %v841, 64
  %v843 = vpop.permute.xlu0 %842
  %v844 = vsel %vm187, %v843, 0
  %846 = vmatprep.subr.mxu0 0.0
  %847 = vmatpush1.msra.mxu0 0.0
  %848 = vmatprep.subr.mxu0 0.0
  %849 = vmatpush1.msra.mxu0 0.0
  %850 = vmatprep.subr.mxu0 0.0
  %851 = vmatpush1.msra.mxu0 0.0
  %852 = vmatprep.subr.mxu0 0.0
  %853 = vmatpush1.msra.mxu0 0.0
  %854 = vmatprep.subr.mxu0 0.0
  %855 = vmatpush1.msra.mxu0 0.0
  %856 = vmatprep.subr.mxu0 0.0
  %857 = vmatpush1.msra.mxu0 0.0
  %858 = vmatprep.subr.mxu0 0.0
  %859 = vmatpush1.msra.mxu0 0.0
  %860 = vmatprep.subr.mxu0 0.0
  %861 = vmatpush1.msra.mxu0 0.0
  %862 = vmatprep.subr.mxu0 0.0
  %863 = vmatpush1.msra.mxu0 0.0
  %864 = vmatprep.subr.mxu0 0.0
  %865 = vmatpush1.msra.mxu0 0.0
  %866 = vmatprep.subr.mxu0 0.0
  %867 = vmatpush1.msra.mxu0 0.0
  %868 = vmatprep.subr.mxu0 0.0
  %869 = vmatpush1.msra.mxu0 0.0
  %870 = vmatprep.subr.mxu0 0.0
  %871 = vmatpush1.msra.mxu0 %v186
  %872 = vmatprep.subr.mxu0 0.0
  %873 = vmatpush1.msra.mxu0 %v185
  %874 = vmatprep.subr.mxu0 0.0
  %875 = vmatpush1.msra.mxu0 %v184
  %876 = vmatprep.subr.mxu0 0.0
  %877 = vmatpush1.msra.mxu0 %v183
  %878 = vmatprep.subr.mxu0 0.0
  %879 = vmatpush2.msra.mxu0 0.0
  %880 = vmatprep.subr.mxu0 0.0
  %881 = vmatpush2.msra.mxu0 0.0
  %882 = vmatprep.subr.mxu0 0.0
  %883 = vmatpush2.msra.mxu0 0.0
  %884 = vmatprep.subr.mxu0 0.0
  %885 = vmatpush2.msra.mxu0 0.0
  %886 = vmatprep.subr.mxu0 0.0
  %887 = vmatpush2.msra.mxu0 0.0
  %888 = vmatprep.subr.mxu0 0.0
  %889 = vmatpush2.msra.mxu0 0.0
  %890 = vmatprep.subr.mxu0 0.0
  %891 = vmatpush2.msra.mxu0 0.0
  %892 = vmatprep.subr.mxu0 0.0
  %893 = vmatpush2.msra.mxu0 0.0
  %894 = vmatprep.subr.mxu0 0.0
  %895 = vmatpush2.msra.mxu0 0.0
  %896 = vmatprep.subr.mxu0 0.0
  %897 = vmatpush2.msra.mxu0 0.0
  %898 = vmatprep.subr.mxu0 0.0
  %899 = vmatpush2.msra.mxu0 0.0
  %900 = vmatprep.subr.mxu0 0.0
  %901 = vmatpush2.msra.mxu0 0.0
  %902 = vmatprep.subr.mxu0 0.0
  %903 = vmatpush2.msra.mxu0 0.0
  %904 = vmatprep.subr.mxu0 0.0
  %905 = vmatpush2.msra.mxu0 0.0
  %906 = vmatprep.subr.mxu0 0.0
  %907 = vmatpush2.msra.mxu0 0.0
  %908 = vmatprep.subr.mxu0 0.0
  %909 = vmatpush2.msra.mxu0 0.0
  %910 = vmatprep.mubr.f32.mxu0 0.0
  %911 = vmatmul.mubr.f32.gmra.mxu0 %v844
  %v912 = vpop.f32.mrf.mxu0
  %v913 = vadd.f32 0.0, %v912
  %v914 = vpop.f32.mrf.mxu0
  %915 = vdwg.mxu0
  %v917 = vrot.slane %v913, 6
  %v918 = vrot.slane %v913, 7
  %v919 = vrot.slane %v913, 1
  %v920 = vrot.slane %v913, 2
  %v921 = vrot.slane %v913, 3
  %v922 = vrot.slane %v913, 4
  %v923 = vrot.slane %v913, 5
  %v932 = vadd.f32 %v175, %v917
  %v933 = vadd.f32 %v176, %v918
  %v934 = vadd.f32 %v177, %v913
  %v935 = vadd.f32 %v178, %v919
  %v936 = vadd.f32 %v179, %v920
  %v937 = vadd.f32 %v180, %v921
  %v938 = vadd.f32 %v181, %v922
  %v939 = vadd.f32 %v182, %v923
  %v940 = vxor.u32 %v932, 2147483648
  %v941 = vxor.u32 %v933, 2147483648
  %v942 = vxor.u32 %v934, 2147483648
  %v943 = vxor.u32 %v935, 2147483648
  %v944 = vxor.u32 %v936, 2147483648
  %v945 = vxor.u32 %v937, 2147483648
  %v946 = vxor.u32 %v938, 2147483648
  %v947 = vxor.u32 %v939, 2147483648
  %v948 = vmul.f32 %v940, 1.442695
  %v949 = vpow.pop %v948
  %v950 = vmul.f32 %v941, 1.442695
  %v951 = vpow.pop %v950
  %v952 = vmul.f32 %v942, 1.442695
  %v953 = vpow.pop %v952
  %v954 = vmul.f32 %v943, 1.442695
  %v955 = vpow.pop %v954
  %v956 = vmul.f32 %v944, 1.442695
  %v957 = vpow.pop %v956
  %v958 = vmul.f32 %v945, 1.442695
  %v959 = vpow.pop %v958
  %v960 = vmul.f32 %v946, 1.442695
  %v961 = vpow.pop %v960
  %v962 = vmul.f32 %v947, 1.442695
  %v963 = vpow.pop %v962
  %v964 = vadd.f32 %v949, 1.0
  %v965 = vadd.f32 %v951, 1.0
  %v966 = vadd.f32 %v953, 1.0
  %v967 = vadd.f32 %v955, 1.0
  %v968 = vadd.f32 %v957, 1.0
  %v969 = vadd.f32 %v959, 1.0
  %v970 = vadd.f32 %v961, 1.0
  %v971 = vadd.f32 %v963, 1.0
  %v972 = vrcp.pop %v964
  %v973 = vmul.f32 1.0, %v972
  %v974 = vrcp.pop %v965
  %v975 = vmul.f32 1.0, %v974
  %v976 = vrcp.pop %v966
  %v977 = vmul.f32 1.0, %v976
  %v978 = vrcp.pop %v967
  %v979 = vmul.f32 1.0, %v978
  %v980 = vrcp.pop %v968
  %v981 = vmul.f32 1.0, %v980
  %v982 = vrcp.pop %v969
  %v983 = vmul.f32 1.0, %v982
  %v984 = vrcp.pop %v970
  %v985 = vmul.f32 1.0, %v984
  %v986 = vrcp.pop %v971
  %v987 = vmul.f32 1.0, %v986
  %v988 = vtanh.pop %v932
  %v989 = vtanh.pop %v933
  %v990 = vtanh.pop %v934
  %v991 = vtanh.pop %v935
  %v992 = vtanh.pop %v936
  %v993 = vtanh.pop %v937
  %v994 = vtanh.pop %v938
  %v995 = vtanh.pop %v939
  %v1004 = vrot.slane %v764, 7
  %v1005 = vrot.slane %v765, 7
  %v1006 = vrot.slane %v766, 7
  %v1007 = vrot.slane %v767, 7
  %v1008 = vrot.slane %v768, 7
  %v1009 = vrot.slane %v769, 7
  %v1010 = vrot.slane %v770, 7
  %v1011 = vrot.slane %v771, 7
  %v1020 = vmul.f32 %v973, %v1004
  %v1021 = vmul.f32 %v975, %v1005
  %v1022 = vmul.f32 %v977, %v1006
  %v1023 = vmul.f32 %v979, %v1007
  %v1024 = vmul.f32 %v981, %v1008
  %v1025 = vmul.f32 %v983, %v1009
  %v1026 = vmul.f32 %v985, %v1010
  %v1027 = vmul.f32 %v987, %v1011
  %1036 = vrot.lane.b32.xlu0 %v988, 32
  %v1037 = vpop.permute.xlu0 %1036
  %1038 = vrot.lane.b32.xlu0 %v989, 32
  %v1039 = vpop.permute.xlu0 %1038
  %1040 = vrot.lane.b32.xlu0 %v990, 32
  %v1041 = vpop.permute.xlu0 %1040
  %1042 = vrot.lane.b32.xlu0 %v991, 32
  %v1043 = vpop.permute.xlu0 %1042
  %1044 = vrot.lane.b32.xlu0 %v992, 32
  %v1045 = vpop.permute.xlu0 %1044
  %1046 = vrot.lane.b32.xlu0 %v993, 32
  %v1047 = vpop.permute.xlu0 %1046
  %1048 = vrot.lane.b32.xlu0 %v994, 32
  %v1049 = vpop.permute.xlu0 %1048
  %1050 = vrot.lane.b32.xlu0 %v995, 32
  %v1051 = vpop.permute.xlu0 %1050
  %v1060 = vmul.f32 %v973, %v1037
  %v1061 = vmul.f32 %v975, %v1039
  %v1062 = vmul.f32 %v977, %v1041
  %v1063 = vmul.f32 %v979, %v1043
  %v1064 = vmul.f32 %v981, %v1045
  %v1065 = vmul.f32 %v983, %v1047
  %v1066 = vmul.f32 %v985, %v1049
  %v1067 = vmul.f32 %v987, %v1051
  %1076 = vrot.lane.b32.xlu0 %v1060, 32
  %v1077 = vpop.permute.xlu0 %1076
  %1078 = vrot.lane.b32.xlu0 %v1061, 32
  %v1079 = vpop.permute.xlu0 %1078
  %1080 = vrot.lane.b32.xlu0 %v1062, 32
  %v1081 = vpop.permute.xlu0 %1080
  %1082 = vrot.lane.b32.xlu0 %v1063, 32
  %v1083 = vpop.permute.xlu0 %1082
  %1084 = vrot.lane.b32.xlu0 %v1064, 32
  %v1085 = vpop.permute.xlu0 %1084
  %1086 = vrot.lane.b32.xlu0 %v1065, 32
  %v1087 = vpop.permute.xlu0 %1086
  %1088 = vrot.lane.b32.xlu0 %v1066, 32
  %v1089 = vpop.permute.xlu0 %1088
  %1090 = vrot.lane.b32.xlu0 %v1067, 32
  %v1091 = vpop.permute.xlu0 %1090
  %v1100 = vadd.f32 %v1020, %v1077
  %v1101 = vadd.f32 %v1021, %v1079
  %v1102 = vadd.f32 %v1022, %v1081
  %v1103 = vadd.f32 %v1023, %v1083
  %v1104 = vadd.f32 %v1024, %v1085
  %v1105 = vadd.f32 %v1025, %v1087
  %v1106 = vadd.f32 %v1026, %v1089
  %v1107 = vadd.f32 %v1027, %v1091
  %v1108 = vtanh.pop %v1100
  %v1109 = vtanh.pop %v1101
  %v1110 = vtanh.pop %v1102
  %v1111 = vtanh.pop %v1103
  %v1112 = vtanh.pop %v1104
  %v1113 = vtanh.pop %v1105
  %v1114 = vtanh.pop %v1106
  %v1115 = vtanh.pop %v1107
  %1124 = vrot.lane.b32.xlu0 %v1108, 32
  %v1125 = vpop.permute.xlu0 %1124
  %1126 = vrot.lane.b32.xlu0 %v1109, 32
  %v1127 = vpop.permute.xlu0 %1126
  %1128 = vrot.lane.b32.xlu0 %v1110, 32
  %v1129 = vpop.permute.xlu0 %1128
  %1130 = vrot.lane.b32.xlu0 %v1111, 32
  %v1131 = vpop.permute.xlu0 %1130
  %1132 = vrot.lane.b32.xlu0 %v1112, 32
  %v1133 = vpop.permute.xlu0 %1132
  %1134 = vrot.lane.b32.xlu0 %v1113, 32
  %v1135 = vpop.permute.xlu0 %1134
  %1136 = vrot.lane.b32.xlu0 %v1114, 32
  %v1137 = vpop.permute.xlu0 %1136
  %1138 = vrot.lane.b32.xlu0 %v1115, 32
  %v1139 = vpop.permute.xlu0 %1138
  %v1148 = vmul.f32 %v973, %v1125
  %v1149 = vmul.f32 %v975, %v1127
  %v1150 = vmul.f32 %v977, %v1129
  %v1151 = vmul.f32 %v979, %v1131
  %v1152 = vmul.f32 %v981, %v1133
  %v1153 = vmul.f32 %v983, %v1135
  %v1154 = vmul.f32 %v985, %v1137
  %v1155 = vmul.f32 %v987, %v1139
  %v1164 = vrot.slane %v1148, 2
  %v1165 = vrot.slane %v1149, 1
  %v1166 = vsel %vm486, %v1165, %v1164
  %v1167 = vsel %vm489, %v1150, %v1166
  %v1168 = vrot.slane %v1151, 7
  %v1169 = vsel %vm492, %v1168, %v1167
  %v1170 = vrot.slane %v1152, 6
  %v1171 = vsel %vm495, %v1170, %v1169
  %v1172 = vrot.slane %v1153, 5
  %v1173 = vsel %vm498, %v1172, %v1171
  %v1174 = vrot.slane %v1154, 4
  %v1175 = vsel %vm501, %v1174, %v1173
  %v1176 = vrot.slane %v1155, 3
  %v1177 = vsel %vm504, %v1176, %v1175
  %1178 = vrot.lane.b32.xlu0 %v1177, 64
  %v1179 = vpop.permute.xlu0 %1178
  %v1180 = vsel %vm187, %v1179, 0
  %1182 = vmatprep.subr.mxu0 0.0
  %1183 = vmatpush1.msra.mxu0 0.0
  %1184 = vmatprep.subr.mxu0 0.0
  %1185 = vmatpush1.msra.mxu0 0.0
  %1186 = vmatprep.subr.mxu0 0.0
  %1187 = vmatpush1.msra.mxu0 0.0
  %1188 = vmatprep.subr.mxu0 0.0
  %1189 = vmatpush1.msra.mxu0 0.0
  %1190 = vmatprep.subr.mxu0 0.0
  %1191 = vmatpush1.msra.mxu0 0.0
  %1192 = vmatprep.subr.mxu0 0.0
  %1193 = vmatpush1.msra.mxu0 0.0
  %1194 = vmatprep.subr.mxu0 0.0
  %1195 = vmatpush1.msra.mxu0 0.0
  %1196 = vmatprep.subr.mxu0 0.0
  %1197 = vmatpush1.msra.mxu0 0.0
  %1198 = vmatprep.subr.mxu0 0.0
  %1199 = vmatpush1.msra.mxu0 0.0
  %1200 = vmatprep.subr.mxu0 0.0
  %1201 = vmatpush1.msra.mxu0 0.0
  %1202 = vmatprep.subr.mxu0 0.0
  %1203 = vmatpush1.msra.mxu0 0.0
  %1204 = vmatprep.subr.mxu0 0.0
  %1205 = vmatpush1.msra.mxu0 0.0
  %1206 = vmatprep.subr.mxu0 0.0
  %1207 = vmatpush1.msra.mxu0 %v186
  %1208 = vmatprep.subr.mxu0 0.0
  %1209 = vmatpush1.msra.mxu0 %v185
  %1210 = vmatprep.subr.mxu0 0.0
  %1211 = vmatpush1.msra.mxu0 %v184
  %1212 = vmatprep.subr.mxu0 0.0
  %1213 = vmatpush1.msra.mxu0 %v183
  %1214 = vmatprep.subr.mxu0 0.0
  %1215 = vmatpush2.msra.mxu0 0.0
  %1216 = vmatprep.subr.mxu0 0.0
  %1217 = vmatpush2.msra.mxu0 0.0
  %1218 = vmatprep.subr.mxu0 0.0
  %1219 = vmatpush2.msra.mxu0 0.0
  %1220 = vmatprep.subr.mxu0 0.0
  %1221 = vmatpush2.msra.mxu0 0.0
  %1222 = vmatprep.subr.mxu0 0.0
  %1223 = vmatpush2.msra.mxu0 0.0
  %1224 = vmatprep.subr.mxu0 0.0
  %1225 = vmatpush2.msra.mxu0 0.0
  %1226 = vmatprep.subr.mxu0 0.0
  %1227 = vmatpush2.msra.mxu0 0.0
  %1228 = vmatprep.subr.mxu0 0.0
  %1229 = vmatpush2.msra.mxu0 0.0
  %1230 = vmatprep.subr.mxu0 0.0
  %1231 = vmatpush2.msra.mxu0 0.0
  %1232 = vmatprep.subr.mxu0 0.0
  %1233 = vmatpush2.msra.mxu0 0.0
  %1234 = vmatprep.subr.mxu0 0.0
  %1235 = vmatpush2.msra.mxu0 0.0
  %1236 = vmatprep.subr.mxu0 0.0
  %1237 = vmatpush2.msra.mxu0 0.0
  %1238 = vmatprep.subr.mxu0 0.0
  %1239 = vmatpush2.msra.mxu0 0.0
  %1240 = vmatprep.subr.mxu0 0.0
  %1241 = vmatpush2.msra.mxu0 0.0
  %1242 = vmatprep.subr.mxu0 0.0
  %1243 = vmatpush2.msra.mxu0 0.0
  %1244 = vmatprep.subr.mxu0 0.0
  %1245 = vmatpush2.msra.mxu0 0.0
  %1246 = vmatprep.mubr.f32.mxu0 0.0
  %1247 = vmatmul.mubr.f32.gmra.mxu0 %v1180
  %v1248 = vpop.f32.mrf.mxu0
  %v1249 = vadd.f32 0.0, %v1248
  %v1250 = vpop.f32.mrf.mxu0
  %1251 = vdwg.mxu0
  %v1253 = vrot.slane %v1249, 5
  %v1254 = vrot.slane %v1249, 6
  %v1255 = vrot.slane %v1249, 7
  %v1256 = vrot.slane %v1249, 1
  %v1257 = vrot.slane %v1249, 2
  %v1258 = vrot.slane %v1249, 3
  %v1259 = vrot.slane %v1249, 4
  %v1268 = vadd.f32 %v175, %v1253
  %v1269 = vadd.f32 %v176, %v1254
  %v1270 = vadd.f32 %v177, %v1255
  %v1271 = vadd.f32 %v178, %v1249
  %v1272 = vadd.f32 %v179, %v1256
  %v1273 = vadd.f32 %v180, %v1257
  %v1274 = vadd.f32 %v181, %v1258
  %v1275 = vadd.f32 %v182, %v1259
  %v1276 = vxor.u32 %v1268, 2147483648
  %v1277 = vxor.u32 %v1269, 2147483648
  %v1278 = vxor.u32 %v1270, 2147483648
  %v1279 = vxor.u32 %v1271, 2147483648
  %v1280 = vxor.u32 %v1272, 2147483648
  %v1281 = vxor.u32 %v1273, 2147483648
  %v1282 = vxor.u32 %v1274, 2147483648
  %v1283 = vxor.u32 %v1275, 2147483648
  %v1284 = vmul.f32 %v1276, 1.442695
  %v1285 = vpow.pop %v1284
  %v1286 = vmul.f32 %v1277, 1.442695
  %v1287 = vpow.pop %v1286
  %v1288 = vmul.f32 %v1278, 1.442695
  %v1289 = vpow.pop %v1288
  %v1290 = vmul.f32 %v1279, 1.442695
  %v1291 = vpow.pop %v1290
  %v1292 = vmul.f32 %v1280, 1.442695
  %v1293 = vpow.pop %v1292
  %v1294 = vmul.f32 %v1281, 1.442695
  %v1295 = vpow.pop %v1294
  %v1296 = vmul.f32 %v1282, 1.442695
  %v1297 = vpow.pop %v1296
  %v1298 = vmul.f32 %v1283, 1.442695
  %v1299 = vpow.pop %v1298
  %v1300 = vadd.f32 %v1285, 1.0
  %v1301 = vadd.f32 %v1287, 1.0
  %v1302 = vadd.f32 %v1289, 1.0
  %v1303 = vadd.f32 %v1291, 1.0
  %v1304 = vadd.f32 %v1293, 1.0
  %v1305 = vadd.f32 %v1295, 1.0
  %v1306 = vadd.f32 %v1297, 1.0
  %v1307 = vadd.f32 %v1299, 1.0
  %v1308 = vrcp.pop %v1300
  %v1309 = vmul.f32 1.0, %v1308
  %v1310 = vrcp.pop %v1301
  %v1311 = vmul.f32 1.0, %v1310
  %v1312 = vrcp.pop %v1302
  %v1313 = vmul.f32 1.0, %v1312
  %v1314 = vrcp.pop %v1303
  %v1315 = vmul.f32 1.0, %v1314
  %v1316 = vrcp.pop %v1304
  %v1317 = vmul.f32 1.0, %v1316
  %v1318 = vrcp.pop %v1305
  %v1319 = vmul.f32 1.0, %v1318
  %v1320 = vrcp.pop %v1306
  %v1321 = vmul.f32 1.0, %v1320
  %v1322 = vrcp.pop %v1307
  %v1323 = vmul.f32 1.0, %v1322
  %v1324 = vtanh.pop %v1268
  %v1325 = vtanh.pop %v1269
  %v1326 = vtanh.pop %v1270
  %v1327 = vtanh.pop %v1271
  %v1328 = vtanh.pop %v1272
  %v1329 = vtanh.pop %v1273
  %v1330 = vtanh.pop %v1274
  %v1331 = vtanh.pop %v1275
  %v1340 = vrot.slane %v1100, 7
  %v1341 = vrot.slane %v1101, 7
  %v1342 = vrot.slane %v1102, 7
  %v1343 = vrot.slane %v1103, 7
  %v1344 = vrot.slane %v1104, 7
  %v1345 = vrot.slane %v1105, 7
  %v1346 = vrot.slane %v1106, 7
  %v1347 = vrot.slane %v1107, 7
  %v1356 = vmul.f32 %v1309, %v1340
  %v1357 = vmul.f32 %v1311, %v1341
  %v1358 = vmul.f32 %v1313, %v1342
  %v1359 = vmul.f32 %v1315, %v1343
  %v1360 = vmul.f32 %v1317, %v1344
  %v1361 = vmul.f32 %v1319, %v1345
  %v1362 = vmul.f32 %v1321, %v1346
  %v1363 = vmul.f32 %v1323, %v1347
  %1372 = vrot.lane.b32.xlu0 %v1324, 32
  %v1373 = vpop.permute.xlu0 %1372
  %1374 = vrot.lane.b32.xlu0 %v1325, 32
  %v1375 = vpop.permute.xlu0 %1374
  %1376 = vrot.lane.b32.xlu0 %v1326, 32
  %v1377 = vpop.permute.xlu0 %1376
  %1378 = vrot.lane.b32.xlu0 %v1327, 32
  %v1379 = vpop.permute.xlu0 %1378
  %1380 = vrot.lane.b32.xlu0 %v1328, 32
  %v1381 = vpop.permute.xlu0 %1380
  %1382 = vrot.lane.b32.xlu0 %v1329, 32
  %v1383 = vpop.permute.xlu0 %1382
  %1384 = vrot.lane.b32.xlu0 %v1330, 32
  %v1385 = vpop.permute.xlu0 %1384
  %1386 = vrot.lane.b32.xlu0 %v1331, 32
  %v1387 = vpop.permute.xlu0 %1386
  %v1396 = vmul.f32 %v1309, %v1373
  %v1397 = vmul.f32 %v1311, %v1375
  %v1398 = vmul.f32 %v1313, %v1377
  %v1399 = vmul.f32 %v1315, %v1379
  %v1400 = vmul.f32 %v1317, %v1381
  %v1401 = vmul.f32 %v1319, %v1383
  %v1402 = vmul.f32 %v1321, %v1385
  %v1403 = vmul.f32 %v1323, %v1387
  %1412 = vrot.lane.b32.xlu0 %v1396, 32
  %v1413 = vpop.permute.xlu0 %1412
  %1414 = vrot.lane.b32.xlu0 %v1397, 32
  %v1415 = vpop.permute.xlu0 %1414
  %1416 = vrot.lane.b32.xlu0 %v1398, 32
  %v1417 = vpop.permute.xlu0 %1416
  %1418 = vrot.lane.b32.xlu0 %v1399, 32
  %v1419 = vpop.permute.xlu0 %1418
  %1420 = vrot.lane.b32.xlu0 %v1400, 32
  %v1421 = vpop.permute.xlu0 %1420
  %1422 = vrot.lane.b32.xlu0 %v1401, 32
  %v1423 = vpop.permute.xlu0 %1422
  %1424 = vrot.lane.b32.xlu0 %v1402, 32
  %v1425 = vpop.permute.xlu0 %1424
  %1426 = vrot.lane.b32.xlu0 %v1403, 32
  %v1427 = vpop.permute.xlu0 %1426
  %v1436 = vadd.f32 %v1356, %v1413
  %v1437 = vadd.f32 %v1357, %v1415
  %v1438 = vadd.f32 %v1358, %v1417
  %v1439 = vadd.f32 %v1359, %v1419
  %v1440 = vadd.f32 %v1360, %v1421
  %v1441 = vadd.f32 %v1361, %v1423
  %v1442 = vadd.f32 %v1362, %v1425
  %v1443 = vadd.f32 %v1363, %v1427
  %v1444 = vtanh.pop %v1436
  %v1445 = vtanh.pop %v1437
  %v1446 = vtanh.pop %v1438
  %v1447 = vtanh.pop %v1439
  %v1448 = vtanh.pop %v1440
  %v1449 = vtanh.pop %v1441
  %v1450 = vtanh.pop %v1442
  %v1451 = vtanh.pop %v1443
  %1460 = vrot.lane.b32.xlu0 %v1444, 32
  %v1461 = vpop.permute.xlu0 %1460
  %1462 = vrot.lane.b32.xlu0 %v1445, 32
  %v1463 = vpop.permute.xlu0 %1462
  %1464 = vrot.lane.b32.xlu0 %v1446, 32
  %v1465 = vpop.permute.xlu0 %1464
  %1466 = vrot.lane.b32.xlu0 %v1447, 32
  %v1467 = vpop.permute.xlu0 %1466
  %1468 = vrot.lane.b32.xlu0 %v1448, 32
  %v1469 = vpop.permute.xlu0 %1468
  %1470 = vrot.lane.b32.xlu0 %v1449, 32
  %v1471 = vpop.permute.xlu0 %1470
  %1472 = vrot.lane.b32.xlu0 %v1450, 32
  %v1473 = vpop.permute.xlu0 %1472
  %1474 = vrot.lane.b32.xlu0 %v1451, 32
  %v1475 = vpop.permute.xlu0 %1474
  %v1484 = vmul.f32 %v1309, %v1461
  %v1485 = vmul.f32 %v1311, %v1463
  %v1486 = vmul.f32 %v1313, %v1465
  %v1487 = vmul.f32 %v1315, %v1467
  %v1488 = vmul.f32 %v1317, %v1469
  %v1489 = vmul.f32 %v1319, %v1471
  %v1490 = vmul.f32 %v1321, %v1473
  %v1491 = vmul.f32 %v1323, %v1475
  %v1500 = vrot.slane %v1484, 3
  %v1501 = vrot.slane %v1485, 2
  %v1502 = vsel %vm486, %v1501, %v1500
  %v1503 = vrot.slane %v1486, 1
  %v1504 = vsel %vm489, %v1503, %v1502
  %v1505 = vsel %vm492, %v1487, %v1504
  %v1506 = vrot.slane %v1488, 7
  %v1507 = vsel %vm495, %v1506, %v1505
  %v1508 = vrot.slane %v1489, 6
  %v1509 = vsel %vm498, %v1508, %v1507
  %v1510 = vrot.slane %v1490, 5
  %v1511 = vsel %vm501, %v1510, %v1509
  %v1512 = vrot.slane %v1491, 4
  %v1513 = vsel %vm504, %v1512, %v1511
  %1514 = vrot.lane.b32.xlu0 %v1513, 64
  %v1515 = vpop.permute.xlu0 %1514
  %v1516 = vsel %vm187, %v1515, 0
  %1518 = vmatprep.subr.mxu0 0.0
  %1519 = vmatpush1.msra.mxu0 0.0
  %1520 = vmatprep.subr.mxu0 0.0
  %1521 = vmatpush1.msra.mxu0 0.0
  %1522 = vmatprep.subr.mxu0 0.0
  %1523 = vmatpush1.msra.mxu0 0.0
  %1524 = vmatprep.subr.mxu0 0.0
  %1525 = vmatpush1.msra.mxu0 0.0
  %1526 = vmatprep.subr.mxu0 0.0
  %1527 = vmatpush1.msra.mxu0 0.0
  %1528 = vmatprep.subr.mxu0 0.0
  %1529 = vmatpush1.msra.mxu0 0.0
  %1530 = vmatprep.subr.mxu0 0.0
  %1531 = vmatpush1.msra.mxu0 0.0
  %1532 = vmatprep.subr.mxu0 0.0
  %1533 = vmatpush1.msra.mxu0 0.0
  %1534 = vmatprep.subr.mxu0 0.0
  %1535 = vmatpush1.msra.mxu0 0.0
  %1536 = vmatprep.subr.mxu0 0.0
  %1537 = vmatpush1.msra.mxu0 0.0
  %1538 = vmatprep.subr.mxu0 0.0
  %1539 = vmatpush1.msra.mxu0 0.0
  %1540 = vmatprep.subr.mxu0 0.0
  %1541 = vmatpush1.msra.mxu0 0.0
  %1542 = vmatprep.subr.mxu0 0.0
  %1543 = vmatpush1.msra.mxu0 %v186
  %1544 = vmatprep.subr.mxu0 0.0
  %1545 = vmatpush1.msra.mxu0 %v185
  %1546 = vmatprep.subr.mxu0 0.0
  %1547 = vmatpush1.msra.mxu0 %v184
  %1548 = vmatprep.subr.mxu0 0.0
  %1549 = vmatpush1.msra.mxu0 %v183
  %1550 = vmatprep.subr.mxu0 0.0
  %1551 = vmatpush2.msra.mxu0 0.0
  %1552 = vmatprep.subr.mxu0 0.0
  %1553 = vmatpush2.msra.mxu0 0.0
  %1554 = vmatprep.subr.mxu0 0.0
  %1555 = vmatpush2.msra.mxu0 0.0
  %1556 = vmatprep.subr.mxu0 0.0
  %1557 = vmatpush2.msra.mxu0 0.0
  %1558 = vmatprep.subr.mxu0 0.0
  %1559 = vmatpush2.msra.mxu0 0.0
  %1560 = vmatprep.subr.mxu0 0.0
  %1561 = vmatpush2.msra.mxu0 0.0
  %1562 = vmatprep.subr.mxu0 0.0
  %1563 = vmatpush2.msra.mxu0 0.0
  %1564 = vmatprep.subr.mxu0 0.0
  %1565 = vmatpush2.msra.mxu0 0.0
  %1566 = vmatprep.subr.mxu0 0.0
  %1567 = vmatpush2.msra.mxu0 0.0
  %1568 = vmatprep.subr.mxu0 0.0
  %1569 = vmatpush2.msra.mxu0 0.0
  %1570 = vmatprep.subr.mxu0 0.0
  %1571 = vmatpush2.msra.mxu0 0.0
  %1572 = vmatprep.subr.mxu0 0.0
  %1573 = vmatpush2.msra.mxu0 0.0
  %1574 = vmatprep.subr.mxu0 0.0
  %1575 = vmatpush2.msra.mxu0 0.0
  %1576 = vmatprep.subr.mxu0 0.0
  %1577 = vmatpush2.msra.mxu0 0.0
  %1578 = vmatprep.subr.mxu0 0.0
  %1579 = vmatpush2.msra.mxu0 0.0
  %1580 = vmatprep.subr.mxu0 0.0
  %1581 = vmatpush2.msra.mxu0 0.0
  %1582 = vmatprep.mubr.f32.mxu0 0.0
  %1583 = vmatmul.mubr.f32.gmra.mxu0 %v1516
  %v1584 = vpop.f32.mrf.mxu0
  %v1585 = vadd.f32 0.0, %v1584
  %v1586 = vpop.f32.mrf.mxu0
  %1587 = vdwg.mxu0
  %v1589 = vrot.slane %v1585, 4
  %v1590 = vrot.slane %v1585, 5
  %v1591 = vrot.slane %v1585, 6
  %v1592 = vrot.slane %v1585, 7
  %v1593 = vrot.slane %v1585, 1
  %v1594 = vrot.slane %v1585, 2
  %v1595 = vrot.slane %v1585, 3
  %v1604 = vadd.f32 %v175, %v1589
  %v1605 = vadd.f32 %v176, %v1590
  %v1606 = vadd.f32 %v177, %v1591
  %v1607 = vadd.f32 %v178, %v1592
  %v1608 = vadd.f32 %v179, %v1585
  %v1609 = vadd.f32 %v180, %v1593
  %v1610 = vadd.f32 %v181, %v1594
  %v1611 = vadd.f32 %v182, %v1595
  %v1612 = vxor.u32 %v1604, 2147483648
  %v1613 = vxor.u32 %v1605, 2147483648
  %v1614 = vxor.u32 %v1606, 2147483648
  %v1615 = vxor.u32 %v1607, 2147483648
  %v1616 = vxor.u32 %v1608, 2147483648
  %v1617 = vxor.u32 %v1609, 2147483648
  %v1618 = vxor.u32 %v1610, 2147483648
  %v1619 = vxor.u32 %v1611, 2147483648
  %v1620 = vmul.f32 %v1612, 1.442695
  %v1621 = vpow.pop %v1620
  %v1622 = vmul.f32 %v1613, 1.442695
  %v1623 = vpow.pop %v1622
  %v1624 = vmul.f32 %v1614, 1.442695
  %v1625 = vpow.pop %v1624
  %v1626 = vmul.f32 %v1615, 1.442695
  %v1627 = vpow.pop %v1626
  %v1628 = vmul.f32 %v1616, 1.442695
  %v1629 = vpow.pop %v1628
  %v1630 = vmul.f32 %v1617, 1.442695
  %v1631 = vpow.pop %v1630
  %v1632 = vmul.f32 %v1618, 1.442695
  %v1633 = vpow.pop %v1632
  %v1634 = vmul.f32 %v1619, 1.442695
  %v1635 = vpow.pop %v1634
  %v1636 = vadd.f32 %v1621, 1.0
  %v1637 = vadd.f32 %v1623, 1.0
  %v1638 = vadd.f32 %v1625, 1.0
  %v1639 = vadd.f32 %v1627, 1.0
  %v1640 = vadd.f32 %v1629, 1.0
  %v1641 = vadd.f32 %v1631, 1.0
  %v1642 = vadd.f32 %v1633, 1.0
  %v1643 = vadd.f32 %v1635, 1.0
  %v1644 = vrcp.pop %v1636
  %v1645 = vmul.f32 1.0, %v1644
  %v1646 = vrcp.pop %v1637
  %v1647 = vmul.f32 1.0, %v1646
  %v1648 = vrcp.pop %v1638
  %v1649 = vmul.f32 1.0, %v1648
  %v1650 = vrcp.pop %v1639
  %v1651 = vmul.f32 1.0, %v1650
  %v1652 = vrcp.pop %v1640
  %v1653 = vmul.f32 1.0, %v1652
  %v1654 = vrcp.pop %v1641
  %v1655 = vmul.f32 1.0, %v1654
  %v1656 = vrcp.pop %v1642
  %v1657 = vmul.f32 1.0, %v1656
  %v1658 = vrcp.pop %v1643
  %v1659 = vmul.f32 1.0, %v1658
  %v1660 = vtanh.pop %v1604
  %v1661 = vtanh.pop %v1605
  %v1662 = vtanh.pop %v1606
  %v1663 = vtanh.pop %v1607
  %v1664 = vtanh.pop %v1608
  %v1665 = vtanh.pop %v1609
  %v1666 = vtanh.pop %v1610
  %v1667 = vtanh.pop %v1611
  %v1676 = vrot.slane %v1436, 7
  %v1677 = vrot.slane %v1437, 7
  %v1678 = vrot.slane %v1438, 7
  %v1679 = vrot.slane %v1439, 7
  %v1680 = vrot.slane %v1440, 7
  %v1681 = vrot.slane %v1441, 7
  %v1682 = vrot.slane %v1442, 7
  %v1683 = vrot.slane %v1443, 7
  %v1692 = vmul.f32 %v1645, %v1676
  %v1693 = vmul.f32 %v1647, %v1677
  %v1694 = vmul.f32 %v1649, %v1678
  %v1695 = vmul.f32 %v1651, %v1679
  %v1696 = vmul.f32 %v1653, %v1680
  %v1697 = vmul.f32 %v1655, %v1681
  %v1698 = vmul.f32 %v1657, %v1682
  %v1699 = vmul.f32 %v1659, %v1683
  %1708 = vrot.lane.b32.xlu0 %v1660, 32
  %v1709 = vpop.permute.xlu0 %1708
  %1710 = vrot.lane.b32.xlu0 %v1661, 32
  %v1711 = vpop.permute.xlu0 %1710
  %1712 = vrot.lane.b32.xlu0 %v1662, 32
  %v1713 = vpop.permute.xlu0 %1712
  %1714 = vrot.lane.b32.xlu0 %v1663, 32
  %v1715 = vpop.permute.xlu0 %1714
  %1716 = vrot.lane.b32.xlu0 %v1664, 32
  %v1717 = vpop.permute.xlu0 %1716
  %1718 = vrot.lane.b32.xlu0 %v1665, 32
  %v1719 = vpop.permute.xlu0 %1718
  %1720 = vrot.lane.b32.xlu0 %v1666, 32
  %v1721 = vpop.permute.xlu0 %1720
  %1722 = vrot.lane.b32.xlu0 %v1667, 32
  %v1723 = vpop.permute.xlu0 %1722
  %v1732 = vmul.f32 %v1645, %v1709
  %v1733 = vmul.f32 %v1647, %v1711
  %v1734 = vmul.f32 %v1649, %v1713
  %v1735 = vmul.f32 %v1651, %v1715
  %v1736 = vmul.f32 %v1653, %v1717
  %v1737 = vmul.f32 %v1655, %v1719
  %v1738 = vmul.f32 %v1657, %v1721
  %v1739 = vmul.f32 %v1659, %v1723
  %1748 = vrot.lane.b32.xlu0 %v1732, 32
  %v1749 = vpop.permute.xlu0 %1748
  %1750 = vrot.lane.b32.xlu0 %v1733, 32
  %v1751 = vpop.permute.xlu0 %1750
  %1752 = vrot.lane.b32.xlu0 %v1734, 32
  %v1753 = vpop.permute.xlu0 %1752
  %1754 = vrot.lane.b32.xlu0 %v1735, 32
  %v1755 = vpop.permute.xlu0 %1754
  %1756 = vrot.lane.b32.xlu0 %v1736, 32
  %v1757 = vpop.permute.xlu0 %1756
  %1758 = vrot.lane.b32.xlu0 %v1737, 32
  %v1759 = vpop.permute.xlu0 %1758
  %1760 = vrot.lane.b32.xlu0 %v1738, 32
  %v1761 = vpop.permute.xlu0 %1760
  %1762 = vrot.lane.b32.xlu0 %v1739, 32
  %v1763 = vpop.permute.xlu0 %1762
  %v1772 = vadd.f32 %v1692, %v1749
  %v1773 = vadd.f32 %v1693, %v1751
  %v1774 = vadd.f32 %v1694, %v1753
  %v1775 = vadd.f32 %v1695, %v1755
  %v1776 = vadd.f32 %v1696, %v1757
  %v1777 = vadd.f32 %v1697, %v1759
  %v1778 = vadd.f32 %v1698, %v1761
  %v1779 = vadd.f32 %v1699, %v1763
  %v1780 = vtanh.pop %v1772
  %v1781 = vtanh.pop %v1773
  %v1782 = vtanh.pop %v1774
  %v1783 = vtanh.pop %v1775
  %v1784 = vtanh.pop %v1776
  %v1785 = vtanh.pop %v1777
  %v1786 = vtanh.pop %v1778
  %v1787 = vtanh.pop %v1779
  %1796 = vrot.lane.b32.xlu0 %v1780, 32
  %v1797 = vpop.permute.xlu0 %1796
  %1798 = vrot.lane.b32.xlu0 %v1781, 32
  %v1799 = vpop.permute.xlu0 %1798
  %1800 = vrot.lane.b32.xlu0 %v1782, 32
  %v1801 = vpop.permute.xlu0 %1800
  %1802 = vrot.lane.b32.xlu0 %v1783, 32
  %v1803 = vpop.permute.xlu0 %1802
  %1804 = vrot.lane.b32.xlu0 %v1784, 32
  %v1805 = vpop.permute.xlu0 %1804
  %1806 = vrot.lane.b32.xlu0 %v1785, 32
  %v1807 = vpop.permute.xlu0 %1806
  %1808 = vrot.lane.b32.xlu0 %v1786, 32
  %v1809 = vpop.permute.xlu0 %1808
  %1810 = vrot.lane.b32.xlu0 %v1787, 32
  %v1811 = vpop.permute.xlu0 %1810
  %v1820 = vmul.f32 %v1645, %v1797
  %v1821 = vmul.f32 %v1647, %v1799
  %v1822 = vmul.f32 %v1649, %v1801
  %v1823 = vmul.f32 %v1651, %v1803
  %v1824 = vmul.f32 %v1653, %v1805
  %v1825 = vmul.f32 %v1655, %v1807
  %v1826 = vmul.f32 %v1657, %v1809
  %v1827 = vmul.f32 %v1659, %v1811
  %v1836 = vrot.slane %v1820, 4
  %v1837 = vrot.slane %v1821, 3
  %v1838 = vsel %vm486, %v1837, %v1836
  %v1839 = vrot.slane %v1822, 2
  %v1840 = vsel %vm489, %v1839, %v1838
  %v1841 = vrot.slane %v1823, 1
  %v1842 = vsel %vm492, %v1841, %v1840
  %v1843 = vsel %vm495, %v1824, %v1842
  %v1844 = vrot.slane %v1825, 7
  %v1845 = vsel %vm498, %v1844, %v1843
  %v1846 = vrot.slane %v1826, 6
  %v1847 = vsel %vm501, %v1846, %v1845
  %v1848 = vrot.slane %v1827, 5
  %v1849 = vsel %vm504, %v1848, %v1847
  %1850 = vrot.lane.b32.xlu0 %v1849, 64
  %v1851 = vpop.permute.xlu0 %1850
  %v1852 = vsel %vm187, %v1851, 0
  %1854 = vmatprep.subr.mxu0 0.0
  %1855 = vmatpush1.msra.mxu0 0.0
  %1856 = vmatprep.subr.mxu0 0.0
  %1857 = vmatpush1.msra.mxu0 0.0
  %1858 = vmatprep.subr.mxu0 0.0
  %1859 = vmatpush1.msra.mxu0 0.0
  %1860 = vmatprep.subr.mxu0 0.0
  %1861 = vmatpush1.msra.mxu0 0.0
  %1862 = vmatprep.subr.mxu0 0.0
  %1863 = vmatpush1.msra.mxu0 0.0
  %1864 = vmatprep.subr.mxu0 0.0
  %1865 = vmatpush1.msra.mxu0 0.0
  %1866 = vmatprep.subr.mxu0 0.0
  %1867 = vmatpush1.msra.mxu0 0.0
  %1868 = vmatprep.subr.mxu0 0.0
  %1869 = vmatpush1.msra.mxu0 0.0
  %1870 = vmatprep.subr.mxu0 0.0
  %1871 = vmatpush1.msra.mxu0 0.0
  %1872 = vmatprep.subr.mxu0 0.0
  %1873 = vmatpush1.msra.mxu0 0.0
  %1874 = vmatprep.subr.mxu0 0.0
  %1875 = vmatpush1.msra.mxu0 0.0
  %1876 = vmatprep.subr.mxu0 0.0
  %1877 = vmatpush1.msra.mxu0 0.0
  %1878 = vmatprep.subr.mxu0 0.0
  %1879 = vmatpush1.msra.mxu0 %v186
  %1880 = vmatprep.subr.mxu0 0.0
  %1881 = vmatpush1.msra.mxu0 %v185
  %1882 = vmatprep.subr.mxu0 0.0
  %1883 = vmatpush1.msra.mxu0 %v184
  %1884 = vmatprep.subr.mxu0 0.0
  %1885 = vmatpush1.msra.mxu0 %v183
  %1886 = vmatprep.subr.mxu0 0.0
  %1887 = vmatpush2.msra.mxu0 0.0
  %1888 = vmatprep.subr.mxu0 0.0
  %1889 = vmatpush2.msra.mxu0 0.0
  %1890 = vmatprep.subr.mxu0 0.0
  %1891 = vmatpush2.msra.mxu0 0.0
  %1892 = vmatprep.subr.mxu0 0.0
  %1893 = vmatpush2.msra.mxu0 0.0
  %1894 = vmatprep.subr.mxu0 0.0
  %1895 = vmatpush2.msra.mxu0 0.0
  %1896 = vmatprep.subr.mxu0 0.0
  %1897 = vmatpush2.msra.mxu0 0.0
  %1898 = vmatprep.subr.mxu0 0.0
  %1899 = vmatpush2.msra.mxu0 0.0
  %1900 = vmatprep.subr.mxu0 0.0
  %1901 = vmatpush2.msra.mxu0 0.0
  %1902 = vmatprep.subr.mxu0 0.0
  %1903 = vmatpush2.msra.mxu0 0.0
  %1904 = vmatprep.subr.mxu0 0.0
  %1905 = vmatpush2.msra.mxu0 0.0
  %1906 = vmatprep.subr.mxu0 0.0
  %1907 = vmatpush2.msra.mxu0 0.0
  %1908 = vmatprep.subr.mxu0 0.0
  %1909 = vmatpush2.msra.mxu0 0.0
  %1910 = vmatprep.subr.mxu0 0.0
  %1911 = vmatpush2.msra.mxu0 0.0
  %1912 = vmatprep.subr.mxu0 0.0
  %1913 = vmatpush2.msra.mxu0 0.0
  %1914 = vmatprep.subr.mxu0 0.0
  %1915 = vmatpush2.msra.mxu0 0.0
  %1916 = vmatprep.subr.mxu0 0.0
  %1917 = vmatpush2.msra.mxu0 0.0
  %1918 = vmatprep.mubr.f32.mxu0 0.0
  %1919 = vmatmul.mubr.f32.gmra.mxu0 %v1852
  %v1920 = vpop.f32.mrf.mxu0
  %v1921 = vadd.f32 0.0, %v1920
  %v1922 = vpop.f32.mrf.mxu0
  %1923 = vdwg.mxu0
  %v1925 = vrot.slane %v1921, 3
  %v1926 = vrot.slane %v1921, 4
  %v1927 = vrot.slane %v1921, 5
  %v1928 = vrot.slane %v1921, 6
  %v1929 = vrot.slane %v1921, 7
  %v1930 = vrot.slane %v1921, 1
  %v1931 = vrot.slane %v1921, 2
  %v1940 = vadd.f32 %v175, %v1925
  %v1941 = vadd.f32 %v176, %v1926
  %v1942 = vadd.f32 %v177, %v1927
  %v1943 = vadd.f32 %v178, %v1928
  %v1944 = vadd.f32 %v179, %v1929
  %v1945 = vadd.f32 %v180, %v1921
  %v1946 = vadd.f32 %v181, %v1930
  %v1947 = vadd.f32 %v182, %v1931
  %v1948 = vxor.u32 %v1940, 2147483648
  %v1949 = vxor.u32 %v1941, 2147483648
  %v1950 = vxor.u32 %v1942, 2147483648
  %v1951 = vxor.u32 %v1943, 2147483648
  %v1952 = vxor.u32 %v1944, 2147483648
  %v1953 = vxor.u32 %v1945, 2147483648
  %v1954 = vxor.u32 %v1946, 2147483648
  %v1955 = vxor.u32 %v1947, 2147483648
  %v1956 = vmul.f32 %v1948, 1.442695
  %v1957 = vpow.pop %v1956
  %v1958 = vmul.f32 %v1949, 1.442695
  %v1959 = vpow.pop %v1958
  %v1960 = vmul.f32 %v1950, 1.442695
  %v1961 = vpow.pop %v1960
  %v1962 = vmul.f32 %v1951, 1.442695
  %v1963 = vpow.pop %v1962
  %v1964 = vmul.f32 %v1952, 1.442695
  %v1965 = vpow.pop %v1964
  %v1966 = vmul.f32 %v1953, 1.442695
  %v1967 = vpow.pop %v1966
  %v1968 = vmul.f32 %v1954, 1.442695
  %v1969 = vpow.pop %v1968
  %v1970 = vmul.f32 %v1955, 1.442695
  %v1971 = vpow.pop %v1970
  %v1972 = vadd.f32 %v1957, 1.0
  %v1973 = vadd.f32 %v1959, 1.0
  %v1974 = vadd.f32 %v1961, 1.0
  %v1975 = vadd.f32 %v1963, 1.0
  %v1976 = vadd.f32 %v1965, 1.0
  %v1977 = vadd.f32 %v1967, 1.0
  %v1978 = vadd.f32 %v1969, 1.0
  %v1979 = vadd.f32 %v1971, 1.0
  %v1980 = vrcp.pop %v1972
  %v1981 = vmul.f32 1.0, %v1980
  %v1982 = vrcp.pop %v1973
  %v1983 = vmul.f32 1.0, %v1982
  %v1984 = vrcp.pop %v1974
  %v1985 = vmul.f32 1.0, %v1984
  %v1986 = vrcp.pop %v1975
  %v1987 = vmul.f32 1.0, %v1986
  %v1988 = vrcp.pop %v1976
  %v1989 = vmul.f32 1.0, %v1988
  %v1990 = vrcp.pop %v1977
  %v1991 = vmul.f32 1.0, %v1990
  %v1992 = vrcp.pop %v1978
  %v1993 = vmul.f32 1.0, %v1992
  %v1994 = vrcp.pop %v1979
  %v1995 = vmul.f32 1.0, %v1994
  %v1996 = vtanh.pop %v1940
  %v1997 = vtanh.pop %v1941
  %v1998 = vtanh.pop %v1942
  %v1999 = vtanh.pop %v1943
  %v2000 = vtanh.pop %v1944
  %v2001 = vtanh.pop %v1945
  %v2002 = vtanh.pop %v1946
  %v2003 = vtanh.pop %v1947
  %v2012 = vrot.slane %v1772, 7
  %v2013 = vrot.slane %v1773, 7
  %v2014 = vrot.slane %v1774, 7
  %v2015 = vrot.slane %v1775, 7
  %v2016 = vrot.slane %v1776, 7
  %v2017 = vrot.slane %v1777, 7
  %v2018 = vrot.slane %v1778, 7
  %v2019 = vrot.slane %v1779, 7
  %v2028 = vmul.f32 %v1981, %v2012
  %v2029 = vmul.f32 %v1983, %v2013
  %v2030 = vmul.f32 %v1985, %v2014
  %v2031 = vmul.f32 %v1987, %v2015
  %v2032 = vmul.f32 %v1989, %v2016
  %v2033 = vmul.f32 %v1991, %v2017
  %v2034 = vmul.f32 %v1993, %v2018
  %v2035 = vmul.f32 %v1995, %v2019
  %2044 = vrot.lane.b32.xlu0 %v1996, 32
  %v2045 = vpop.permute.xlu0 %2044
  %2046 = vrot.lane.b32.xlu0 %v1997, 32
  %v2047 = vpop.permute.xlu0 %2046
  %2048 = vrot.lane.b32.xlu0 %v1998, 32
  %v2049 = vpop.permute.xlu0 %2048
  %2050 = vrot.lane.b32.xlu0 %v1999, 32
  %v2051 = vpop.permute.xlu0 %2050
  %2052 = vrot.lane.b32.xlu0 %v2000, 32
  %v2053 = vpop.permute.xlu0 %2052
  %2054 = vrot.lane.b32.xlu0 %v2001, 32
  %v2055 = vpop.permute.xlu0 %2054
  %2056 = vrot.lane.b32.xlu0 %v2002, 32
  %v2057 = vpop.permute.xlu0 %2056
  %2058 = vrot.lane.b32.xlu0 %v2003, 32
  %v2059 = vpop.permute.xlu0 %2058
  %v2068 = vmul.f32 %v1981, %v2045
  %v2069 = vmul.f32 %v1983, %v2047
  %v2070 = vmul.f32 %v1985, %v2049
  %v2071 = vmul.f32 %v1987, %v2051
  %v2072 = vmul.f32 %v1989, %v2053
  %v2073 = vmul.f32 %v1991, %v2055
  %v2074 = vmul.f32 %v1993, %v2057
  %v2075 = vmul.f32 %v1995, %v2059
  %2084 = vrot.lane.b32.xlu0 %v2068, 32
  %v2085 = vpop.permute.xlu0 %2084
  %2086 = vrot.lane.b32.xlu0 %v2069, 32
  %v2087 = vpop.permute.xlu0 %2086
  %2088 = vrot.lane.b32.xlu0 %v2070, 32
  %v2089 = vpop.permute.xlu0 %2088
  %2090 = vrot.lane.b32.xlu0 %v2071, 32
  %v2091 = vpop.permute.xlu0 %2090
  %2092 = vrot.lane.b32.xlu0 %v2072, 32
  %v2093 = vpop.permute.xlu0 %2092
  %2094 = vrot.lane.b32.xlu0 %v2073, 32
  %v2095 = vpop.permute.xlu0 %2094
  %2096 = vrot.lane.b32.xlu0 %v2074, 32
  %v2097 = vpop.permute.xlu0 %2096
  %2098 = vrot.lane.b32.xlu0 %v2075, 32
  %v2099 = vpop.permute.xlu0 %2098
  %v2108 = vadd.f32 %v2028, %v2085
  %v2109 = vadd.f32 %v2029, %v2087
  %v2110 = vadd.f32 %v2030, %v2089
  %v2111 = vadd.f32 %v2031, %v2091
  %v2112 = vadd.f32 %v2032, %v2093
  %v2113 = vadd.f32 %v2033, %v2095
  %v2114 = vadd.f32 %v2034, %v2097
  %v2115 = vadd.f32 %v2035, %v2099
  %v2116 = vtanh.pop %v2108
  %v2117 = vtanh.pop %v2109
  %v2118 = vtanh.pop %v2110
  %v2119 = vtanh.pop %v2111
  %v2120 = vtanh.pop %v2112
  %v2121 = vtanh.pop %v2113
  %v2122 = vtanh.pop %v2114
  %v2123 = vtanh.pop %v2115
  %2132 = vrot.lane.b32.xlu0 %v2116, 32
  %v2133 = vpop.permute.xlu0 %2132
  %2134 = vrot.lane.b32.xlu0 %v2117, 32
  %v2135 = vpop.permute.xlu0 %2134
  %2136 = vrot.lane.b32.xlu0 %v2118, 32
  %v2137 = vpop.permute.xlu0 %2136
  %2138 = vrot.lane.b32.xlu0 %v2119, 32
  %v2139 = vpop.permute.xlu0 %2138
  %2140 = vrot.lane.b32.xlu0 %v2120, 32
  %v2141 = vpop.permute.xlu0 %2140
  %2142 = vrot.lane.b32.xlu0 %v2121, 32
  %v2143 = vpop.permute.xlu0 %2142
  %2144 = vrot.lane.b32.xlu0 %v2122, 32
  %v2145 = vpop.permute.xlu0 %2144
  %2146 = vrot.lane.b32.xlu0 %v2123, 32
  %v2147 = vpop.permute.xlu0 %2146
  %v2156 = vmul.f32 %v1981, %v2133
  %v2157 = vmul.f32 %v1983, %v2135
  %v2158 = vmul.f32 %v1985, %v2137
  %v2159 = vmul.f32 %v1987, %v2139
  %v2160 = vmul.f32 %v1989, %v2141
  %v2161 = vmul.f32 %v1991, %v2143
  %v2162 = vmul.f32 %v1993, %v2145
  %v2163 = vmul.f32 %v1995, %v2147
  %v2172 = vrot.slane %v2156, 5
  %v2173 = vrot.slane %v2157, 4
  %v2174 = vsel %vm486, %v2173, %v2172
  %v2175 = vrot.slane %v2158, 3
  %v2176 = vsel %vm489, %v2175, %v2174
  %v2177 = vrot.slane %v2159, 2
  %v2178 = vsel %vm492, %v2177, %v2176
  %v2179 = vrot.slane %v2160, 1
  %v2180 = vsel %vm495, %v2179, %v2178
  %v2181 = vsel %vm498, %v2161, %v2180
  %v2182 = vrot.slane %v2162, 7
  %v2183 = vsel %vm501, %v2182, %v2181
  %v2184 = vrot.slane %v2163, 6
  %v2185 = vsel %vm504, %v2184, %v2183
  %2186 = vrot.lane.b32.xlu0 %v2185, 64
  %v2187 = vpop.permute.xlu0 %2186
  %v2188 = vsel %vm187, %v2187, 0
  %2190 = vmatprep.subr.mxu0 0.0
  %2191 = vmatpush1.msra.mxu0 0.0
  %2192 = vmatprep.subr.mxu0 0.0
  %2193 = vmatpush1.msra.mxu0 0.0
  %2194 = vmatprep.subr.mxu0 0.0
  %2195 = vmatpush1.msra.mxu0 0.0
  %2196 = vmatprep.subr.mxu0 0.0
  %2197 = vmatpush1.msra.mxu0 0.0
  %2198 = vmatprep.subr.mxu0 0.0
  %2199 = vmatpush1.msra.mxu0 0.0
  %2200 = vmatprep.subr.mxu0 0.0
  %2201 = vmatpush1.msra.mxu0 0.0
  %2202 = vmatprep.subr.mxu0 0.0
  %2203 = vmatpush1.msra.mxu0 0.0
  %2204 = vmatprep.subr.mxu0 0.0
  %2205 = vmatpush1.msra.mxu0 0.0
  %2206 = vmatprep.subr.mxu0 0.0
  %2207 = vmatpush1.msra.mxu0 0.0
  %2208 = vmatprep.subr.mxu0 0.0
  %2209 = vmatpush1.msra.mxu0 0.0
  %2210 = vmatprep.subr.mxu0 0.0
  %2211 = vmatpush1.msra.mxu0 0.0
  %2212 = vmatprep.subr.mxu0 0.0
  %2213 = vmatpush1.msra.mxu0 0.0
  %2214 = vmatprep.subr.mxu0 0.0
  %2215 = vmatpush1.msra.mxu0 %v186
  %2216 = vmatprep.subr.mxu0 0.0
  %2217 = vmatpush1.msra.mxu0 %v185
  %2218 = vmatprep.subr.mxu0 0.0
  %2219 = vmatpush1.msra.mxu0 %v184
  %2220 = vmatprep.subr.mxu0 0.0
  %2221 = vmatpush1.msra.mxu0 %v183
  %2222 = vmatprep.subr.mxu0 0.0
  %2223 = vmatpush2.msra.mxu0 0.0
  %2224 = vmatprep.subr.mxu0 0.0
  %2225 = vmatpush2.msra.mxu0 0.0
  %2226 = vmatprep.subr.mxu0 0.0
  %2227 = vmatpush2.msra.mxu0 0.0
  %2228 = vmatprep.subr.mxu0 0.0
  %2229 = vmatpush2.msra.mxu0 0.0
  %2230 = vmatprep.subr.mxu0 0.0
  %2231 = vmatpush2.msra.mxu0 0.0
  %2232 = vmatprep.subr.mxu0 0.0
  %2233 = vmatpush2.msra.mxu0 0.0
  %2234 = vmatprep.subr.mxu0 0.0
  %2235 = vmatpush2.msra.mxu0 0.0
  %2236 = vmatprep.subr.mxu0 0.0
  %2237 = vmatpush2.msra.mxu0 0.0
  %2238 = vmatprep.subr.mxu0 0.0
  %2239 = vmatpush2.msra.mxu0 0.0
  %2240 = vmatprep.subr.mxu0 0.0
  %2241 = vmatpush2.msra.mxu0 0.0
  %2242 = vmatprep.subr.mxu0 0.0
  %2243 = vmatpush2.msra.mxu0 0.0
  %2244 = vmatprep.subr.mxu0 0.0
  %2245 = vmatpush2.msra.mxu0 0.0
  %2246 = vmatprep.subr.mxu0 0.0
  %2247 = vmatpush2.msra.mxu0 0.0
  %2248 = vmatprep.subr.mxu0 0.0
  %2249 = vmatpush2.msra.mxu0 0.0
  %2250 = vmatprep.subr.mxu0 0.0
  %2251 = vmatpush2.msra.mxu0 0.0
  %2252 = vmatprep.subr.mxu0 0.0
  %2253 = vmatpush2.msra.mxu0 0.0
  %2254 = vmatprep.mubr.f32.mxu0 0.0
  %2255 = vmatmul.mubr.f32.gmra.mxu0 %v2188
  %v2256 = vpop.f32.mrf.mxu0
  %v2257 = vadd.f32 0.0, %v2256
  %v2258 = vpop.f32.mrf.mxu0
  %2259 = vdwg.mxu0
  %v2261 = vrot.slane %v2257, 2
  %v2262 = vrot.slane %v2257, 3
  %v2263 = vrot.slane %v2257, 4
  %v2264 = vrot.slane %v2257, 5
  %v2265 = vrot.slane %v2257, 6
  %v2266 = vrot.slane %v2257, 7
  %v2267 = vrot.slane %v2257, 1
  %v2276 = vadd.f32 %v175, %v2261
  %v2277 = vadd.f32 %v176, %v2262
  %v2278 = vadd.f32 %v177, %v2263
  %v2279 = vadd.f32 %v178, %v2264
  %v2280 = vadd.f32 %v179, %v2265
  %v2281 = vadd.f32 %v180, %v2266
  %v2282 = vadd.f32 %v181, %v2257
  %v2283 = vadd.f32 %v182, %v2267
  %v2284 = vxor.u32 %v2276, 2147483648
  %v2285 = vxor.u32 %v2277, 2147483648
  %v2286 = vxor.u32 %v2278, 2147483648
  %v2287 = vxor.u32 %v2279, 2147483648
  %v2288 = vxor.u32 %v2280, 2147483648
  %v2289 = vxor.u32 %v2281, 2147483648
  %v2290 = vxor.u32 %v2282, 2147483648
  %v2291 = vxor.u32 %v2283, 2147483648
  %v2292 = vmul.f32 %v2284, 1.442695
  %v2293 = vpow.pop %v2292
  %v2294 = vmul.f32 %v2285, 1.442695
  %v2295 = vpow.pop %v2294
  %v2296 = vmul.f32 %v2286, 1.442695
  %v2297 = vpow.pop %v2296
  %v2298 = vmul.f32 %v2287, 1.442695
  %v2299 = vpow.pop %v2298
  %v2300 = vmul.f32 %v2288, 1.442695
  %v2301 = vpow.pop %v2300
  %v2302 = vmul.f32 %v2289, 1.442695
  %v2303 = vpow.pop %v2302
  %v2304 = vmul.f32 %v2290, 1.442695
  %v2305 = vpow.pop %v2304
  %v2306 = vmul.f32 %v2291, 1.442695
  %v2307 = vpow.pop %v2306
  %v2308 = vadd.f32 %v2293, 1.0
  %v2309 = vadd.f32 %v2295, 1.0
  %v2310 = vadd.f32 %v2297, 1.0
  %v2311 = vadd.f32 %v2299, 1.0
  %v2312 = vadd.f32 %v2301, 1.0
  %v2313 = vadd.f32 %v2303, 1.0
  %v2314 = vadd.f32 %v2305, 1.0
  %v2315 = vadd.f32 %v2307, 1.0
  %v2316 = vrcp.pop %v2308
  %v2317 = vmul.f32 1.0, %v2316
  %v2318 = vrcp.pop %v2309
  %v2319 = vmul.f32 1.0, %v2318
  %v2320 = vrcp.pop %v2310
  %v2321 = vmul.f32 1.0, %v2320
  %v2322 = vrcp.pop %v2311
  %v2323 = vmul.f32 1.0, %v2322
  %v2324 = vrcp.pop %v2312
  %v2325 = vmul.f32 1.0, %v2324
  %v2326 = vrcp.pop %v2313
  %v2327 = vmul.f32 1.0, %v2326
  %v2328 = vrcp.pop %v2314
  %v2329 = vmul.f32 1.0, %v2328
  %v2330 = vrcp.pop %v2315
  %v2331 = vmul.f32 1.0, %v2330
  %v2332 = vtanh.pop %v2276
  %v2333 = vtanh.pop %v2277
  %v2334 = vtanh.pop %v2278
  %v2335 = vtanh.pop %v2279
  %v2336 = vtanh.pop %v2280
  %v2337 = vtanh.pop %v2281
  %v2338 = vtanh.pop %v2282
  %v2339 = vtanh.pop %v2283
  %v2348 = vrot.slane %v2108, 7
  %v2349 = vrot.slane %v2109, 7
  %v2350 = vrot.slane %v2110, 7
  %v2351 = vrot.slane %v2111, 7
  %v2352 = vrot.slane %v2112, 7
  %v2353 = vrot.slane %v2113, 7
  %v2354 = vrot.slane %v2114, 7
  %v2355 = vrot.slane %v2115, 7
  %v2364 = vmul.f32 %v2317, %v2348
  %v2365 = vmul.f32 %v2319, %v2349
  %v2366 = vmul.f32 %v2321, %v2350
  %v2367 = vmul.f32 %v2323, %v2351
  %v2368 = vmul.f32 %v2325, %v2352
  %v2369 = vmul.f32 %v2327, %v2353
  %v2370 = vmul.f32 %v2329, %v2354
  %v2371 = vmul.f32 %v2331, %v2355
  %2380 = vrot.lane.b32.xlu0 %v2332, 32
  %v2381 = vpop.permute.xlu0 %2380
  %2382 = vrot.lane.b32.xlu0 %v2333, 32
  %v2383 = vpop.permute.xlu0 %2382
  %2384 = vrot.lane.b32.xlu0 %v2334, 32
  %v2385 = vpop.permute.xlu0 %2384
  %2386 = vrot.lane.b32.xlu0 %v2335, 32
  %v2387 = vpop.permute.xlu0 %2386
  %2388 = vrot.lane.b32.xlu0 %v2336, 32
  %v2389 = vpop.permute.xlu0 %2388
  %2390 = vrot.lane.b32.xlu0 %v2337, 32
  %v2391 = vpop.permute.xlu0 %2390
  %2392 = vrot.lane.b32.xlu0 %v2338, 32
  %v2393 = vpop.permute.xlu0 %2392
  %2394 = vrot.lane.b32.xlu0 %v2339, 32
  %v2395 = vpop.permute.xlu0 %2394
  %v2404 = vmul.f32 %v2317, %v2381
  %v2405 = vmul.f32 %v2319, %v2383
  %v2406 = vmul.f32 %v2321, %v2385
  %v2407 = vmul.f32 %v2323, %v2387
  %v2408 = vmul.f32 %v2325, %v2389
  %v2409 = vmul.f32 %v2327, %v2391
  %v2410 = vmul.f32 %v2329, %v2393
  %v2411 = vmul.f32 %v2331, %v2395
  %2420 = vrot.lane.b32.xlu0 %v2404, 32
  %v2421 = vpop.permute.xlu0 %2420
  %2422 = vrot.lane.b32.xlu0 %v2405, 32
  %v2423 = vpop.permute.xlu0 %2422
  %2424 = vrot.lane.b32.xlu0 %v2406, 32
  %v2425 = vpop.permute.xlu0 %2424
  %2426 = vrot.lane.b32.xlu0 %v2407, 32
  %v2427 = vpop.permute.xlu0 %2426
  %2428 = vrot.lane.b32.xlu0 %v2408, 32
  %v2429 = vpop.permute.xlu0 %2428
  %2430 = vrot.lane.b32.xlu0 %v2409, 32
  %v2431 = vpop.permute.xlu0 %2430
  %2432 = vrot.lane.b32.xlu0 %v2410, 32
  %v2433 = vpop.permute.xlu0 %2432
  %2434 = vrot.lane.b32.xlu0 %v2411, 32
  %v2435 = vpop.permute.xlu0 %2434
  %v2444 = vadd.f32 %v2364, %v2421
  %v2445 = vadd.f32 %v2365, %v2423
  %v2446 = vadd.f32 %v2366, %v2425
  %v2447 = vadd.f32 %v2367, %v2427
  %v2448 = vadd.f32 %v2368, %v2429
  %v2449 = vadd.f32 %v2369, %v2431
  %v2450 = vadd.f32 %v2370, %v2433
  %v2451 = vadd.f32 %v2371, %v2435
  %v2452 = vtanh.pop %v2444
  %v2453 = vtanh.pop %v2445
  %v2454 = vtanh.pop %v2446
  %v2455 = vtanh.pop %v2447
  %v2456 = vtanh.pop %v2448
  %v2457 = vtanh.pop %v2449
  %v2458 = vtanh.pop %v2450
  %v2459 = vtanh.pop %v2451
  %2468 = vrot.lane.b32.xlu0 %v2452, 32
  %v2469 = vpop.permute.xlu0 %2468
  %2470 = vrot.lane.b32.xlu0 %v2453, 32
  %v2471 = vpop.permute.xlu0 %2470
  %2472 = vrot.lane.b32.xlu0 %v2454, 32
  %v2473 = vpop.permute.xlu0 %2472
  %2474 = vrot.lane.b32.xlu0 %v2455, 32
  %v2475 = vpop.permute.xlu0 %2474
  %2476 = vrot.lane.b32.xlu0 %v2456, 32
  %v2477 = vpop.permute.xlu0 %2476
  %2478 = vrot.lane.b32.xlu0 %v2457, 32
  %v2479 = vpop.permute.xlu0 %2478
  %2480 = vrot.lane.b32.xlu0 %v2458, 32
  %v2481 = vpop.permute.xlu0 %2480
  %2482 = vrot.lane.b32.xlu0 %v2459, 32
  %v2483 = vpop.permute.xlu0 %2482
  %v2492 = vmul.f32 %v2317, %v2469
  %v2493 = vmul.f32 %v2319, %v2471
  %v2494 = vmul.f32 %v2321, %v2473
  %v2495 = vmul.f32 %v2323, %v2475
  %v2496 = vmul.f32 %v2325, %v2477
  %v2497 = vmul.f32 %v2327, %v2479
  %v2498 = vmul.f32 %v2329, %v2481
  %v2499 = vmul.f32 %v2331, %v2483
  %v2508 = vrot.slane %v2492, 6
  %v2509 = vrot.slane %v2493, 5
  %v2510 = vsel %vm486, %v2509, %v2508
  %v2511 = vrot.slane %v2494, 4
  %v2512 = vsel %vm489, %v2511, %v2510
  %v2513 = vrot.slane %v2495, 3
  %v2514 = vsel %vm492, %v2513, %v2512
  %v2515 = vrot.slane %v2496, 2
  %v2516 = vsel %vm495, %v2515, %v2514
  %v2517 = vrot.slane %v2497, 1
  %v2518 = vsel %vm498, %v2517, %v2516
  %v2519 = vsel %vm501, %v2498, %v2518
  %v2520 = vrot.slane %v2499, 7
  %v2521 = vsel %vm504, %v2520, %v2519
  %2522 = vrot.lane.b32.xlu0 %v2521, 64
  %v2523 = vpop.permute.xlu0 %2522
  %v2524 = vsel %vm187, %v2523, 0
  %2526 = vmatprep.subr.mxu0 0.0
  %2527 = vmatpush1.msra.mxu0 0.0
  %2528 = vmatprep.subr.mxu0 0.0
  %2529 = vmatpush1.msra.mxu0 0.0
  %2530 = vmatprep.subr.mxu0 0.0
  %2531 = vmatpush1.msra.mxu0 0.0
  %2532 = vmatprep.subr.mxu0 0.0
  %2533 = vmatpush1.msra.mxu0 0.0
  %2534 = vmatprep.subr.mxu0 0.0
  %2535 = vmatpush1.msra.mxu0 0.0
  %2536 = vmatprep.subr.mxu0 0.0
  %2537 = vmatpush1.msra.mxu0 0.0
  %2538 = vmatprep.subr.mxu0 0.0
  %2539 = vmatpush1.msra.mxu0 0.0
  %2540 = vmatprep.subr.mxu0 0.0
  %2541 = vmatpush1.msra.mxu0 0.0
  %2542 = vmatprep.subr.mxu0 0.0
  %2543 = vmatpush1.msra.mxu0 0.0
  %2544 = vmatprep.subr.mxu0 0.0
  %2545 = vmatpush1.msra.mxu0 0.0
  %2546 = vmatprep.subr.mxu0 0.0
  %2547 = vmatpush1.msra.mxu0 0.0
  %2548 = vmatprep.subr.mxu0 0.0
  %2549 = vmatpush1.msra.mxu0 0.0
  %2550 = vmatprep.subr.mxu0 0.0
  %2551 = vmatpush1.msra.mxu0 %v186
  %2552 = vmatprep.subr.mxu0 0.0
  %2553 = vmatpush1.msra.mxu0 %v185
  %2554 = vmatprep.subr.mxu0 0.0
  %2555 = vmatpush1.msra.mxu0 %v184
  %2556 = vmatprep.subr.mxu0 0.0
  %2557 = vmatpush1.msra.mxu0 %v183
  %2558 = vmatprep.subr.mxu0 0.0
  %2559 = vmatpush2.msra.mxu0 0.0
  %2560 = vmatprep.subr.mxu0 0.0
  %2561 = vmatpush2.msra.mxu0 0.0
  %2562 = vmatprep.subr.mxu0 0.0
  %2563 = vmatpush2.msra.mxu0 0.0
  %2564 = vmatprep.subr.mxu0 0.0
  %2565 = vmatpush2.msra.mxu0 0.0
  %2566 = vmatprep.subr.mxu0 0.0
  %2567 = vmatpush2.msra.mxu0 0.0
  %2568 = vmatprep.subr.mxu0 0.0
  %2569 = vmatpush2.msra.mxu0 0.0
  %2570 = vmatprep.subr.mxu0 0.0
  %2571 = vmatpush2.msra.mxu0 0.0
  %2572 = vmatprep.subr.mxu0 0.0
  %2573 = vmatpush2.msra.mxu0 0.0
  %2574 = vmatprep.subr.mxu0 0.0
  %2575 = vmatpush2.msra.mxu0 0.0
  %2576 = vmatprep.subr.mxu0 0.0
  %2577 = vmatpush2.msra.mxu0 0.0
  %2578 = vmatprep.subr.mxu0 0.0
  %2579 = vmatpush2.msra.mxu0 0.0
  %2580 = vmatprep.subr.mxu0 0.0
  %2581 = vmatpush2.msra.mxu0 0.0
  %2582 = vmatprep.subr.mxu0 0.0
  %2583 = vmatpush2.msra.mxu0 0.0
  %2584 = vmatprep.subr.mxu0 0.0
  %2585 = vmatpush2.msra.mxu0 0.0
  %2586 = vmatprep.subr.mxu0 0.0
  %2587 = vmatpush2.msra.mxu0 0.0
  %2588 = vmatprep.subr.mxu0 0.0
  %2589 = vmatpush2.msra.mxu0 0.0
  %2590 = vmatprep.mubr.f32.mxu0 0.0
  %2591 = vmatmul.mubr.f32.gmra.mxu0 %v2524
  %v2592 = vpop.f32.mrf.mxu0
  %v2593 = vadd.f32 0.0, %v2592
  %v2594 = vpop.f32.mrf.mxu0
  %2595 = vdwg.mxu0
  %v2597 = vrot.slane %v2593, 1
  %v2598 = vrot.slane %v2593, 2
  %v2599 = vrot.slane %v2593, 3
  %v2600 = vrot.slane %v2593, 4
  %v2601 = vrot.slane %v2593, 5
  %v2602 = vrot.slane %v2593, 6
  %v2603 = vrot.slane %v2593, 7
  %v2612 = vadd.f32 %v175, %v2597
  %v2613 = vadd.f32 %v176, %v2598
  %v2614 = vadd.f32 %v177, %v2599
  %v2615 = vadd.f32 %v178, %v2600
  %v2616 = vadd.f32 %v179, %v2601
  %v2617 = vadd.f32 %v180, %v2602
  %v2618 = vadd.f32 %v181, %v2603
  %v2619 = vadd.f32 %v182, %v2593
  %v2620 = vxor.u32 %v2612, 2147483648
  %v2621 = vxor.u32 %v2613, 2147483648
  %v2622 = vxor.u32 %v2614, 2147483648
  %v2623 = vxor.u32 %v2615, 2147483648
  %v2624 = vxor.u32 %v2616, 2147483648
  %v2625 = vxor.u32 %v2617, 2147483648
  %v2626 = vxor.u32 %v2618, 2147483648
  %v2627 = vxor.u32 %v2619, 2147483648
  %v2628 = vmul.f32 %v2620, 1.442695
  %v2629 = vpow.pop %v2628
  %v2630 = vmul.f32 %v2621, 1.442695
  %v2631 = vpow.pop %v2630
  %v2632 = vmul.f32 %v2622, 1.442695
  %v2633 = vpow.pop %v2632
  %v2634 = vmul.f32 %v2623, 1.442695
  %v2635 = vpow.pop %v2634
  %v2636 = vmul.f32 %v2624, 1.442695
  %v2637 = vpow.pop %v2636
  %v2638 = vmul.f32 %v2625, 1.442695
  %v2639 = vpow.pop %v2638
  %v2640 = vmul.f32 %v2626, 1.442695
  %v2641 = vpow.pop %v2640
  %v2642 = vmul.f32 %v2627, 1.442695
  %v2643 = vpow.pop %v2642
  %v2644 = vadd.f32 %v2629, 1.0
  %v2645 = vadd.f32 %v2631, 1.0
  %v2646 = vadd.f32 %v2633, 1.0
  %v2647 = vadd.f32 %v2635, 1.0
  %v2648 = vadd.f32 %v2637, 1.0
  %v2649 = vadd.f32 %v2639, 1.0
  %v2650 = vadd.f32 %v2641, 1.0
  %v2651 = vadd.f32 %v2643, 1.0
  %v2652 = vrcp.pop %v2644
  %v2653 = vmul.f32 1.0, %v2652
  %v2654 = vrcp.pop %v2645
  %v2655 = vmul.f32 1.0, %v2654
  %v2656 = vrcp.pop %v2646
  %v2657 = vmul.f32 1.0, %v2656
  %v2658 = vrcp.pop %v2647
  %v2659 = vmul.f32 1.0, %v2658
  %v2660 = vrcp.pop %v2648
  %v2661 = vmul.f32 1.0, %v2660
  %v2662 = vrcp.pop %v2649
  %v2663 = vmul.f32 1.0, %v2662
  %v2664 = vrcp.pop %v2650
  %v2665 = vmul.f32 1.0, %v2664
  %v2666 = vrcp.pop %v2651
  %v2667 = vmul.f32 1.0, %v2666
  %v2668 = vtanh.pop %v2612
  %v2669 = vtanh.pop %v2613
  %v2670 = vtanh.pop %v2614
  %v2671 = vtanh.pop %v2615
  %v2672 = vtanh.pop %v2616
  %v2673 = vtanh.pop %v2617
  %v2674 = vtanh.pop %v2618
  %v2675 = vtanh.pop %v2619
  %v2684 = vrot.slane %v2444, 7
  %v2685 = vrot.slane %v2445, 7
  %v2686 = vrot.slane %v2446, 7
  %v2687 = vrot.slane %v2447, 7
  %v2688 = vrot.slane %v2448, 7
  %v2689 = vrot.slane %v2449, 7
  %v2690 = vrot.slane %v2450, 7
  %v2691 = vrot.slane %v2451, 7
  %v2700 = vmul.f32 %v2653, %v2684
  %v2701 = vmul.f32 %v2655, %v2685
  %v2702 = vmul.f32 %v2657, %v2686
  %v2703 = vmul.f32 %v2659, %v2687
  %v2704 = vmul.f32 %v2661, %v2688
  %v2705 = vmul.f32 %v2663, %v2689
  %v2706 = vmul.f32 %v2665, %v2690
  %v2707 = vmul.f32 %v2667, %v2691
  %2716 = vrot.lane.b32.xlu0 %v2668, 32
  %v2717 = vpop.permute.xlu0 %2716
  %2718 = vrot.lane.b32.xlu0 %v2669, 32
  %v2719 = vpop.permute.xlu0 %2718
  %2720 = vrot.lane.b32.xlu0 %v2670, 32
  %v2721 = vpop.permute.xlu0 %2720
  %2722 = vrot.lane.b32.xlu0 %v2671, 32
  %v2723 = vpop.permute.xlu0 %2722
  %2724 = vrot.lane.b32.xlu0 %v2672, 32
  %v2725 = vpop.permute.xlu0 %2724
  %2726 = vrot.lane.b32.xlu0 %v2673, 32
  %v2727 = vpop.permute.xlu0 %2726
  %2728 = vrot.lane.b32.xlu0 %v2674, 32
  %v2729 = vpop.permute.xlu0 %2728
  %2730 = vrot.lane.b32.xlu0 %v2675, 32
  %v2731 = vpop.permute.xlu0 %2730
  %v2740 = vmul.f32 %v2653, %v2717
  %v2741 = vmul.f32 %v2655, %v2719
  %v2742 = vmul.f32 %v2657, %v2721
  %v2743 = vmul.f32 %v2659, %v2723
  %v2744 = vmul.f32 %v2661, %v2725
  %v2745 = vmul.f32 %v2663, %v2727
  %v2746 = vmul.f32 %v2665, %v2729
  %v2747 = vmul.f32 %v2667, %v2731
  %2756 = vrot.lane.b32.xlu0 %v2740, 32
  %v2757 = vpop.permute.xlu0 %2756
  %2758 = vrot.lane.b32.xlu0 %v2741, 32
  %v2759 = vpop.permute.xlu0 %2758
  %2760 = vrot.lane.b32.xlu0 %v2742, 32
  %v2761 = vpop.permute.xlu0 %2760
  %2762 = vrot.lane.b32.xlu0 %v2743, 32
  %v2763 = vpop.permute.xlu0 %2762
  %2764 = vrot.lane.b32.xlu0 %v2744, 32
  %v2765 = vpop.permute.xlu0 %2764
  %2766 = vrot.lane.b32.xlu0 %v2745, 32
  %v2767 = vpop.permute.xlu0 %2766
  %2768 = vrot.lane.b32.xlu0 %v2746, 32
  %v2769 = vpop.permute.xlu0 %2768
  %2770 = vrot.lane.b32.xlu0 %v2747, 32
  %v2771 = vpop.permute.xlu0 %2770
  %v2780 = vadd.f32 %v2700, %v2757
  %v2781 = vadd.f32 %v2701, %v2759
  %v2782 = vadd.f32 %v2702, %v2761
  %v2783 = vadd.f32 %v2703, %v2763
  %v2784 = vadd.f32 %v2704, %v2765
  %v2785 = vadd.f32 %v2705, %v2767
  %v2786 = vadd.f32 %v2706, %v2769
  %v2787 = vadd.f32 %v2707, %v2771
  %v2788 = vtanh.pop %v2780
  %v2789 = vtanh.pop %v2781
  %v2790 = vtanh.pop %v2782
  %v2791 = vtanh.pop %v2783
  %v2792 = vtanh.pop %v2784
  %v2793 = vtanh.pop %v2785
  %v2794 = vtanh.pop %v2786
  %v2795 = vtanh.pop %v2787
  %2804 = vrot.lane.b32.xlu0 %v2788, 32
  %v2805 = vpop.permute.xlu0 %2804
  %2806 = vrot.lane.b32.xlu0 %v2789, 32
  %v2807 = vpop.permute.xlu0 %2806
  %2808 = vrot.lane.b32.xlu0 %v2790, 32
  %v2809 = vpop.permute.xlu0 %2808
  %2810 = vrot.lane.b32.xlu0 %v2791, 32
  %v2811 = vpop.permute.xlu0 %2810
  %2812 = vrot.lane.b32.xlu0 %v2792, 32
  %v2813 = vpop.permute.xlu0 %2812
  %2814 = vrot.lane.b32.xlu0 %v2793, 32
  %v2815 = vpop.permute.xlu0 %2814
  %2816 = vrot.lane.b32.xlu0 %v2794, 32
  %v2817 = vpop.permute.xlu0 %2816
  %2818 = vrot.lane.b32.xlu0 %v2795, 32
  %v2819 = vpop.permute.xlu0 %2818
  %v2828 = vmul.f32 %v2653, %v2805
  %v2829 = vmul.f32 %v2655, %v2807
  %v2830 = vmul.f32 %v2657, %v2809
  %v2831 = vmul.f32 %v2659, %v2811
  %v2832 = vmul.f32 %v2661, %v2813
  %v2833 = vmul.f32 %v2663, %v2815
  %v2834 = vmul.f32 %v2665, %v2817
  %v2835 = vmul.f32 %v2667, %v2819
  %v2836 = vld [vmem:[%s1] sm:$0xf]
  %v2837 = vld [vmem:[%s1 + $0x4] sm:$0xf]
  %v2838 = vld [vmem:[%s1 + $0x8] sm:$0xf]
  %v2839 = vld [vmem:[%s1 + $0xc] sm:$0xf]
  %v2840 = vld [vmem:[%s1 + $0x10] sm:$0xf]
  %v2841 = vld [vmem:[%s1 + $0x14] sm:$0xf]
  %v2842 = vld [vmem:[%s1 + $0x18] sm:$0xf]
  %v2843 = vld [vmem:[%s1 + $0x1c] sm:$0xf]
  %v2844 = vld [vmem:[%s1 + $0x20] sm:$0xf]
  %v2845 = vld [vmem:[%s1 + $0x24] sm:$0xf]
  %v2846 = vld [vmem:[%s1 + $0x28] sm:$0xf]
  %v2847 = vld [vmem:[%s1 + $0x2c] sm:$0xf]
  %v2848 = vld [vmem:[%s1 + $0x30] sm:$0xf]
  %v2849 = vld [vmem:[%s1 + $0x34] sm:$0xf]
  %v2850 = vld [vmem:[%s1 + $0x38] sm:$0xf]
  %v2851 = vld [vmem:[%s1 + $0x3c] sm:$0xf]
  %v2852 = vld [vmem:[%s1 + $0x40] sm:$0xf]
  %v2853 = vld [vmem:[%s1 + $0x44] sm:$0xf]
  %v2854 = vld [vmem:[%s1 + $0x48] sm:$0xf]
  %v2855 = vld [vmem:[%s1 + $0x4c] sm:$0xf]
  %v2856 = vld [vmem:[%s1 + $0x50] sm:$0xf]
  %v2857 = vld [vmem:[%s1 + $0x54] sm:$0xf]
  %v2858 = vld [vmem:[%s1 + $0x58] sm:$0xf]
  %v2859 = vld [vmem:[%s1 + $0x5c] sm:$0xf]
  %v2860 = vld [vmem:[%s1 + $0x60] sm:$0xf]
  %v2861 = vld [vmem:[%s1 + $0x64] sm:$0xf]
  %v2862 = vld [vmem:[%s1 + $0x68] sm:$0xf]
  %v2863 = vld [vmem:[%s1 + $0x6c] sm:$0xf]
  %v2864 = vld [vmem:[%s1 + $0x70] sm:$0xf]
  %v2865 = vld [vmem:[%s1 + $0x74] sm:$0xf]
  %v2866 = vld [vmem:[%s1 + $0x78] sm:$0xf]
  %v2867 = vld [vmem:[%s1 + $0x7c] sm:$0xf]
  %v2868 = vld [vmem:[%s7] sm:$0xf]
  %v2869 = vld [vmem:[%s7 + $0x4] sm:$0xf]
  %v2902 = vunpack.c.l.b16 %v2836
  %v2903 = vunpack.c.l.b16 %v2837
  %v2904 = vunpack.c.l.b16 %v2838
  %v2905 = vunpack.c.l.b16 %v2839
  %v2906 = vunpack.c.l.b16 %v2840
  %v2907 = vunpack.c.l.b16 %v2841
  %v2908 = vunpack.c.l.b16 %v2842
  %v2909 = vunpack.c.l.b16 %v2843
  %v2910 = vunpack.c.l.b16 %v2844
  %v2911 = vunpack.c.l.b16 %v2845
  %v2912 = vunpack.c.l.b16 %v2846
  %v2913 = vunpack.c.l.b16 %v2847
  %v2914 = vunpack.c.l.b16 %v2848
  %v2915 = vunpack.c.l.b16 %v2849
  %v2916 = vunpack.c.l.b16 %v2850
  %v2917 = vunpack.c.l.b16 %v2851
  %v2918 = vunpack.c.l.b16 %v2852
  %v2919 = vunpack.c.l.b16 %v2853
  %v2920 = vunpack.c.l.b16 %v2854
  %v2921 = vunpack.c.l.b16 %v2855
  %v2922 = vunpack.c.l.b16 %v2856
  %v2923 = vunpack.c.l.b16 %v2857
  %v2924 = vunpack.c.l.b16 %v2858
  %v2925 = vunpack.c.l.b16 %v2859
  %v2926 = vunpack.c.l.b16 %v2860
  %v2927 = vunpack.c.l.b16 %v2861
  %v2928 = vunpack.c.l.b16 %v2862
  %v2929 = vunpack.c.l.b16 %v2863
  %v2930 = vunpack.c.l.b16 %v2864
  %v2931 = vunpack.c.l.b16 %v2865
  %v2932 = vunpack.c.l.b16 %v2866
  %v2933 = vunpack.c.l.b16 %v2867
  %v2934 = vpack.c.b16 %v2903, %v2902
  %v2935 = vpack.c.b16 %v2905, %v2904
  %v2936 = vpack.c.b16 %v2907, %v2906
  %v2937 = vpack.c.b16 %v2909, %v2908
  %v2938 = vpack.c.b16 %v2911, %v2910
  %v2939 = vpack.c.b16 %v2913, %v2912
  %v2940 = vpack.c.b16 %v2915, %v2914
  %v2941 = vpack.c.b16 %v2917, %v2916
  %v2942 = vpack.c.b16 %v2919, %v2918
  %v2943 = vpack.c.b16 %v2921, %v2920
  %v2944 = vpack.c.b16 %v2923, %v2922
  %v2945 = vpack.c.b16 %v2925, %v2924
  %v2946 = vpack.c.b16 %v2927, %v2926
  %v2947 = vpack.c.b16 %v2929, %v2928
  %v2948 = vpack.c.b16 %v2931, %v2930
  %v2949 = vpack.c.b16 %v2933, %v2932
  %v2952 = vunpack.c.l.b16 %v2868
  %v2953 = vunpack.c.l.b16 %v2869
  %v2954 = vpack.c.b16 %v2953, %v2952
  %v2957 = vsel %vm90, %v2934, 0
  %v2960 = vsel %vm90, %v2935, 0
  %v2963 = vsel %vm90, %v2936, 0
  %v2966 = vsel %vm90, %v2937, 0
  %v2969 = vsel %vm90, %v2938, 0
  %v2972 = vsel %vm90, %v2939, 0
  %v2975 = vsel %vm90, %v2940, 0
  %v2978 = vsel %vm90, %v2941, 0
  %v2981 = vsel %vm90, %v2942, 0
  %v2984 = vsel %vm90, %v2943, 0
  %v2987 = vsel %vm90, %v2944, 0
  %v2990 = vsel %vm90, %v2945, 0
  %v2993 = vsel %vm90, %v2946, 0
  %v2996 = vsel %vm90, %v2947, 0
  %v2999 = vsel %vm90, %v2948, 0
  %v3002 = vsel %vm90, %v2949, 0
  %3004 = vmatprep.subr.bf16.mxu0 0
  %3005 = vmatpush1.bf16.msra.mxu0 0
  %3006 = vmatprep.subr.bf16.mxu0 0
  %3007 = vmatpush1.bf16.msra.mxu0 0
  %3008 = vmatprep.subr.bf16.mxu0 0
  %3009 = vmatpush1.bf16.msra.mxu0 0
  %3010 = vmatprep.subr.bf16.mxu0 0
  %3011 = vmatpush1.bf16.msra.mxu0 0
  %3012 = vmatprep.subr.bf16.mxu0 0
  %3013 = vmatpush1.bf16.msra.mxu0 0
  %3014 = vmatprep.subr.bf16.mxu0 0
  %3015 = vmatpush1.bf16.msra.mxu0 0
  %3016 = vmatprep.subr.bf16.mxu0 0
  %3017 = vmatpush1.bf16.msra.mxu0 0
  %3018 = vmatprep.subr.bf16.mxu0 0
  %3019 = vmatpush1.bf16.msra.mxu0 %v2954
  %3020 = vmatprep.subr.bf16.mxu0 0
  %3021 = vmatpush2.bf16.msra.mxu0 0
  %3022 = vmatprep.subr.bf16.mxu0 0
  %3023 = vmatpush2.bf16.msra.mxu0 0
  %3024 = vmatprep.subr.bf16.mxu0 0
  %3025 = vmatpush2.bf16.msra.mxu0 0
  %3026 = vmatprep.subr.bf16.mxu0 0
  %3027 = vmatpush2.bf16.msra.mxu0 0
  %3028 = vmatprep.subr.bf16.mxu0 0
  %3029 = vmatpush2.bf16.msra.mxu0 0
  %3030 = vmatprep.subr.bf16.mxu0 0
  %3031 = vmatpush2.bf16.msra.mxu0 0
  %3032 = vmatprep.subr.bf16.mxu0 0
  %3033 = vmatpush2.bf16.msra.mxu0 0
  %3034 = vmatprep.subr.bf16.mxu0 0
  %3035 = vmatpush2.bf16.msra.mxu0 0
  %3036 = vmatprep.mubr.bf16.mxu0 0
  %3037 = vmatmul.mubr.bf16.gmra.mxu0 %v2957
  %v3038 = vpop.f32.mrf.mxu0
  %v3039 = vadd.f32 0.0, %v3038
  %v3040 = vpop.f32.mrf.mxu0
  %v3041 = vpop.f32.mrf.mxu0
  %v3042 = vadd.f32 0.0, %v3041
  %v3043 = vpop.f32.mrf.mxu0
  %3044 = vmatprep.mubr.bf16.mxu0 0
  %3045 = vmatmul.mubr.bf16.gmra.mxu0 %v2960
  %v3046 = vpop.f32.mrf.mxu0
  %v3047 = vadd.f32 0.0, %v3046
  %v3048 = vpop.f32.mrf.mxu0
  %v3049 = vpop.f32.mrf.mxu0
  %v3050 = vadd.f32 0.0, %v3049
  %v3051 = vpop.f32.mrf.mxu0
  %3052 = vmatprep.mubr.bf16.mxu0 0
  %3053 = vmatmul.mubr.bf16.gmra.mxu0 %v2963
  %v3054 = vpop.f32.mrf.mxu0
  %v3055 = vadd.f32 0.0, %v3054
  %v3056 = vpop.f32.mrf.mxu0
  %v3057 = vpop.f32.mrf.mxu0
  %v3058 = vadd.f32 0.0, %v3057
  %v3059 = vpop.f32.mrf.mxu0
  %3060 = vmatprep.mubr.bf16.mxu0 0
  %3061 = vmatmul.mubr.bf16.gmra.mxu0 %v2966
  %v3062 = vpop.f32.mrf.mxu0
  %v3063 = vadd.f32 0.0, %v3062
  %v3064 = vpop.f32.mrf.mxu0
  %v3065 = vpop.f32.mrf.mxu0
  %v3066 = vadd.f32 0.0, %v3065
  %v3067 = vpop.f32.mrf.mxu0
  %3068 = vmatprep.mubr.bf16.mxu0 0
  %3069 = vmatmul.mubr.bf16.gmra.mxu0 %v2969
  %v3070 = vpop.f32.mrf.mxu0
  %v3071 = vadd.f32 0.0, %v3070
  %v3072 = vpop.f32.mrf.mxu0
  %v3073 = vpop.f32.mrf.mxu0
  %v3074 = vadd.f32 0.0, %v3073
  %v3075 = vpop.f32.mrf.mxu0
  %3076 = vmatprep.mubr.bf16.mxu0 0
  %3077 = vmatmul.mubr.bf16.gmra.mxu0 %v2972
  %v3078 = vpop.f32.mrf.mxu0
  %v3079 = vadd.f32 0.0, %v3078
  %v3080 = vpop.f32.mrf.mxu0
  %v3081 = vpop.f32.mrf.mxu0
  %v3082 = vadd.f32 0.0, %v3081
  %v3083 = vpop.f32.mrf.mxu0
  %3084 = vmatprep.mubr.bf16.mxu0 0
  %3085 = vmatmul.mubr.bf16.gmra.mxu0 %v2975
  %v3086 = vpop.f32.mrf.mxu0
  %v3087 = vadd.f32 0.0, %v3086
  %v3088 = vpop.f32.mrf.mxu0
  %v3089 = vpop.f32.mrf.mxu0
  %v3090 = vadd.f32 0.0, %v3089
  %v3091 = vpop.f32.mrf.mxu0
  %3092 = vmatprep.mubr.bf16.mxu0 0
  %3093 = vmatmul.mubr.bf16.gmra.mxu0 %v2978
  %v3094 = vpop.f32.mrf.mxu0
  %v3095 = vadd.f32 0.0, %v3094
  %v3096 = vpop.f32.mrf.mxu0
  %v3097 = vpop.f32.mrf.mxu0
  %v3098 = vadd.f32 0.0, %v3097
  %v3099 = vpop.f32.mrf.mxu0
  %3100 = vmatprep.mubr.bf16.mxu0 0
  %3101 = vmatmul.mubr.bf16.gmra.mxu0 %v2981
  %v3102 = vpop.f32.mrf.mxu0
  %v3103 = vadd.f32 0.0, %v3102
  %v3104 = vpop.f32.mrf.mxu0
  %v3105 = vpop.f32.mrf.mxu0
  %v3106 = vadd.f32 0.0, %v3105
  %v3107 = vpop.f32.mrf.mxu0
  %3108 = vmatprep.mubr.bf16.mxu0 0
  %3109 = vmatmul.mubr.bf16.gmra.mxu0 %v2984
  %v3110 = vpop.f32.mrf.mxu0
  %v3111 = vadd.f32 0.0, %v3110
  %v3112 = vpop.f32.mrf.mxu0
  %v3113 = vpop.f32.mrf.mxu0
  %v3114 = vadd.f32 0.0, %v3113
  %v3115 = vpop.f32.mrf.mxu0
  %3116 = vmatprep.mubr.bf16.mxu0 0
  %3117 = vmatmul.mubr.bf16.gmra.mxu0 %v2987
  %v3118 = vpop.f32.mrf.mxu0
  %v3119 = vadd.f32 0.0, %v3118
  %v3120 = vpop.f32.mrf.mxu0
  %v3121 = vpop.f32.mrf.mxu0
  %v3122 = vadd.f32 0.0, %v3121
  %v3123 = vpop.f32.mrf.mxu0
  %3124 = vmatprep.mubr.bf16.mxu0 0
  %3125 = vmatmul.mubr.bf16.gmra.mxu0 %v2990
  %v3126 = vpop.f32.mrf.mxu0
  %v3127 = vadd.f32 0.0, %v3126
  %v3128 = vpop.f32.mrf.mxu0
  %v3129 = vpop.f32.mrf.mxu0
  %v3130 = vadd.f32 0.0, %v3129
  %v3131 = vpop.f32.mrf.mxu0
  %3132 = vmatprep.mubr.bf16.mxu0 0
  %3133 = vmatmul.mubr.bf16.gmra.mxu0 %v2993
  %v3134 = vpop.f32.mrf.mxu0
  %v3135 = vadd.f32 0.0, %v3134
  %v3136 = vpop.f32.mrf.mxu0
  %v3137 = vpop.f32.mrf.mxu0
  %v3138 = vadd.f32 0.0, %v3137
  %v3139 = vpop.f32.mrf.mxu0
  %3140 = vmatprep.mubr.bf16.mxu0 0
  %3141 = vmatmul.mubr.bf16.gmra.mxu0 %v2996
  %v3142 = vpop.f32.mrf.mxu0
  %v3143 = vadd.f32 0.0, %v3142
  %v3144 = vpop.f32.mrf.mxu0
  %v3145 = vpop.f32.mrf.mxu0
  %v3146 = vadd.f32 0.0, %v3145
  %v3147 = vpop.f32.mrf.mxu0
  %3148 = vmatprep.mubr.bf16.mxu0 0
  %3149 = vmatmul.mubr.bf16.gmra.mxu0 %v2999
  %v3150 = vpop.f32.mrf.mxu0
  %v3151 = vadd.f32 0.0, %v3150
  %v3152 = vpop.f32.mrf.mxu0
  %v3153 = vpop.f32.mrf.mxu0
  %v3154 = vadd.f32 0.0, %v3153
  %v3155 = vpop.f32.mrf.mxu0
  %3156 = vmatprep.mubr.bf16.mxu0 0
  %3157 = vmatmul.mubr.bf16.gmra.mxu0 %v3002
  %v3158 = vpop.f32.mrf.mxu0
  %v3159 = vadd.f32 0.0, %v3158
  %v3160 = vpop.f32.mrf.mxu0
  %v3161 = vpop.f32.mrf.mxu0
  %v3162 = vadd.f32 0.0, %v3161
  %v3163 = vpop.f32.mrf.mxu0
  %3164 = vdwg.mxu0
  %v3165 = vld [vmem:[%s8] sm:$0x1]
  %v3167 = vlaneseq
  %v3168 = vshrl.u32 %v3167, 7
  %v3169 = vsub.s32 0, %v3168
  %v3170 = vrot.slane %v3165, %v3169
  %v3172 = vadd.f32 %v3039, %v3170
  %v3173 = vadd.f32 %v3042, %v3170
  %v3174 = vadd.f32 %v3047, %v3170
  %v3175 = vadd.f32 %v3050, %v3170
  %v3176 = vadd.f32 %v3055, %v3170
  %v3177 = vadd.f32 %v3058, %v3170
  %v3178 = vadd.f32 %v3063, %v3170
  %v3179 = vadd.f32 %v3066, %v3170
  %v3180 = vadd.f32 %v3071, %v3170
  %v3181 = vadd.f32 %v3074, %v3170
  %v3182 = vadd.f32 %v3079, %v3170
  %v3183 = vadd.f32 %v3082, %v3170
  %v3184 = vadd.f32 %v3087, %v3170
  %v3185 = vadd.f32 %v3090, %v3170
  %v3186 = vadd.f32 %v3095, %v3170
  %v3187 = vadd.f32 %v3098, %v3170
  %v3188 = vadd.f32 %v3103, %v3170
  %v3189 = vadd.f32 %v3106, %v3170
  %v3190 = vadd.f32 %v3111, %v3170
  %v3191 = vadd.f32 %v3114, %v3170
  %v3192 = vadd.f32 %v3119, %v3170
  %v3193 = vadd.f32 %v3122, %v3170
  %v3194 = vadd.f32 %v3127, %v3170
  %v3195 = vadd.f32 %v3130, %v3170
  %v3196 = vadd.f32 %v3135, %v3170
  %v3197 = vadd.f32 %v3138, %v3170
  %v3198 = vadd.f32 %v3143, %v3170
  %v3199 = vadd.f32 %v3146, %v3170
  %v3200 = vadd.f32 %v3151, %v3170
  %v3201 = vadd.f32 %v3154, %v3170
  %v3202 = vadd.f32 %v3159, %v3170
  %v3203 = vadd.f32 %v3162, %v3170
  %v3204 = vld [vmem:[%s2] sm:$0xf]
  %v3205 = vld [vmem:[%s2 + $0x4] sm:$0xf]
  %v3206 = vld [vmem:[%s2 + $0x8] sm:$0xf]
  %v3207 = vld [vmem:[%s2 + $0xc] sm:$0xf]
  %v3208 = vld [vmem:[%s2 + $0x10] sm:$0xf]
  %v3209 = vld [vmem:[%s2 + $0x14] sm:$0xf]
  %v3210 = vld [vmem:[%s2 + $0x18] sm:$0xf]
  %v3211 = vld [vmem:[%s2 + $0x1c] sm:$0xf]
  %v3212 = vld [vmem:[%s2 + $0x20] sm:$0xf]
  %v3213 = vld [vmem:[%s2 + $0x24] sm:$0xf]
  %v3214 = vld [vmem:[%s2 + $0x28] sm:$0xf]
  %v3215 = vld [vmem:[%s2 + $0x2c] sm:$0xf]
  %v3216 = vld [vmem:[%s2 + $0x30] sm:$0xf]
  %v3217 = vld [vmem:[%s2 + $0x34] sm:$0xf]
  %v3218 = vld [vmem:[%s2 + $0x38] sm:$0xf]
  %v3219 = vld [vmem:[%s2 + $0x3c] sm:$0xf]
  %v3220 = vld [vmem:[%s10] sm:$0xf]
  %v3221 = vld [vmem:[%s10 + $0x4] sm:$0xf]
  %v3222 = vld [vmem:[%s10 + $0x8] sm:$0xf]
  %v3223 = vld [vmem:[%s10 + $0xc] sm:$0xf]
  %v3240 = vunpack.c.l.b16 %v3204
  %v3241 = vunpack.c.l.b16 %v3205
  %v3242 = vunpack.c.l.b16 %v3206
  %v3243 = vunpack.c.l.b16 %v3207
  %v3244 = vunpack.c.l.b16 %v3208
  %v3245 = vunpack.c.l.b16 %v3209
  %v3246 = vunpack.c.l.b16 %v3210
  %v3247 = vunpack.c.l.b16 %v3211
  %v3248 = vunpack.c.l.b16 %v3212
  %v3249 = vunpack.c.l.b16 %v3213
  %v3250 = vunpack.c.l.b16 %v3214
  %v3251 = vunpack.c.l.b16 %v3215
  %v3252 = vunpack.c.l.b16 %v3216
  %v3253 = vunpack.c.l.b16 %v3217
  %v3254 = vunpack.c.l.b16 %v3218
  %v3255 = vunpack.c.l.b16 %v3219
  %v3256 = vpack.c.b16 %v3241, %v3240
  %v3257 = vpack.c.b16 %v3243, %v3242
  %v3258 = vpack.c.b16 %v3245, %v3244
  %v3259 = vpack.c.b16 %v3247, %v3246
  %v3260 = vpack.c.b16 %v3249, %v3248
  %v3261 = vpack.c.b16 %v3251, %v3250
  %v3262 = vpack.c.b16 %v3253, %v3252
  %v3263 = vpack.c.b16 %v3255, %v3254
  %v3268 = vunpack.c.l.b16 %v3220
  %v3269 = vunpack.c.l.b16 %v3221
  %v3270 = vunpack.c.l.b16 %v3222
  %v3271 = vunpack.c.l.b16 %v3223
  %v3272 = vpack.c.b16 %v3269, %v3268
  %v3273 = vpack.c.b16 %v3271, %v3270
  %v3277 = vsel %vm187, %v3256, 0
  %v3280 = vsel %vm187, %v3257, 0
  %v3283 = vsel %vm187, %v3258, 0
  %v3286 = vsel %vm187, %v3259, 0
  %v3289 = vsel %vm187, %v3260, 0
  %v3292 = vsel %vm187, %v3261, 0
  %v3295 = vsel %vm187, %v3262, 0
  %v3298 = vsel %vm187, %v3263, 0
  %3300 = vmatprep.subr.bf16.mxu0 0
  %3301 = vmatpush1.bf16.msra.mxu0 0
  %3302 = vmatprep.subr.bf16.mxu0 0
  %3303 = vmatpush1.bf16.msra.mxu0 0
  %3304 = vmatprep.subr.bf16.mxu0 0
  %3305 = vmatpush1.bf16.msra.mxu0 0
  %3306 = vmatprep.subr.bf16.mxu0 0
  %3307 = vmatpush1.bf16.msra.mxu0 0
  %3308 = vmatprep.subr.bf16.mxu0 0
  %3309 = vmatpush1.bf16.msra.mxu0 0
  %3310 = vmatprep.subr.bf16.mxu0 0
  %3311 = vmatpush1.bf16.msra.mxu0 0
  %3312 = vmatprep.subr.bf16.mxu0 0
  %3313 = vmatpush1.bf16.msra.mxu0 %v3273
  %3314 = vmatprep.subr.bf16.mxu0 0
  %3315 = vmatpush1.bf16.msra.mxu0 %v3272
  %3316 = vmatprep.subr.bf16.mxu0 0
  %3317 = vmatpush2.bf16.msra.mxu0 0
  %3318 = vmatprep.subr.bf16.mxu0 0
  %3319 = vmatpush2.bf16.msra.mxu0 0
  %3320 = vmatprep.subr.bf16.mxu0 0
  %3321 = vmatpush2.bf16.msra.mxu0 0
  %3322 = vmatprep.subr.bf16.mxu0 0
  %3323 = vmatpush2.bf16.msra.mxu0 0
  %3324 = vmatprep.subr.bf16.mxu0 0
  %3325 = vmatpush2.bf16.msra.mxu0 0
  %3326 = vmatprep.subr.bf16.mxu0 0
  %3327 = vmatpush2.bf16.msra.mxu0 0
  %3328 = vmatprep.subr.bf16.mxu0 0
  %3329 = vmatpush2.bf16.msra.mxu0 0
  %3330 = vmatprep.subr.bf16.mxu0 0
  %3331 = vmatpush2.bf16.msra.mxu0 0
  %3332 = vmatprep.mubr.bf16.mxu0 0
  %3333 = vmatmul.mubr.bf16.gmra.mxu0 %v3277
  %v3334 = vpop.f32.mrf.mxu0
  %v3335 = vadd.f32 0.0, %v3334
  %v3336 = vpop.f32.mrf.mxu0
  %v3337 = vpop.f32.mrf.mxu0
  %v3338 = vadd.f32 0.0, %v3337
  %v3339 = vpop.f32.mrf.mxu0
  %3340 = vmatprep.mubr.bf16.mxu0 0
  %3341 = vmatmul.mubr.bf16.gmra.mxu0 %v3280
  %v3342 = vpop.f32.mrf.mxu0
  %v3343 = vadd.f32 0.0, %v3342
  %v3344 = vpop.f32.mrf.mxu0
  %v3345 = vpop.f32.mrf.mxu0
  %v3346 = vadd.f32 0.0, %v3345
  %v3347 = vpop.f32.mrf.mxu0
  %3348 = vmatprep.mubr.bf16.mxu0 0
  %3349 = vmatmul.mubr.bf16.gmra.mxu0 %v3283
  %v3350 = vpop.f32.mrf.mxu0
  %v3351 = vadd.f32 0.0, %v3350
  %v3352 = vpop.f32.mrf.mxu0
  %v3353 = vpop.f32.mrf.mxu0
  %v3354 = vadd.f32 0.0, %v3353
  %v3355 = vpop.f32.mrf.mxu0
  %3356 = vmatprep.mubr.bf16.mxu0 0
  %3357 = vmatmul.mubr.bf16.gmra.mxu0 %v3286
  %v3358 = vpop.f32.mrf.mxu0
  %v3359 = vadd.f32 0.0, %v3358
  %v3360 = vpop.f32.mrf.mxu0
  %v3361 = vpop.f32.mrf.mxu0
  %v3362 = vadd.f32 0.0, %v3361
  %v3363 = vpop.f32.mrf.mxu0
  %3364 = vmatprep.mubr.bf16.mxu0 0
  %3365 = vmatmul.mubr.bf16.gmra.mxu0 %v3289
  %v3366 = vpop.f32.mrf.mxu0
  %v3367 = vadd.f32 0.0, %v3366
  %v3368 = vpop.f32.mrf.mxu0
  %v3369 = vpop.f32.mrf.mxu0
  %v3370 = vadd.f32 0.0, %v3369
  %v3371 = vpop.f32.mrf.mxu0
  %3372 = vmatprep.mubr.bf16.mxu0 0
  %3373 = vmatmul.mubr.bf16.gmra.mxu0 %v3292
  %v3374 = vpop.f32.mrf.mxu0
  %v3375 = vadd.f32 0.0, %v3374
  %v3376 = vpop.f32.mrf.mxu0
  %v3377 = vpop.f32.mrf.mxu0
  %v3378 = vadd.f32 0.0, %v3377
  %v3379 = vpop.f32.mrf.mxu0
  %3380 = vmatprep.mubr.bf16.mxu0 0
  %3381 = vmatmul.mubr.bf16.gmra.mxu0 %v3295
  %v3382 = vpop.f32.mrf.mxu0
  %v3383 = vadd.f32 0.0, %v3382
  %v3384 = vpop.f32.mrf.mxu0
  %v3385 = vpop.f32.mrf.mxu0
  %v3386 = vadd.f32 0.0, %v3385
  %v3387 = vpop.f32.mrf.mxu0
  %3388 = vmatprep.mubr.bf16.mxu0 0
  %3389 = vmatmul.mubr.bf16.gmra.mxu0 %v3298
  %v3390 = vpop.f32.mrf.mxu0
  %v3391 = vadd.f32 0.0, %v3390
  %v3392 = vpop.f32.mrf.mxu0
  %v3393 = vpop.f32.mrf.mxu0
  %v3394 = vadd.f32 0.0, %v3393
  %v3395 = vpop.f32.mrf.mxu0
  %3396 = vdwg.mxu0
  %v3397 = vld [vmem:[%s11] sm:$0x1]
  %v3399 = vlaneseq
  %v3400 = vshrl.u32 %v3399, 7
  %v3401 = vsub.s32 0, %v3400
  %v3402 = vrot.slane %v3397, %v3401
  %v3404 = vadd.f32 %v3335, %v3402
  %v3405 = vadd.f32 %v3338, %v3402
  %v3406 = vadd.f32 %v3343, %v3402
  %v3407 = vadd.f32 %v3346, %v3402
  %v3408 = vadd.f32 %v3351, %v3402
  %v3409 = vadd.f32 %v3354, %v3402
  %v3410 = vadd.f32 %v3359, %v3402
  %v3411 = vadd.f32 %v3362, %v3402
  %v3412 = vadd.f32 %v3367, %v3402
  %v3413 = vadd.f32 %v3370, %v3402
  %v3414 = vadd.f32 %v3375, %v3402
  %v3415 = vadd.f32 %v3378, %v3402
  %v3416 = vadd.f32 %v3383, %v3402
  %v3417 = vadd.f32 %v3386, %v3402
  %v3418 = vadd.f32 %v3391, %v3402
  %v3419 = vadd.f32 %v3394, %v3402
  %v3420 = vadd.f32 %v3172, %v3404
  %v3421 = vadd.f32 %v3173, %v3405
  %v3422 = vadd.f32 %v3176, %v3406
  %v3423 = vadd.f32 %v3177, %v3407
  %v3424 = vadd.f32 %v3180, %v3408
  %v3425 = vadd.f32 %v3181, %v3409
  %v3426 = vadd.f32 %v3184, %v3410
  %v3427 = vadd.f32 %v3185, %v3411
  %v3428 = vadd.f32 %v3188, %v3412
  %v3429 = vadd.f32 %v3189, %v3413
  %v3430 = vadd.f32 %v3192, %v3414
  %v3431 = vadd.f32 %v3193, %v3415
  %v3432 = vadd.f32 %v3196, %v3416
  %v3433 = vadd.f32 %v3197, %v3417
  %v3434 = vadd.f32 %v3200, %v3418
  %v3435 = vadd.f32 %v3201, %v3419
  %v3436 = vld [vmem:[%s4] sm:$0xff]
  %v3437 = vsub.f32 1.0, %v3436
  %v3438 = vmul.f32 %v3437, -1e+10
  %v3439 = vlaneseq
  %v3440 = vshrl.u32 %v3439, 7
  %v3441 = vsub.s32 7, %v3440
  %v3442 = vrot.slane %v2828, %v3441
  %v3443 = vlaneseq
  %v3444 = vshrl.u32 %v3443, 7
  %v3445 = vsub.s32 7, %v3444
  %v3446 = vrot.slane %v2829, %v3445
  %v3447 = vlaneseq
  %v3448 = vshrl.u32 %v3447, 7
  %v3449 = vsub.s32 7, %v3448
  %v3450 = vrot.slane %v2830, %v3449
  %v3451 = vlaneseq
  %v3452 = vshrl.u32 %v3451, 7
  %v3453 = vsub.s32 7, %v3452
  %v3454 = vrot.slane %v2831, %v3453
  %v3455 = vlaneseq
  %v3456 = vshrl.u32 %v3455, 7
  %v3457 = vsub.s32 7, %v3456
  %v3458 = vrot.slane %v2832, %v3457
  %v3459 = vlaneseq
  %v3460 = vshrl.u32 %v3459, 7
  %v3461 = vsub.s32 7, %v3460
  %v3462 = vrot.slane %v2833, %v3461
  %v3463 = vlaneseq
  %v3464 = vshrl.u32 %v3463, 7
  %v3465 = vsub.s32 7, %v3464
  %v3466 = vrot.slane %v2834, %v3465
  %v3467 = vlaneseq
  %v3468 = vshrl.u32 %v3467, 7
  %v3469 = vsub.s32 7, %v3468
  %v3470 = vrot.slane %v2835, %v3469
  %3487 = vrot.lane.b32.xlu0 %v3420, 64
  %v3488 = vpop.permute.xlu0 %3487
  %3489 = vrot.lane.b32.xlu0 %v3421, 64
  %v3490 = vpop.permute.xlu0 %3489
  %3491 = vrot.lane.b32.xlu0 %v3422, 64
  %v3492 = vpop.permute.xlu0 %3491
  %3493 = vrot.lane.b32.xlu0 %v3423, 64
  %v3494 = vpop.permute.xlu0 %3493
  %3495 = vrot.lane.b32.xlu0 %v3424, 64
  %v3496 = vpop.permute.xlu0 %3495
  %3497 = vrot.lane.b32.xlu0 %v3425, 64
  %v3498 = vpop.permute.xlu0 %3497
  %3499 = vrot.lane.b32.xlu0 %v3426, 64
  %v3500 = vpop.permute.xlu0 %3499
  %3501 = vrot.lane.b32.xlu0 %v3427, 64
  %v3502 = vpop.permute.xlu0 %3501
  %3503 = vrot.lane.b32.xlu0 %v3428, 64
  %v3504 = vpop.permute.xlu0 %3503
  %3505 = vrot.lane.b32.xlu0 %v3429, 64
  %v3506 = vpop.permute.xlu0 %3505
  %3507 = vrot.lane.b32.xlu0 %v3430, 64
  %v3508 = vpop.permute.xlu0 %3507
  %3509 = vrot.lane.b32.xlu0 %v3431, 64
  %v3510 = vpop.permute.xlu0 %3509
  %3511 = vrot.lane.b32.xlu0 %v3432, 64
  %v3512 = vpop.permute.xlu0 %3511
  %3513 = vrot.lane.b32.xlu0 %v3433, 64
  %v3514 = vpop.permute.xlu0 %3513
  %3515 = vrot.lane.b32.xlu0 %v3434, 64
  %v3516 = vpop.permute.xlu0 %3515
  %3517 = vrot.lane.b32.xlu0 %v3435, 64
  %v3518 = vpop.permute.xlu0 %3517
  %v3535 = vmul.f32 %v3442, %v3488
  %v3536 = vmul.f32 %v3442, %v3490
  %v3537 = vmul.f32 %v3446, %v3492
  %v3538 = vmul.f32 %v3446, %v3494
  %v3539 = vmul.f32 %v3450, %v3496
  %v3540 = vmul.f32 %v3450, %v3498
  %v3541 = vmul.f32 %v3454, %v3500
  %v3542 = vmul.f32 %v3454, %v3502
  %v3543 = vmul.f32 %v3458, %v3504
  %v3544 = vmul.f32 %v3458, %v3506
  %v3545 = vmul.f32 %v3462, %v3508
  %v3546 = vmul.f32 %v3462, %v3510
  %v3547 = vmul.f32 %v3466, %v3512
  %v3548 = vmul.f32 %v3466, %v3514
  %v3549 = vmul.f32 %v3470, %v3516
  %v3550 = vmul.f32 %v3470, %v3518
  %3567 = vrot.lane.b32.xlu0 %v3535, 64
  %v3568 = vpop.permute.xlu0 %3567
  %3569 = vrot.lane.b32.xlu0 %v3536, 64
  %v3570 = vpop.permute.xlu0 %3569
  %3571 = vrot.lane.b32.xlu0 %v3537, 64
  %v3572 = vpop.permute.xlu0 %3571
  %3573 = vrot.lane.b32.xlu0 %v3538, 64
  %v3574 = vpop.permute.xlu0 %3573
  %3575 = vrot.lane.b32.xlu0 %v3539, 64
  %v3576 = vpop.permute.xlu0 %3575
  %3577 = vrot.lane.b32.xlu0 %v3540, 64
  %v3578 = vpop.permute.xlu0 %3577
  %3579 = vrot.lane.b32.xlu0 %v3541, 64
  %v3580 = vpop.permute.xlu0 %3579
  %3581 = vrot.lane.b32.xlu0 %v3542, 64
  %v3582 = vpop.permute.xlu0 %3581
  %3583 = vrot.lane.b32.xlu0 %v3543, 64
  %v3584 = vpop.permute.xlu0 %3583
  %3585 = vrot.lane.b32.xlu0 %v3544, 64
  %v3586 = vpop.permute.xlu0 %3585
  %3587 = vrot.lane.b32.xlu0 %v3545, 64
  %v3588 = vpop.permute.xlu0 %3587
  %3589 = vrot.lane.b32.xlu0 %v3546, 64
  %v3590 = vpop.permute.xlu0 %3589
  %3591 = vrot.lane.b32.xlu0 %v3547, 64
  %v3592 = vpop.permute.xlu0 %3591
  %3593 = vrot.lane.b32.xlu0 %v3548, 64
  %v3594 = vpop.permute.xlu0 %3593
  %3595 = vrot.lane.b32.xlu0 %v3549, 64
  %v3596 = vpop.permute.xlu0 %3595
  %3597 = vrot.lane.b32.xlu0 %v3550, 64
  %v3598 = vpop.permute.xlu0 %3597
  %v3615 = vsel %vm187, %v3568, 0.0
  %3616 = vadd.xlane.f32.xlu0 %v3615
  %v3617 = vpop.xlane.xlu0 %3616
  %v3618 = vsel %vm187, %v3570, 0.0
  %3619 = vadd.xlane.f32.xlu0 %v3618
  %v3620 = vpop.xlane.xlu0 %3619
  %v3621 = vsel %vm187, %v3572, 0.0
  %3622 = vadd.xlane.f32.xlu0 %v3621
  %v3623 = vpop.xlane.xlu0 %3622
  %v3624 = vsel %vm187, %v3574, 0.0
  %3625 = vadd.xlane.f32.xlu0 %v3624
  %v3626 = vpop.xlane.xlu0 %3625
  %v3627 = vsel %vm187, %v3576, 0.0
  %3628 = vadd.xlane.f32.xlu0 %v3627
  %v3629 = vpop.xlane.xlu0 %3628
  %v3630 = vsel %vm187, %v3578, 0.0
  %3631 = vadd.xlane.f32.xlu0 %v3630
  %v3632 = vpop.xlane.xlu0 %3631
  %v3633 = vsel %vm187, %v3580, 0.0
  %3634 = vadd.xlane.f32.xlu0 %v3633
  %v3635 = vpop.xlane.xlu0 %3634
  %v3636 = vsel %vm187, %v3582, 0.0
  %3637 = vadd.xlane.f32.xlu0 %v3636
  %v3638 = vpop.xlane.xlu0 %3637
  %v3639 = vsel %vm187, %v3584, 0.0
  %3640 = vadd.xlane.f32.xlu0 %v3639
  %v3641 = vpop.xlane.xlu0 %3640
  %v3642 = vsel %vm187, %v3586, 0.0
  %3643 = vadd.xlane.f32.xlu0 %v3642
  %v3644 = vpop.xlane.xlu0 %3643
  %v3645 = vsel %vm187, %v3588, 0.0
  %3646 = vadd.xlane.f32.xlu0 %v3645
  %v3647 = vpop.xlane.xlu0 %3646
  %v3648 = vsel %vm187, %v3590, 0.0
  %3649 = vadd.xlane.f32.xlu0 %v3648
  %v3650 = vpop.xlane.xlu0 %3649
  %v3651 = vsel %vm187, %v3592, 0.0
  %3652 = vadd.xlane.f32.xlu0 %v3651
  %v3653 = vpop.xlane.xlu0 %3652
  %v3654 = vsel %vm187, %v3594, 0.0
  %3655 = vadd.xlane.f32.xlu0 %v3654
  %v3656 = vpop.xlane.xlu0 %3655
  %v3657 = vsel %vm187, %v3596, 0.0
  %3658 = vadd.xlane.f32.xlu0 %v3657
  %v3659 = vpop.xlane.xlu0 %3658
  %v3660 = vsel %vm187, %v3598, 0.0
  %3661 = vadd.xlane.f32.xlu0 %v3660
  %v3662 = vpop.xlane.xlu0 %3661
  %v3664 = vlaneseq
  %v3665 = vshrl.u32 %v3664, 7
  %v3666 = vsub.s32 0, %v3665
  %v3667 = vrot.slane %v3438, %v3666
  %3669 = vbcast.lane.b32.xlu0 %v3667, 256
  %v3670 = vpop.permute.xlu0 %3669
  %s3672 = sor.u32 256, 8
  %3673 = vbcast.lane.b32.xlu0 %v3667, %s3672
  %v3674 = vpop.permute.xlu0 %3673
  %v3675 = vlaneseq
  %v3676 = vshrl.u32 %v3675, 7
  %v3677 = vsub.s32 1, %v3676
  %v3678 = vrot.slane %v3438, %v3677
  %3680 = vbcast.lane.b32.xlu0 %v3678, 256
  %v3681 = vpop.permute.xlu0 %3680
  %s3683 = sor.u32 256, 8
  %3684 = vbcast.lane.b32.xlu0 %v3678, %s3683
  %v3685 = vpop.permute.xlu0 %3684
  %v3686 = vlaneseq
  %v3687 = vshrl.u32 %v3686, 7
  %v3688 = vsub.s32 2, %v3687
  %v3689 = vrot.slane %v3438, %v3688
  %3691 = vbcast.lane.b32.xlu0 %v3689, 256
  %v3692 = vpop.permute.xlu0 %3691
  %s3694 = sor.u32 256, 8
  %3695 = vbcast.lane.b32.xlu0 %v3689, %s3694
  %v3696 = vpop.permute.xlu0 %3695
  %v3697 = vlaneseq
  %v3698 = vshrl.u32 %v3697, 7
  %v3699 = vsub.s32 3, %v3698
  %v3700 = vrot.slane %v3438, %v3699
  %3702 = vbcast.lane.b32.xlu0 %v3700, 256
  %v3703 = vpop.permute.xlu0 %3702
  %s3705 = sor.u32 256, 8
  %3706 = vbcast.lane.b32.xlu0 %v3700, %s3705
  %v3707 = vpop.permute.xlu0 %3706
  %v3708 = vlaneseq
  %v3709 = vshrl.u32 %v3708, 7
  %v3710 = vsub.s32 4, %v3709
  %v3711 = vrot.slane %v3438, %v3710
  %3713 = vbcast.lane.b32.xlu0 %v3711, 256
  %v3714 = vpop.permute.xlu0 %3713
  %s3716 = sor.u32 256, 8
  %3717 = vbcast.lane.b32.xlu0 %v3711, %s3716
  %v3718 = vpop.permute.xlu0 %3717
  %v3719 = vlaneseq
  %v3720 = vshrl.u32 %v3719, 7
  %v3721 = vsub.s32 5, %v3720
  %v3722 = vrot.slane %v3438, %v3721
  %3724 = vbcast.lane.b32.xlu0 %v3722, 256
  %v3725 = vpop.permute.xlu0 %3724
  %s3727 = sor.u32 256, 8
  %3728 = vbcast.lane.b32.xlu0 %v3722, %s3727
  %v3729 = vpop.permute.xlu0 %3728
  %v3730 = vlaneseq
  %v3731 = vshrl.u32 %v3730, 7
  %v3732 = vsub.s32 6, %v3731
  %v3733 = vrot.slane %v3438, %v3732
  %3735 = vbcast.lane.b32.xlu0 %v3733, 256
  %v3736 = vpop.permute.xlu0 %3735
  %s3738 = sor.u32 256, 8
  %3739 = vbcast.lane.b32.xlu0 %v3733, %s3738
  %v3740 = vpop.permute.xlu0 %3739
  %v3741 = vlaneseq
  %v3742 = vshrl.u32 %v3741, 7
  %v3743 = vsub.s32 7, %v3742
  %v3744 = vrot.slane %v3438, %v3743
  %3746 = vbcast.lane.b32.xlu0 %v3744, 256
  %v3747 = vpop.permute.xlu0 %3746
  %s3749 = sor.u32 256, 8
  %3750 = vbcast.lane.b32.xlu0 %v3744, %s3749
  %v3751 = vpop.permute.xlu0 %3750
  %v3768 = vadd.f32 %v3617, %v3670
  %v3769 = vadd.f32 %v3620, %v3674
  %v3770 = vadd.f32 %v3623, %v3681
  %v3771 = vadd.f32 %v3626, %v3685
  %v3772 = vadd.f32 %v3629, %v3692
  %v3773 = vadd.f32 %v3632, %v3696
  %v3774 = vadd.f32 %v3635, %v3703
  %v3775 = vadd.f32 %v3638, %v3707
  %v3776 = vadd.f32 %v3641, %v3714
  %v3777 = vadd.f32 %v3644, %v3718
  %v3778 = vadd.f32 %v3647, %v3725
  %v3779 = vadd.f32 %v3650, %v3729
  %v3780 = vadd.f32 %v3653, %v3736
  %v3781 = vadd.f32 %v3656, %v3740
  %v3782 = vadd.f32 %v3659, %v3747
  %v3783 = vadd.f32 %v3662, %v3751
  %v3784 = vmul.f32 %v3768, 0.17677669
  %v3785 = vmul.f32 %v3769, 0.17677669
  %v3786 = vmul.f32 %v3770, 0.17677669
  %v3787 = vmul.f32 %v3771, 0.17677669
  %v3788 = vmul.f32 %v3772, 0.17677669
  %v3789 = vmul.f32 %v3773, 0.17677669
  %v3790 = vmul.f32 %v3774, 0.17677669
  %v3791 = vmul.f32 %v3775, 0.17677669
  %v3792 = vmul.f32 %v3776, 0.17677669
  %v3793 = vmul.f32 %v3777, 0.17677669
  %v3794 = vmul.f32 %v3778, 0.17677669
  %v3795 = vmul.f32 %v3779, 0.17677669
  %v3796 = vmul.f32 %v3780, 0.17677669
  %v3797 = vmul.f32 %v3781, 0.17677669
  %v3798 = vmul.f32 %v3782, 0.17677669
  %v3799 = vmul.f32 %v3783, 0.17677669
  %3816 = vset.pattern.permute.xlu0 0
  %3817 = vperm.xlu0 %3816, %v3784
  %v3818 = vpop.permute.xlu0 %3817
  %3819 = vset.pattern.permute.xlu0 0
  %3820 = vperm.xlu0 %3819, %v3785
  %v3821 = vpop.permute.xlu0 %3820
  %3822 = vset.pattern.permute.xlu0 0
  %3823 = vperm.xlu0 %3822, %v3786
  %v3824 = vpop.permute.xlu0 %3823
  %3825 = vset.pattern.permute.xlu0 0
  %3826 = vperm.xlu0 %3825, %v3787
  %v3827 = vpop.permute.xlu0 %3826
  %3828 = vset.pattern.permute.xlu0 0
  %3829 = vperm.xlu0 %3828, %v3788
  %v3830 = vpop.permute.xlu0 %3829
  %3831 = vset.pattern.permute.xlu0 0
  %3832 = vperm.xlu0 %3831, %v3789
  %v3833 = vpop.permute.xlu0 %3832
  %3834 = vset.pattern.permute.xlu0 0
  %3835 = vperm.xlu0 %3834, %v3790
  %v3836 = vpop.permute.xlu0 %3835
  %3837 = vset.pattern.permute.xlu0 0
  %3838 = vperm.xlu0 %3837, %v3791
  %v3839 = vpop.permute.xlu0 %3838
  %3840 = vset.pattern.permute.xlu0 0
  %3841 = vperm.xlu0 %3840, %v3792
  %v3842 = vpop.permute.xlu0 %3841
  %3843 = vset.pattern.permute.xlu0 0
  %3844 = vperm.xlu0 %3843, %v3793
  %v3845 = vpop.permute.xlu0 %3844
  %3846 = vset.pattern.permute.xlu0 0
  %3847 = vperm.xlu0 %3846, %v3794
  %v3848 = vpop.permute.xlu0 %3847
  %3849 = vset.pattern.permute.xlu0 0
  %3850 = vperm.xlu0 %3849, %v3795
  %v3851 = vpop.permute.xlu0 %3850
  %3852 = vset.pattern.permute.xlu0 0
  %3853 = vperm.xlu0 %3852, %v3796
  %v3854 = vpop.permute.xlu0 %3853
  %3855 = vset.pattern.permute.xlu0 0
  %3856 = vperm.xlu0 %3855, %v3797
  %v3857 = vpop.permute.xlu0 %3856
  %3858 = vset.pattern.permute.xlu0 0
  %3859 = vperm.xlu0 %3858, %v3798
  %v3860 = vpop.permute.xlu0 %3859
  %3861 = vset.pattern.permute.xlu0 0
  %3862 = vperm.xlu0 %3861, %v3799
  %v3863 = vpop.permute.xlu0 %3862
  %v3864 = vlaneseq
  %v3865 = vand.u32 %v3864, 127
  %v3866 = vlaneseq
  %v3867 = vshrl.u32 %v3866, 7
  %v3868 = vsub.s32 %v3865, %v3867
  %v3869 = vrot.slane %v3818, %v3868
  %v3870 = vadd.s32 %v3865, 4294967288
  %v3871 = vlaneseq
  %v3872 = vshrl.u32 %v3871, 7
  %v3873 = vsub.s32 %v3870, %v3872
  %v3874 = vrot.slane %v3821, %v3873
  %vm3875 = vcmask 130112
  %v3876 = vsel %vm3875, %v3874, %v3869
  %v3877 = vlaneseq
  %v3878 = vshrl.u32 %v3877, 7
  %v3879 = vsub.s32 %v3865, %v3878
  %v3880 = vrot.slane %v3824, %v3879
  %v3881 = vlaneseq
  %v3882 = vshrl.u32 %v3881, 7
  %v3883 = vsub.s32 %v3870, %v3882
  %v3884 = vrot.slane %v3827, %v3883
  %v3885 = vsel %vm3875, %v3884, %v3880
  %v3886 = vlaneseq
  %v3887 = vshrl.u32 %v3886, 7
  %v3888 = vsub.s32 %v3865, %v3887
  %v3889 = vrot.slane %v3830, %v3888
  %v3890 = vlaneseq
  %v3891 = vshrl.u32 %v3890, 7
  %v3892 = vsub.s32 %v3870, %v3891
  %v3893 = vrot.slane %v3833, %v3892
  %v3894 = vsel %vm3875, %v3893, %v3889
  %v3895 = vlaneseq
  %v3896 = vshrl.u32 %v3895, 7
  %v3897 = vsub.s32 %v3865, %v3896
  %v3898 = vrot.slane %v3836, %v3897
  %v3899 = vlaneseq
  %v3900 = vshrl.u32 %v3899, 7
  %v3901 = vsub.s32 %v3870, %v3900
  %v3902 = vrot.slane %v3839, %v3901
  %v3903 = vsel %vm3875, %v3902, %v3898
  %v3904 = vlaneseq
  %v3905 = vshrl.u32 %v3904, 7
  %v3906 = vsub.s32 %v3865, %v3905
  %v3907 = vrot.slane %v3842, %v3906
  %v3908 = vlaneseq
  %v3909 = vshrl.u32 %v3908, 7
  %v3910 = vsub.s32 %v3870, %v3909
  %v3911 = vrot.slane %v3845, %v3910
  %v3912 = vsel %vm3875, %v3911, %v3907
  %v3913 = vlaneseq
  %v3914 = vshrl.u32 %v3913, 7
  %v3915 = vsub.s32 %v3865, %v3914
  %v3916 = vrot.slane %v3848, %v3915
  %v3917 = vlaneseq
  %v3918 = vshrl.u32 %v3917, 7
  %v3919 = vsub.s32 %v3870, %v3918
  %v3920 = vrot.slane %v3851, %v3919
  %v3921 = vsel %vm3875, %v3920, %v3916
  %v3922 = vlaneseq
  %v3923 = vshrl.u32 %v3922, 7
  %v3924 = vsub.s32 %v3865, %v3923
  %v3925 = vrot.slane %v3854, %v3924
  %v3926 = vlaneseq
  %v3927 = vshrl.u32 %v3926, 7
  %v3928 = vsub.s32 %v3870, %v3927
  %v3929 = vrot.slane %v3857, %v3928
  %v3930 = vsel %vm3875, %v3929, %v3925
  %v3931 = vlaneseq
  %v3932 = vshrl.u32 %v3931, 7
  %v3933 = vsub.s32 %v3865, %v3932
  %v3934 = vrot.slane %v3860, %v3933
  %v3935 = vlaneseq
  %v3936 = vshrl.u32 %v3935, 7
  %v3937 = vsub.s32 %v3870, %v3936
  %v3938 = vrot.slane %v3863, %v3937
  %v3939 = vsel %vm3875, %v3938, %v3934
  %v3940 = vsel %vm486, %v3885, %v3876
  %v3941 = vsel %vm489, %v3894, %v3940
  %v3942 = vsel %vm492, %v3903, %v3941
  %v3943 = vsel %vm495, %v3912, %v3942
  %v3944 = vsel %vm498, %v3921, %v3943
  %v3945 = vsel %vm501, %v3930, %v3944
  %v3946 = vsel %vm504, %v3939, %v3945
  %v3948 = vsel %vm90, %v3946, -inf
  %3949 = vmax.xlane.f32.xlu0 %v3948
  %v3950 = vpop.xlane.xlu0 %3949
  %v3952 = vlaneseq
  %v3953 = vshrl.u32 %v3952, 7
  %v3954 = vsub.s32 0, %v3953
  %v3955 = vrot.slane %v3950, %v3954
  %v3956 = vlaneseq
  %v3957 = vshrl.u32 %v3956, 7
  %v3958 = vsub.s32 1, %v3957
  %v3959 = vrot.slane %v3950, %v3958
  %v3960 = vlaneseq
  %v3961 = vshrl.u32 %v3960, 7
  %v3962 = vsub.s32 2, %v3961
  %v3963 = vrot.slane %v3950, %v3962
  %v3964 = vlaneseq
  %v3965 = vshrl.u32 %v3964, 7
  %v3966 = vsub.s32 3, %v3965
  %v3967 = vrot.slane %v3950, %v3966
  %v3968 = vlaneseq
  %v3969 = vshrl.u32 %v3968, 7
  %v3970 = vsub.s32 4, %v3969
  %v3971 = vrot.slane %v3950, %v3970
  %v3972 = vlaneseq
  %v3973 = vshrl.u32 %v3972, 7
  %v3974 = vsub.s32 5, %v3973
  %v3975 = vrot.slane %v3950, %v3974
  %v3976 = vlaneseq
  %v3977 = vshrl.u32 %v3976, 7
  %v3978 = vsub.s32 6, %v3977
  %v3979 = vrot.slane %v3950, %v3978
  %v3980 = vlaneseq
  %v3981 = vshrl.u32 %v3980, 7
  %v3982 = vsub.s32 7, %v3981
  %v3983 = vrot.slane %v3950, %v3982
  %v3992 = vsub.f32 %v3784, %v3955
  %v3993 = vsub.f32 %v3785, %v3955
  %v3994 = vsub.f32 %v3786, %v3959
  %v3995 = vsub.f32 %v3787, %v3959
  %v3996 = vsub.f32 %v3788, %v3963
  %v3997 = vsub.f32 %v3789, %v3963
  %v3998 = vsub.f32 %v3790, %v3967
  %v3999 = vsub.f32 %v3791, %v3967
  %v4000 = vsub.f32 %v3792, %v3971
  %v4001 = vsub.f32 %v3793, %v3971
  %v4002 = vsub.f32 %v3794, %v3975
  %v4003 = vsub.f32 %v3795, %v3975
  %v4004 = vsub.f32 %v3796, %v3979
  %v4005 = vsub.f32 %v3797, %v3979
  %v4006 = vsub.f32 %v3798, %v3983
  %v4007 = vsub.f32 %v3799, %v3983
  %v4008 = vmul.f32 %v3992, 1.442695
  %v4009 = vpow.pop %v4008
  %v4010 = vmul.f32 %v3993, 1.442695
  %v4011 = vpow.pop %v4010
  %v4012 = vmul.f32 %v3994, 1.442695
  %v4013 = vpow.pop %v4012
  %v4014 = vmul.f32 %v3995, 1.442695
  %v4015 = vpow.pop %v4014
  %v4016 = vmul.f32 %v3996, 1.442695
  %v4017 = vpow.pop %v4016
  %v4018 = vmul.f32 %v3997, 1.442695
  %v4019 = vpow.pop %v4018
  %v4020 = vmul.f32 %v3998, 1.442695
  %v4021 = vpow.pop %v4020
  %v4022 = vmul.f32 %v3999, 1.442695
  %v4023 = vpow.pop %v4022
  %v4024 = vmul.f32 %v4000, 1.442695
  %v4025 = vpow.pop %v4024
  %v4026 = vmul.f32 %v4001, 1.442695
  %v4027 = vpow.pop %v4026
  %v4028 = vmul.f32 %v4002, 1.442695
  %v4029 = vpow.pop %v4028
  %v4030 = vmul.f32 %v4003, 1.442695
  %v4031 = vpow.pop %v4030
  %v4032 = vmul.f32 %v4004, 1.442695
  %v4033 = vpow.pop %v4032
  %v4034 = vmul.f32 %v4005, 1.442695
  %v4035 = vpow.pop %v4034
  %v4036 = vmul.f32 %v4006, 1.442695
  %v4037 = vpow.pop %v4036
  %v4038 = vmul.f32 %v4007, 1.442695
  %v4039 = vpow.pop %v4038
  %4056 = vset.pattern.permute.xlu0 0
  %4057 = vperm.xlu0 %4056, %v4009
  %v4058 = vpop.permute.xlu0 %4057
  %4059 = vset.pattern.permute.xlu0 0
  %4060 = vperm.xlu0 %4059, %v4011
  %v4061 = vpop.permute.xlu0 %4060
  %4062 = vset.pattern.permute.xlu0 0
  %4063 = vperm.xlu0 %4062, %v4013
  %v4064 = vpop.permute.xlu0 %4063
  %4065 = vset.pattern.permute.xlu0 0
  %4066 = vperm.xlu0 %4065, %v4015
  %v4067 = vpop.permute.xlu0 %4066
  %4068 = vset.pattern.permute.xlu0 0
  %4069 = vperm.xlu0 %4068, %v4017
  %v4070 = vpop.permute.xlu0 %4069
  %4071 = vset.pattern.permute.xlu0 0
  %4072 = vperm.xlu0 %4071, %v4019
  %v4073 = vpop.permute.xlu0 %4072
  %4074 = vset.pattern.permute.xlu0 0
  %4075 = vperm.xlu0 %4074, %v4021
  %v4076 = vpop.permute.xlu0 %4075
  %4077 = vset.pattern.permute.xlu0 0
  %4078 = vperm.xlu0 %4077, %v4023
  %v4079 = vpop.permute.xlu0 %4078
  %4080 = vset.pattern.permute.xlu0 0
  %4081 = vperm.xlu0 %4080, %v4025
  %v4082 = vpop.permute.xlu0 %4081
  %4083 = vset.pattern.permute.xlu0 0
  %4084 = vperm.xlu0 %4083, %v4027
  %v4085 = vpop.permute.xlu0 %4084
  %4086 = vset.pattern.permute.xlu0 0
  %4087 = vperm.xlu0 %4086, %v4029
  %v4088 = vpop.permute.xlu0 %4087
  %4089 = vset.pattern.permute.xlu0 0
  %4090 = vperm.xlu0 %4089, %v4031
  %v4091 = vpop.permute.xlu0 %4090
  %4092 = vset.pattern.permute.xlu0 0
  %4093 = vperm.xlu0 %4092, %v4033
  %v4094 = vpop.permute.xlu0 %4093
  %4095 = vset.pattern.permute.xlu0 0
  %4096 = vperm.xlu0 %4095, %v4035
  %v4097 = vpop.permute.xlu0 %4096
  %4098 = vset.pattern.permute.xlu0 0
  %4099 = vperm.xlu0 %4098, %v4037
  %v4100 = vpop.permute.xlu0 %4099
  %4101 = vset.pattern.permute.xlu0 0
  %4102 = vperm.xlu0 %4101, %v4039
  %v4103 = vpop.permute.xlu0 %4102
  %v4104 = vlaneseq
  %v4105 = vshrl.u32 %v4104, 7
  %v4106 = vsub.s32 %v3865, %v4105
  %v4107 = vrot.slane %v4058, %v4106
  %v4108 = vlaneseq
  %v4109 = vshrl.u32 %v4108, 7
  %v4110 = vsub.s32 %v3870, %v4109
  %v4111 = vrot.slane %v4061, %v4110
  %v4112 = vsel %vm3875, %v4111, %v4107
  %v4113 = vlaneseq
  %v4114 = vshrl.u32 %v4113, 7
  %v4115 = vsub.s32 %v3865, %v4114
  %v4116 = vrot.slane %v4064, %v4115
  %v4117 = vlaneseq
  %v4118 = vshrl.u32 %v4117, 7
  %v4119 = vsub.s32 %v3870, %v4118
  %v4120 = vrot.slane %v4067, %v4119
  %v4121 = vsel %vm3875, %v4120, %v4116
  %v4122 = vlaneseq
  %v4123 = vshrl.u32 %v4122, 7
  %v4124 = vsub.s32 %v3865, %v4123
  %v4125 = vrot.slane %v4070, %v4124
  %v4126 = vlaneseq
  %v4127 = vshrl.u32 %v4126, 7
  %v4128 = vsub.s32 %v3870, %v4127
  %v4129 = vrot.slane %v4073, %v4128
  %v4130 = vsel %vm3875, %v4129, %v4125
  %v4131 = vlaneseq
  %v4132 = vshrl.u32 %v4131, 7
  %v4133 = vsub.s32 %v3865, %v4132
  %v4134 = vrot.slane %v4076, %v4133
  %v4135 = vlaneseq
  %v4136 = vshrl.u32 %v4135, 7
  %v4137 = vsub.s32 %v3870, %v4136
  %v4138 = vrot.slane %v4079, %v4137
  %v4139 = vsel %vm3875, %v4138, %v4134
  %v4140 = vlaneseq
  %v4141 = vshrl.u32 %v4140, 7
  %v4142 = vsub.s32 %v3865, %v4141
  %v4143 = vrot.slane %v4082, %v4142
  %v4144 = vlaneseq
  %v4145 = vshrl.u32 %v4144, 7
  %v4146 = vsub.s32 %v3870, %v4145
  %v4147 = vrot.slane %v4085, %v4146
  %v4148 = vsel %vm3875, %v4147, %v4143
  %v4149 = vlaneseq
  %v4150 = vshrl.u32 %v4149, 7
  %v4151 = vsub.s32 %v3865, %v4150
  %v4152 = vrot.slane %v4088, %v4151
  %v4153 = vlaneseq
  %v4154 = vshrl.u32 %v4153, 7
  %v4155 = vsub.s32 %v3870, %v4154
  %v4156 = vrot.slane %v4091, %v4155
  %v4157 = vsel %vm3875, %v4156, %v4152
  %v4158 = vlaneseq
  %v4159 = vshrl.u32 %v4158, 7
  %v4160 = vsub.s32 %v3865, %v4159
  %v4161 = vrot.slane %v4094, %v4160
  %v4162 = vlaneseq
  %v4163 = vshrl.u32 %v4162, 7
  %v4164 = vsub.s32 %v3870, %v4163
  %v4165 = vrot.slane %v4097, %v4164
  %v4166 = vsel %vm3875, %v4165, %v4161
  %v4167 = vlaneseq
  %v4168 = vshrl.u32 %v4167, 7
  %v4169 = vsub.s32 %v3865, %v4168
  %v4170 = vrot.slane %v4100, %v4169
  %v4171 = vlaneseq
  %v4172 = vshrl.u32 %v4171, 7
  %v4173 = vsub.s32 %v3870, %v4172
  %v4174 = vrot.slane %v4103, %v4173
  %v4175 = vsel %vm3875, %v4174, %v4170
  %v4176 = vsel %vm486, %v4121, %v4112
  %v4177 = vsel %vm489, %v4130, %v4176
  %v4178 = vsel %vm492, %v4139, %v4177
  %v4179 = vsel %vm495, %v4148, %v4178
  %v4180 = vsel %vm498, %v4157, %v4179
  %v4181 = vsel %vm501, %v4166, %v4180
  %v4182 = vsel %vm504, %v4175, %v4181
  %v4184 = vsel %vm90, %v4182, 0.0
  %4185 = vadd.xlane.f32.xlu0 %v4184
  %v4186 = vpop.xlane.xlu0 %4185
  %v4187 = vrcp.pop %v4186
  %v4189 = vlaneseq
  %v4190 = vshrl.u32 %v4189, 7
  %v4191 = vsub.s32 0, %v4190
  %v4192 = vrot.slane %v4187, %v4191
  %v4193 = vlaneseq
  %v4194 = vshrl.u32 %v4193, 7
  %v4195 = vsub.s32 1, %v4194
  %v4196 = vrot.slane %v4187, %v4195
  %v4197 = vlaneseq
  %v4198 = vshrl.u32 %v4197, 7
  %v4199 = vsub.s32 2, %v4198
  %v4200 = vrot.slane %v4187, %v4199
  %v4201 = vlaneseq
  %v4202 = vshrl.u32 %v4201, 7
  %v4203 = vsub.s32 3, %v4202
  %v4204 = vrot.slane %v4187, %v4203
  %v4205 = vlaneseq
  %v4206 = vshrl.u32 %v4205, 7
  %v4207 = vsub.s32 4, %v4206
  %v4208 = vrot.slane %v4187, %v4207
  %v4209 = vlaneseq
  %v4210 = vshrl.u32 %v4209, 7
  %v4211 = vsub.s32 5, %v4210
  %v4212 = vrot.slane %v4187, %v4211
  %v4213 = vlaneseq
  %v4214 = vshrl.u32 %v4213, 7
  %v4215 = vsub.s32 6, %v4214
  %v4216 = vrot.slane %v4187, %v4215
  %v4217 = vlaneseq
  %v4218 = vshrl.u32 %v4217, 7
  %v4219 = vsub.s32 7, %v4218
  %v4220 = vrot.slane %v4187, %v4219
  %v4229 = vmul.f32 %v4009, %v4192
  %v4230 = vmul.f32 %v4011, %v4192
  %v4231 = vmul.f32 %v4013, %v4196
  %v4232 = vmul.f32 %v4015, %v4196
  %v4233 = vmul.f32 %v4017, %v4200
  %v4234 = vmul.f32 %v4019, %v4200
  %v4235 = vmul.f32 %v4021, %v4204
  %v4236 = vmul.f32 %v4023, %v4204
  %v4237 = vmul.f32 %v4025, %v4208
  %v4238 = vmul.f32 %v4027, %v4208
  %v4239 = vmul.f32 %v4029, %v4212
  %v4240 = vmul.f32 %v4031, %v4212
  %v4241 = vmul.f32 %v4033, %v4216
  %v4242 = vmul.f32 %v4035, %v4216
  %v4243 = vmul.f32 %v4037, %v4220
  %v4244 = vmul.f32 %v4039, %v4220
  %4246 = vset.pattern.permute.xlu0 0
  %4247 = vperm.xlu0 %4246, %v4229
  %v4248 = vpop.permute.xlu0 %4247
  %4251 = vset.pattern.permute.xlu0 0
  %4252 = vperm.xlu0 %4251, %v4230
  %v4253 = vpop.permute.xlu0 %4252
  %4256 = vset.pattern.permute.xlu0 0
  %4257 = vperm.xlu0 %4256, %v4231
  %v4258 = vpop.permute.xlu0 %4257
  %4261 = vset.pattern.permute.xlu0 0
  %4262 = vperm.xlu0 %4261, %v4232
  %v4263 = vpop.permute.xlu0 %4262
  %4266 = vset.pattern.permute.xlu0 0
  %4267 = vperm.xlu0 %4266, %v4233
  %v4268 = vpop.permute.xlu0 %4267
  %4271 = vset.pattern.permute.xlu0 0
  %4272 = vperm.xlu0 %4271, %v4234
  %v4273 = vpop.permute.xlu0 %4272
  %4276 = vset.pattern.permute.xlu0 0
  %4277 = vperm.xlu0 %4276, %v4235
  %v4278 = vpop.permute.xlu0 %4277
  %4281 = vset.pattern.permute.xlu0 0
  %4282 = vperm.xlu0 %4281, %v4236
  %v4283 = vpop.permute.xlu0 %4282
  %4286 = vset.pattern.permute.xlu0 0
  %4287 = vperm.xlu0 %4286, %v4237
  %v4288 = vpop.permute.xlu0 %4287
  %4291 = vset.pattern.permute.xlu0 0
  %4292 = vperm.xlu0 %4291, %v4238
  %v4293 = vpop.permute.xlu0 %4292
  %4296 = vset.pattern.permute.xlu0 0
  %4297 = vperm.xlu0 %4296, %v4239
  %v4298 = vpop.permute.xlu0 %4297
  %4301 = vset.pattern.permute.xlu0 0
  %4302 = vperm.xlu0 %4301, %v4240
  %v4303 = vpop.permute.xlu0 %4302
  %4306 = vset.pattern.permute.xlu0 0
  %4307 = vperm.xlu0 %4306, %v4241
  %v4308 = vpop.permute.xlu0 %4307
  %4311 = vset.pattern.permute.xlu0 0
  %4312 = vperm.xlu0 %4311, %v4242
  %v4313 = vpop.permute.xlu0 %4312
  %4316 = vset.pattern.permute.xlu0 0
  %4317 = vperm.xlu0 %4316, %v4243
  %v4318 = vpop.permute.xlu0 %4317
  %4321 = vset.pattern.permute.xlu0 0
  %4322 = vperm.xlu0 %4321, %v4244
  %v4323 = vpop.permute.xlu0 %4322
  %v4325 = vmul.f32 %v4248, %v3174
  %v4326 = vmul.f32 %v4253, %v3175
  %v4327 = vmul.f32 %v4258, %v3178
  %v4328 = vmul.f32 %v4263, %v3179
  %v4329 = vmul.f32 %v4268, %v3182
  %v4330 = vmul.f32 %v4273, %v3183
  %v4331 = vmul.f32 %v4278, %v3186
  %v4332 = vmul.f32 %v4283, %v3187
  %v4333 = vmul.f32 %v4288, %v3190
  %v4334 = vmul.f32 %v4293, %v3191
  %v4335 = vmul.f32 %v4298, %v3194
  %v4336 = vmul.f32 %v4303, %v3195
  %v4337 = vmul.f32 %v4308, %v3198
  %v4338 = vmul.f32 %v4313, %v3199
  %v4339 = vmul.f32 %v4318, %v3202
  %v4340 = vmul.f32 %v4323, %v3203
  %v4341 = vsel %vm187, %v4325, 0.0
  %v4342 = vsel %vm187, %v4326, 0.0
  %v4343 = vadd.f32 %v4341, %v4342
  %v4344 = vrot.slane %v4343, 4
  %v4345 = vadd.f32 %v4343, %v4344
  %v4346 = vrot.slane %v4345, 2
  %v4347 = vadd.f32 %v4345, %v4346
  %v4348 = vrot.slane %v4347, 1
  %v4349 = vadd.f32 %v4347, %v4348
  %v4350 = vsel %vm187, %v4327, 0.0
  %v4351 = vsel %vm187, %v4328, 0.0
  %v4352 = vadd.f32 %v4350, %v4351
  %v4353 = vrot.slane %v4352, 4
  %v4354 = vadd.f32 %v4352, %v4353
  %v4355 = vrot.slane %v4354, 2
  %v4356 = vadd.f32 %v4354, %v4355
  %v4357 = vrot.slane %v4356, 1
  %v4358 = vadd.f32 %v4356, %v4357
  %v4359 = vsel %vm187, %v4329, 0.0
  %v4360 = vsel %vm187, %v4330, 0.0
  %v4361 = vadd.f32 %v4359, %v4360
  %v4362 = vrot.slane %v4361, 4
  %v4363 = vadd.f32 %v4361, %v4362
  %v4364 = vrot.slane %v4363, 2
  %v4365 = vadd.f32 %v4363, %v4364
  %v4366 = vrot.slane %v4365, 1
  %v4367 = vadd.f32 %v4365, %v4366
  %v4368 = vsel %vm187, %v4331, 0.0
  %v4369 = vsel %vm187, %v4332, 0.0
  %v4370 = vadd.f32 %v4368, %v4369
  %v4371 = vrot.slane %v4370, 4
  %v4372 = vadd.f32 %v4370, %v4371
  %v4373 = vrot.slane %v4372, 2
  %v4374 = vadd.f32 %v4372, %v4373
  %v4375 = vrot.slane %v4374, 1
  %v4376 = vadd.f32 %v4374, %v4375
  %v4377 = vsel %vm187, %v4333, 0.0
  %v4378 = vsel %vm187, %v4334, 0.0
  %v4379 = vadd.f32 %v4377, %v4378
  %v4380 = vrot.slane %v4379, 4
  %v4381 = vadd.f32 %v4379, %v4380
  %v4382 = vrot.slane %v4381, 2
  %v4383 = vadd.f32 %v4381, %v4382
  %v4384 = vrot.slane %v4383, 1
  %v4385 = vadd.f32 %v4383, %v4384
  %v4386 = vsel %vm187, %v4335, 0.0
  %v4387 = vsel %vm187, %v4336, 0.0
  %v4388 = vadd.f32 %v4386, %v4387
  %v4389 = vrot.slane %v4388, 4
  %v4390 = vadd.f32 %v4388, %v4389
  %v4391 = vrot.slane %v4390, 2
  %v4392 = vadd.f32 %v4390, %v4391
  %v4393 = vrot.slane %v4392, 1
  %v4394 = vadd.f32 %v4392, %v4393
  %v4395 = vsel %vm187, %v4337, 0.0
  %v4396 = vsel %vm187, %v4338, 0.0
  %v4397 = vadd.f32 %v4395, %v4396
  %v4398 = vrot.slane %v4397, 4
  %v4399 = vadd.f32 %v4397, %v4398
  %v4400 = vrot.slane %v4399, 2
  %v4401 = vadd.f32 %v4399, %v4400
  %v4402 = vrot.slane %v4401, 1
  %v4403 = vadd.f32 %v4401, %v4402
  %v4404 = vsel %vm187, %v4339, 0.0
  %v4405 = vsel %vm187, %v4340, 0.0
  %v4406 = vadd.f32 %v4404, %v4405
  %v4407 = vrot.slane %v4406, 4
  %v4408 = vadd.f32 %v4406, %v4407
  %v4409 = vrot.slane %v4408, 2
  %v4410 = vadd.f32 %v4408, %v4409
  %v4411 = vrot.slane %v4410, 1
  %v4412 = vadd.f32 %v4410, %v4411
  %4421 = vrot.lane.b32.xlu0 %v4349, 64
  %v4422 = vpop.permute.xlu0 %4421
  %4423 = vrot.lane.b32.xlu0 %v4358, 64
  %v4424 = vpop.permute.xlu0 %4423
  %4425 = vrot.lane.b32.xlu0 %v4367, 64
  %v4426 = vpop.permute.xlu0 %4425
  %4427 = vrot.lane.b32.xlu0 %v4376, 64
  %v4428 = vpop.permute.xlu0 %4427
  %4429 = vrot.lane.b32.xlu0 %v4385, 64
  %v4430 = vpop.permute.xlu0 %4429
  %4431 = vrot.lane.b32.xlu0 %v4394, 64
  %v4432 = vpop.permute.xlu0 %4431
  %4433 = vrot.lane.b32.xlu0 %v4403, 64
  %v4434 = vpop.permute.xlu0 %4433
  %4435 = vrot.lane.b32.xlu0 %v4412, 64
  %v4436 = vpop.permute.xlu0 %4435
  %v4445 = vadd.f32 %v2828, %v4422
  %v4446 = vadd.f32 %v2829, %v4424
  %v4447 = vadd.f32 %v2830, %v4426
  %v4448 = vadd.f32 %v2831, %v4428
  %v4449 = vadd.f32 %v2832, %v4430
  %v4450 = vadd.f32 %v2833, %v4432
  %v4451 = vadd.f32 %v2834, %v4434
  %v4452 = vadd.f32 %v2835, %v4436
  %v4453 = vlaneseq
  %v4454 = vshrl.u32 %v4453, 7
  %v4455 = vsub.s32 7, %v4454
  %v4456 = vrot.slane %v4445, %v4455
  %v4457 = vlaneseq
  %v4458 = vshrl.u32 %v4457, 7
  %v4459 = vsub.s32 7, %v4458
  %v4460 = vrot.slane %v4446, %v4459
  %v4461 = vlaneseq
  %v4462 = vshrl.u32 %v4461, 7
  %v4463 = vsub.s32 7, %v4462
  %v4464 = vrot.slane %v4447, %v4463
  %v4465 = vlaneseq
  %v4466 = vshrl.u32 %v4465, 7
  %v4467 = vsub.s32 7, %v4466
  %v4468 = vrot.slane %v4448, %v4467
  %v4469 = vlaneseq
  %v4470 = vshrl.u32 %v4469, 7
  %v4471 = vsub.s32 7, %v4470
  %v4472 = vrot.slane %v4449, %v4471
  %v4473 = vlaneseq
  %v4474 = vshrl.u32 %v4473, 7
  %v4475 = vsub.s32 7, %v4474
  %v4476 = vrot.slane %v4450, %v4475
  %v4477 = vlaneseq
  %v4478 = vshrl.u32 %v4477, 7
  %v4479 = vsub.s32 7, %v4478
  %v4480 = vrot.slane %v4451, %v4479
  %v4481 = vlaneseq
  %v4482 = vshrl.u32 %v4481, 7
  %v4483 = vsub.s32 7, %v4482
  %v4484 = vrot.slane %v4452, %v4483
  %v4485 = vmul.f32 %v4456, %v3488
  %v4486 = vmul.f32 %v4456, %v3490
  %v4487 = vmul.f32 %v4460, %v3492
  %v4488 = vmul.f32 %v4460, %v3494
  %v4489 = vmul.f32 %v4464, %v3496
  %v4490 = vmul.f32 %v4464, %v3498
  %v4491 = vmul.f32 %v4468, %v3500
  %v4492 = vmul.f32 %v4468, %v3502
  %v4493 = vmul.f32 %v4472, %v3504
  %v4494 = vmul.f32 %v4472, %v3506
  %v4495 = vmul.f32 %v4476, %v3508
  %v4496 = vmul.f32 %v4476, %v3510
  %v4497 = vmul.f32 %v4480, %v3512
  %v4498 = vmul.f32 %v4480, %v3514
  %v4499 = vmul.f32 %v4484, %v3516
  %v4500 = vmul.f32 %v4484, %v3518
  %4517 = vrot.lane.b32.xlu0 %v4485, 64
  %v4518 = vpop.permute.xlu0 %4517
  %4519 = vrot.lane.b32.xlu0 %v4486, 64
  %v4520 = vpop.permute.xlu0 %4519
  %4521 = vrot.lane.b32.xlu0 %v4487, 64
  %v4522 = vpop.permute.xlu0 %4521
  %4523 = vrot.lane.b32.xlu0 %v4488, 64
  %v4524 = vpop.permute.xlu0 %4523
  %4525 = vrot.lane.b32.xlu0 %v4489, 64
  %v4526 = vpop.permute.xlu0 %4525
  %4527 = vrot.lane.b32.xlu0 %v4490, 64
  %v4528 = vpop.permute.xlu0 %4527
  %4529 = vrot.lane.b32.xlu0 %v4491, 64
  %v4530 = vpop.permute.xlu0 %4529
  %4531 = vrot.lane.b32.xlu0 %v4492, 64
  %v4532 = vpop.permute.xlu0 %4531
  %4533 = vrot.lane.b32.xlu0 %v4493, 64
  %v4534 = vpop.permute.xlu0 %4533
  %4535 = vrot.lane.b32.xlu0 %v4494, 64
  %v4536 = vpop.permute.xlu0 %4535
  %4537 = vrot.lane.b32.xlu0 %v4495, 64
  %v4538 = vpop.permute.xlu0 %4537
  %4539 = vrot.lane.b32.xlu0 %v4496, 64
  %v4540 = vpop.permute.xlu0 %4539
  %4541 = vrot.lane.b32.xlu0 %v4497, 64
  %v4542 = vpop.permute.xlu0 %4541
  %4543 = vrot.lane.b32.xlu0 %v4498, 64
  %v4544 = vpop.permute.xlu0 %4543
  %4545 = vrot.lane.b32.xlu0 %v4499, 64
  %v4546 = vpop.permute.xlu0 %4545
  %4547 = vrot.lane.b32.xlu0 %v4500, 64
  %v4548 = vpop.permute.xlu0 %4547
  %v4565 = vsel %vm187, %v4518, 0.0
  %4566 = vadd.xlane.f32.xlu0 %v4565
  %v4567 = vpop.xlane.xlu0 %4566
  %v4568 = vsel %vm187, %v4520, 0.0
  %4569 = vadd.xlane.f32.xlu0 %v4568
  %v4570 = vpop.xlane.xlu0 %4569
  %v4571 = vsel %vm187, %v4522, 0.0
  %4572 = vadd.xlane.f32.xlu0 %v4571
  %v4573 = vpop.xlane.xlu0 %4572
  %v4574 = vsel %vm187, %v4524, 0.0
  %4575 = vadd.xlane.f32.xlu0 %v4574
  %v4576 = vpop.xlane.xlu0 %4575
  %v4577 = vsel %vm187, %v4526, 0.0
  %4578 = vadd.xlane.f32.xlu0 %v4577
  %v4579 = vpop.xlane.xlu0 %4578
  %v4580 = vsel %vm187, %v4528, 0.0
  %4581 = vadd.xlane.f32.xlu0 %v4580
  %v4582 = vpop.xlane.xlu0 %4581
  %v4583 = vsel %vm187, %v4530, 0.0
  %4584 = vadd.xlane.f32.xlu0 %v4583
  %v4585 = vpop.xlane.xlu0 %4584
  %v4586 = vsel %vm187, %v4532, 0.0
  %4587 = vadd.xlane.f32.xlu0 %v4586
  %v4588 = vpop.xlane.xlu0 %4587
  %v4589 = vsel %vm187, %v4534, 0.0
  %4590 = vadd.xlane.f32.xlu0 %v4589
  %v4591 = vpop.xlane.xlu0 %4590
  %v4592 = vsel %vm187, %v4536, 0.0
  %4593 = vadd.xlane.f32.xlu0 %v4592
  %v4594 = vpop.xlane.xlu0 %4593
  %v4595 = vsel %vm187, %v4538, 0.0
  %4596 = vadd.xlane.f32.xlu0 %v4595
  %v4597 = vpop.xlane.xlu0 %4596
  %v4598 = vsel %vm187, %v4540, 0.0
  %4599 = vadd.xlane.f32.xlu0 %v4598
  %v4600 = vpop.xlane.xlu0 %4599
  %v4601 = vsel %vm187, %v4542, 0.0
  %4602 = vadd.xlane.f32.xlu0 %v4601
  %v4603 = vpop.xlane.xlu0 %4602
  %v4604 = vsel %vm187, %v4544, 0.0
  %4605 = vadd.xlane.f32.xlu0 %v4604
  %v4606 = vpop.xlane.xlu0 %4605
  %v4607 = vsel %vm187, %v4546, 0.0
  %4608 = vadd.xlane.f32.xlu0 %v4607
  %v4609 = vpop.xlane.xlu0 %4608
  %v4610 = vsel %vm187, %v4548, 0.0
  %4611 = vadd.xlane.f32.xlu0 %v4610
  %v4612 = vpop.xlane.xlu0 %4611
  %v4613 = vadd.f32 %v4567, %v3670
  %v4614 = vadd.f32 %v4570, %v3674
  %v4615 = vadd.f32 %v4573, %v3681
  %v4616 = vadd.f32 %v4576, %v3685
  %v4617 = vadd.f32 %v4579, %v3692
  %v4618 = vadd.f32 %v4582, %v3696
  %v4619 = vadd.f32 %v4585, %v3703
  %v4620 = vadd.f32 %v4588, %v3707
  %v4621 = vadd.f32 %v4591, %v3714
  %v4622 = vadd.f32 %v4594, %v3718
  %v4623 = vadd.f32 %v4597, %v3725
  %v4624 = vadd.f32 %v4600, %v3729
  %v4625 = vadd.f32 %v4603, %v3736
  %v4626 = vadd.f32 %v4606, %v3740
  %v4627 = vadd.f32 %v4609, %v3747
  %v4628 = vadd.f32 %v4612, %v3751
  %v4629 = vmul.f32 %v4613, 0.17677669
  %v4630 = vmul.f32 %v4614, 0.17677669
  %v4631 = vmul.f32 %v4615, 0.17677669
  %v4632 = vmul.f32 %v4616, 0.17677669
  %v4633 = vmul.f32 %v4617, 0.17677669
  %v4634 = vmul.f32 %v4618, 0.17677669
  %v4635 = vmul.f32 %v4619, 0.17677669
  %v4636 = vmul.f32 %v4620, 0.17677669
  %v4637 = vmul.f32 %v4621, 0.17677669
  %v4638 = vmul.f32 %v4622, 0.17677669
  %v4639 = vmul.f32 %v4623, 0.17677669
  %v4640 = vmul.f32 %v4624, 0.17677669
  %v4641 = vmul.f32 %v4625, 0.17677669
  %v4642 = vmul.f32 %v4626, 0.17677669
  %v4643 = vmul.f32 %v4627, 0.17677669
  %v4644 = vmul.f32 %v4628, 0.17677669
  %4661 = vset.pattern.permute.xlu0 0
  %4662 = vperm.xlu0 %4661, %v4629
  %v4663 = vpop.permute.xlu0 %4662
  %4664 = vset.pattern.permute.xlu0 0
  %4665 = vperm.xlu0 %4664, %v4630
  %v4666 = vpop.permute.xlu0 %4665
  %4667 = vset.pattern.permute.xlu0 0
  %4668 = vperm.xlu0 %4667, %v4631
  %v4669 = vpop.permute.xlu0 %4668
  %4670 = vset.pattern.permute.xlu0 0
  %4671 = vperm.xlu0 %4670, %v4632
  %v4672 = vpop.permute.xlu0 %4671
  %4673 = vset.pattern.permute.xlu0 0
  %4674 = vperm.xlu0 %4673, %v4633
  %v4675 = vpop.permute.xlu0 %4674
  %4676 = vset.pattern.permute.xlu0 0
  %4677 = vperm.xlu0 %4676, %v4634
  %v4678 = vpop.permute.xlu0 %4677
  %4679 = vset.pattern.permute.xlu0 0
  %4680 = vperm.xlu0 %4679, %v4635
  %v4681 = vpop.permute.xlu0 %4680
  %4682 = vset.pattern.permute.xlu0 0
  %4683 = vperm.xlu0 %4682, %v4636
  %v4684 = vpop.permute.xlu0 %4683
  %4685 = vset.pattern.permute.xlu0 0
  %4686 = vperm.xlu0 %4685, %v4637
  %v4687 = vpop.permute.xlu0 %4686
  %4688 = vset.pattern.permute.xlu0 0
  %4689 = vperm.xlu0 %4688, %v4638
  %v4690 = vpop.permute.xlu0 %4689
  %4691 = vset.pattern.permute.xlu0 0
  %4692 = vperm.xlu0 %4691, %v4639
  %v4693 = vpop.permute.xlu0 %4692
  %4694 = vset.pattern.permute.xlu0 0
  %4695 = vperm.xlu0 %4694, %v4640
  %v4696 = vpop.permute.xlu0 %4695
  %4697 = vset.pattern.permute.xlu0 0
  %4698 = vperm.xlu0 %4697, %v4641
  %v4699 = vpop.permute.xlu0 %4698
  %4700 = vset.pattern.permute.xlu0 0
  %4701 = vperm.xlu0 %4700, %v4642
  %v4702 = vpop.permute.xlu0 %4701
  %4703 = vset.pattern.permute.xlu0 0
  %4704 = vperm.xlu0 %4703, %v4643
  %v4705 = vpop.permute.xlu0 %4704
  %4706 = vset.pattern.permute.xlu0 0
  %4707 = vperm.xlu0 %4706, %v4644
  %v4708 = vpop.permute.xlu0 %4707
  %v4709 = vlaneseq
  %v4710 = vshrl.u32 %v4709, 7
  %v4711 = vsub.s32 %v3865, %v4710
  %v4712 = vrot.slane %v4663, %v4711
  %v4713 = vlaneseq
  %v4714 = vshrl.u32 %v4713, 7
  %v4715 = vsub.s32 %v3870, %v4714
  %v4716 = vrot.slane %v4666, %v4715
  %v4717 = vsel %vm3875, %v4716, %v4712
  %v4718 = vlaneseq
  %v4719 = vshrl.u32 %v4718, 7
  %v4720 = vsub.s32 %v3865, %v4719
  %v4721 = vrot.slane %v4669, %v4720
  %v4722 = vlaneseq
  %v4723 = vshrl.u32 %v4722, 7
  %v4724 = vsub.s32 %v3870, %v4723
  %v4725 = vrot.slane %v4672, %v4724
  %v4726 = vsel %vm3875, %v4725, %v4721
  %v4727 = vlaneseq
  %v4728 = vshrl.u32 %v4727, 7
  %v4729 = vsub.s32 %v3865, %v4728
  %v4730 = vrot.slane %v4675, %v4729
  %v4731 = vlaneseq
  %v4732 = vshrl.u32 %v4731, 7
  %v4733 = vsub.s32 %v3870, %v4732
  %v4734 = vrot.slane %v4678, %v4733
  %v4735 = vsel %vm3875, %v4734, %v4730
  %v4736 = vlaneseq
  %v4737 = vshrl.u32 %v4736, 7
  %v4738 = vsub.s32 %v3865, %v4737
  %v4739 = vrot.slane %v4681, %v4738
  %v4740 = vlaneseq
  %v4741 = vshrl.u32 %v4740, 7
  %v4742 = vsub.s32 %v3870, %v4741
  %v4743 = vrot.slane %v4684, %v4742
  %v4744 = vsel %vm3875, %v4743, %v4739
  %v4745 = vlaneseq
  %v4746 = vshrl.u32 %v4745, 7
  %v4747 = vsub.s32 %v3865, %v4746
  %v4748 = vrot.slane %v4687, %v4747
  %v4749 = vlaneseq
  %v4750 = vshrl.u32 %v4749, 7
  %v4751 = vsub.s32 %v3870, %v4750
  %v4752 = vrot.slane %v4690, %v4751
  %v4753 = vsel %vm3875, %v4752, %v4748
  %v4754 = vlaneseq
  %v4755 = vshrl.u32 %v4754, 7
  %v4756 = vsub.s32 %v3865, %v4755
  %v4757 = vrot.slane %v4693, %v4756
  %v4758 = vlaneseq
  %v4759 = vshrl.u32 %v4758, 7
  %v4760 = vsub.s32 %v3870, %v4759
  %v4761 = vrot.slane %v4696, %v4760
  %v4762 = vsel %vm3875, %v4761, %v4757
  %v4763 = vlaneseq
  %v4764 = vshrl.u32 %v4763, 7
  %v4765 = vsub.s32 %v3865, %v4764
  %v4766 = vrot.slane %v4699, %v4765
  %v4767 = vlaneseq
  %v4768 = vshrl.u32 %v4767, 7
  %v4769 = vsub.s32 %v3870, %v4768
  %v4770 = vrot.slane %v4702, %v4769
  %v4771 = vsel %vm3875, %v4770, %v4766
  %v4772 = vlaneseq
  %v4773 = vshrl.u32 %v4772, 7
  %v4774 = vsub.s32 %v3865, %v4773
  %v4775 = vrot.slane %v4705, %v4774
  %v4776 = vlaneseq
  %v4777 = vshrl.u32 %v4776, 7
  %v4778 = vsub.s32 %v3870, %v4777
  %v4779 = vrot.slane %v4708, %v4778
  %v4780 = vsel %vm3875, %v4779, %v4775
  %v4781 = vsel %vm486, %v4726, %v4717
  %v4782 = vsel %vm489, %v4735, %v4781
  %v4783 = vsel %vm492, %v4744, %v4782
  %v4784 = vsel %vm495, %v4753, %v4783
  %v4785 = vsel %vm498, %v4762, %v4784
  %v4786 = vsel %vm501, %v4771, %v4785
  %v4787 = vsel %vm504, %v4780, %v4786
  %v4789 = vsel %vm90, %v4787, -inf
  %4790 = vmax.xlane.f32.xlu0 %v4789
  %v4791 = vpop.xlane.xlu0 %4790
  %v4793 = vlaneseq
  %v4794 = vshrl.u32 %v4793, 7
  %v4795 = vsub.s32 0, %v4794
  %v4796 = vrot.slane %v4791, %v4795
  %v4797 = vlaneseq
  %v4798 = vshrl.u32 %v4797, 7
  %v4799 = vsub.s32 1, %v4798
  %v4800 = vrot.slane %v4791, %v4799
  %v4801 = vlaneseq
  %v4802 = vshrl.u32 %v4801, 7
  %v4803 = vsub.s32 2, %v4802
  %v4804 = vrot.slane %v4791, %v4803
  %v4805 = vlaneseq
  %v4806 = vshrl.u32 %v4805, 7
  %v4807 = vsub.s32 3, %v4806
  %v4808 = vrot.slane %v4791, %v4807
  %v4809 = vlaneseq
  %v4810 = vshrl.u32 %v4809, 7
  %v4811 = vsub.s32 4, %v4810
  %v4812 = vrot.slane %v4791, %v4811
  %v4813 = vlaneseq
  %v4814 = vshrl.u32 %v4813, 7
  %v4815 = vsub.s32 5, %v4814
  %v4816 = vrot.slane %v4791, %v4815
  %v4817 = vlaneseq
  %v4818 = vshrl.u32 %v4817, 7
  %v4819 = vsub.s32 6, %v4818
  %v4820 = vrot.slane %v4791, %v4819
  %v4821 = vlaneseq
  %v4822 = vshrl.u32 %v4821, 7
  %v4823 = vsub.s32 7, %v4822
  %v4824 = vrot.slane %v4791, %v4823
  %v4833 = vsub.f32 %v4629, %v4796
  %v4834 = vsub.f32 %v4630, %v4796
  %v4835 = vsub.f32 %v4631, %v4800
  %v4836 = vsub.f32 %v4632, %v4800
  %v4837 = vsub.f32 %v4633, %v4804
  %v4838 = vsub.f32 %v4634, %v4804
  %v4839 = vsub.f32 %v4635, %v4808
  %v4840 = vsub.f32 %v4636, %v4808
  %v4841 = vsub.f32 %v4637, %v4812
  %v4842 = vsub.f32 %v4638, %v4812
  %v4843 = vsub.f32 %v4639, %v4816
  %v4844 = vsub.f32 %v4640, %v4816
  %v4845 = vsub.f32 %v4641, %v4820
  %v4846 = vsub.f32 %v4642, %v4820
  %v4847 = vsub.f32 %v4643, %v4824
  %v4848 = vsub.f32 %v4644, %v4824
  %v4849 = vmul.f32 %v4833, 1.442695
  %v4850 = vpow.pop %v4849
  %v4851 = vmul.f32 %v4834, 1.442695
  %v4852 = vpow.pop %v4851
  %v4853 = vmul.f32 %v4835, 1.442695
  %v4854 = vpow.pop %v4853
  %v4855 = vmul.f32 %v4836, 1.442695
  %v4856 = vpow.pop %v4855
  %v4857 = vmul.f32 %v4837, 1.442695
  %v4858 = vpow.pop %v4857
  %v4859 = vmul.f32 %v4838, 1.442695
  %v4860 = vpow.pop %v4859
  %v4861 = vmul.f32 %v4839, 1.442695
  %v4862 = vpow.pop %v4861
  %v4863 = vmul.f32 %v4840, 1.442695
  %v4864 = vpow.pop %v4863
  %v4865 = vmul.f32 %v4841, 1.442695
  %v4866 = vpow.pop %v4865
  %v4867 = vmul.f32 %v4842, 1.442695
  %v4868 = vpow.pop %v4867
  %v4869 = vmul.f32 %v4843, 1.442695
  %v4870 = vpow.pop %v4869
  %v4871 = vmul.f32 %v4844, 1.442695
  %v4872 = vpow.pop %v4871
  %v4873 = vmul.f32 %v4845, 1.442695
  %v4874 = vpow.pop %v4873
  %v4875 = vmul.f32 %v4846, 1.442695
  %v4876 = vpow.pop %v4875
  %v4877 = vmul.f32 %v4847, 1.442695
  %v4878 = vpow.pop %v4877
  %v4879 = vmul.f32 %v4848, 1.442695
  %v4880 = vpow.pop %v4879
  %4897 = vset.pattern.permute.xlu0 0
  %4898 = vperm.xlu0 %4897, %v4850
  %v4899 = vpop.permute.xlu0 %4898
  %4900 = vset.pattern.permute.xlu0 0
  %4901 = vperm.xlu0 %4900, %v4852
  %v4902 = vpop.permute.xlu0 %4901
  %4903 = vset.pattern.permute.xlu0 0
  %4904 = vperm.xlu0 %4903, %v4854
  %v4905 = vpop.permute.xlu0 %4904
  %4906 = vset.pattern.permute.xlu0 0
  %4907 = vperm.xlu0 %4906, %v4856
  %v4908 = vpop.permute.xlu0 %4907
  %4909 = vset.pattern.permute.xlu0 0
  %4910 = vperm.xlu0 %4909, %v4858
  %v4911 = vpop.permute.xlu0 %4910
  %4912 = vset.pattern.permute.xlu0 0
  %4913 = vperm.xlu0 %4912, %v4860
  %v4914 = vpop.permute.xlu0 %4913
  %4915 = vset.pattern.permute.xlu0 0
  %4916 = vperm.xlu0 %4915, %v4862
  %v4917 = vpop.permute.xlu0 %4916
  %4918 = vset.pattern.permute.xlu0 0
  %4919 = vperm.xlu0 %4918, %v4864
  %v4920 = vpop.permute.xlu0 %4919
  %4921 = vset.pattern.permute.xlu0 0
  %4922 = vperm.xlu0 %4921, %v4866
  %v4923 = vpop.permute.xlu0 %4922
  %4924 = vset.pattern.permute.xlu0 0
  %4925 = vperm.xlu0 %4924, %v4868
  %v4926 = vpop.permute.xlu0 %4925
  %4927 = vset.pattern.permute.xlu0 0
  %4928 = vperm.xlu0 %4927, %v4870
  %v4929 = vpop.permute.xlu0 %4928
  %4930 = vset.pattern.permute.xlu0 0
  %4931 = vperm.xlu0 %4930, %v4872
  %v4932 = vpop.permute.xlu0 %4931
  %4933 = vset.pattern.permute.xlu0 0
  %4934 = vperm.xlu0 %4933, %v4874
  %v4935 = vpop.permute.xlu0 %4934
  %4936 = vset.pattern.permute.xlu0 0
  %4937 = vperm.xlu0 %4936, %v4876
  %v4938 = vpop.permute.xlu0 %4937
  %4939 = vset.pattern.permute.xlu0 0
  %4940 = vperm.xlu0 %4939, %v4878
  %v4941 = vpop.permute.xlu0 %4940
  %4942 = vset.pattern.permute.xlu0 0
  %4943 = vperm.xlu0 %4942, %v4880
  %v4944 = vpop.permute.xlu0 %4943
  %v4945 = vlaneseq
  %v4946 = vshrl.u32 %v4945, 7
  %v4947 = vsub.s32 %v3865, %v4946
  %v4948 = vrot.slane %v4899, %v4947
  %v4949 = vlaneseq
  %v4950 = vshrl.u32 %v4949, 7
  %v4951 = vsub.s32 %v3870, %v4950
  %v4952 = vrot.slane %v4902, %v4951
  %v4953 = vsel %vm3875, %v4952, %v4948
  %v4954 = vlaneseq
  %v4955 = vshrl.u32 %v4954, 7
  %v4956 = vsub.s32 %v3865, %v4955
  %v4957 = vrot.slane %v4905, %v4956
  %v4958 = vlaneseq
  %v4959 = vshrl.u32 %v4958, 7
  %v4960 = vsub.s32 %v3870, %v4959
  %v4961 = vrot.slane %v4908, %v4960
  %v4962 = vsel %vm3875, %v4961, %v4957
  %v4963 = vlaneseq
  %v4964 = vshrl.u32 %v4963, 7
  %v4965 = vsub.s32 %v3865, %v4964
  %v4966 = vrot.slane %v4911, %v4965
  %v4967 = vlaneseq
  %v4968 = vshrl.u32 %v4967, 7
  %v4969 = vsub.s32 %v3870, %v4968
  %v4970 = vrot.slane %v4914, %v4969
  %v4971 = vsel %vm3875, %v4970, %v4966
  %v4972 = vlaneseq
  %v4973 = vshrl.u32 %v4972, 7
  %v4974 = vsub.s32 %v3865, %v4973
  %v4975 = vrot.slane %v4917, %v4974
  %v4976 = vlaneseq
  %v4977 = vshrl.u32 %v4976, 7
  %v4978 = vsub.s32 %v3870, %v4977
  %v4979 = vrot.slane %v4920, %v4978
  %v4980 = vsel %vm3875, %v4979, %v4975
  %v4981 = vlaneseq
  %v4982 = vshrl.u32 %v4981, 7
  %v4983 = vsub.s32 %v3865, %v4982
  %v4984 = vrot.slane %v4923, %v4983
  %v4985 = vlaneseq
  %v4986 = vshrl.u32 %v4985, 7
  %v4987 = vsub.s32 %v3870, %v4986
  %v4988 = vrot.slane %v4926, %v4987
  %v4989 = vsel %vm3875, %v4988, %v4984
  %v4990 = vlaneseq
  %v4991 = vshrl.u32 %v4990, 7
  %v4992 = vsub.s32 %v3865, %v4991
  %v4993 = vrot.slane %v4929, %v4992
  %v4994 = vlaneseq
  %v4995 = vshrl.u32 %v4994, 7
  %v4996 = vsub.s32 %v3870, %v4995
  %v4997 = vrot.slane %v4932, %v4996
  %v4998 = vsel %vm3875, %v4997, %v4993
  %v4999 = vlaneseq
  %v5000 = vshrl.u32 %v4999, 7
  %v5001 = vsub.s32 %v3865, %v5000
  %v5002 = vrot.slane %v4935, %v5001
  %v5003 = vlaneseq
  %v5004 = vshrl.u32 %v5003, 7
  %v5005 = vsub.s32 %v3870, %v5004
  %v5006 = vrot.slane %v4938, %v5005
  %v5007 = vsel %vm3875, %v5006, %v5002
  %v5008 = vlaneseq
  %v5009 = vshrl.u32 %v5008, 7
  %v5010 = vsub.s32 %v3865, %v5009
  %v5011 = vrot.slane %v4941, %v5010
  %v5012 = vlaneseq
  %v5013 = vshrl.u32 %v5012, 7
  %v5014 = vsub.s32 %v3870, %v5013
  %v5015 = vrot.slane %v4944, %v5014
  %v5016 = vsel %vm3875, %v5015, %v5011
  %v5017 = vsel %vm486, %v4962, %v4953
  %v5018 = vsel %vm489, %v4971, %v5017
  %v5019 = vsel %vm492, %v4980, %v5018
  %v5020 = vsel %vm495, %v4989, %v5019
  %v5021 = vsel %vm498, %v4998, %v5020
  %v5022 = vsel %vm501, %v5007, %v5021
  %v5023 = vsel %vm504, %v5016, %v5022
  %v5025 = vsel %vm90, %v5023, 0.0
  %5026 = vadd.xlane.f32.xlu0 %v5025
  %v5027 = vpop.xlane.xlu0 %5026
  %v5028 = vrcp.pop %v5027
  %v5030 = vlaneseq
  %v5031 = vshrl.u32 %v5030, 7
  %v5032 = vsub.s32 0, %v5031
  %v5033 = vrot.slane %v5028, %v5032
  %v5034 = vlaneseq
  %v5035 = vshrl.u32 %v5034, 7
  %v5036 = vsub.s32 1, %v5035
  %v5037 = vrot.slane %v5028, %v5036
  %v5038 = vlaneseq
  %v5039 = vshrl.u32 %v5038, 7
  %v5040 = vsub.s32 2, %v5039
  %v5041 = vrot.slane %v5028, %v5040
  %v5042 = vlaneseq
  %v5043 = vshrl.u32 %v5042, 7
  %v5044 = vsub.s32 3, %v5043
  %v5045 = vrot.slane %v5028, %v5044
  %v5046 = vlaneseq
  %v5047 = vshrl.u32 %v5046, 7
  %v5048 = vsub.s32 4, %v5047
  %v5049 = vrot.slane %v5028, %v5048
  %v5050 = vlaneseq
  %v5051 = vshrl.u32 %v5050, 7
  %v5052 = vsub.s32 5, %v5051
  %v5053 = vrot.slane %v5028, %v5052
  %v5054 = vlaneseq
  %v5055 = vshrl.u32 %v5054, 7
  %v5056 = vsub.s32 6, %v5055
  %v5057 = vrot.slane %v5028, %v5056
  %v5058 = vlaneseq
  %v5059 = vshrl.u32 %v5058, 7
  %v5060 = vsub.s32 7, %v5059
  %v5061 = vrot.slane %v5028, %v5060
  %v5070 = vmul.f32 %v4850, %v5033
  %v5071 = vmul.f32 %v4852, %v5033
  %v5072 = vmul.f32 %v4854, %v5037
  %v5073 = vmul.f32 %v4856, %v5037
  %v5074 = vmul.f32 %v4858, %v5041
  %v5075 = vmul.f32 %v4860, %v5041
  %v5076 = vmul.f32 %v4862, %v5045
  %v5077 = vmul.f32 %v4864, %v5045
  %v5078 = vmul.f32 %v4866, %v5049
  %v5079 = vmul.f32 %v4868, %v5049
  %v5080 = vmul.f32 %v4870, %v5053
  %v5081 = vmul.f32 %v4872, %v5053
  %v5082 = vmul.f32 %v4874, %v5057
  %v5083 = vmul.f32 %v4876, %v5057
  %v5084 = vmul.f32 %v4878, %v5061
  %v5085 = vmul.f32 %v4880, %v5061
  %5087 = vset.pattern.permute.xlu0 0
  %5088 = vperm.xlu0 %5087, %v5070
  %v5089 = vpop.permute.xlu0 %5088
  %5092 = vset.pattern.permute.xlu0 0
  %5093 = vperm.xlu0 %5092, %v5071
  %v5094 = vpop.permute.xlu0 %5093
  %5097 = vset.pattern.permute.xlu0 0
  %5098 = vperm.xlu0 %5097, %v5072
  %v5099 = vpop.permute.xlu0 %5098
  %5102 = vset.pattern.permute.xlu0 0
  %5103 = vperm.xlu0 %5102, %v5073
  %v5104 = vpop.permute.xlu0 %5103
  %5107 = vset.pattern.permute.xlu0 0
  %5108 = vperm.xlu0 %5107, %v5074
  %v5109 = vpop.permute.xlu0 %5108
  %5112 = vset.pattern.permute.xlu0 0
  %5113 = vperm.xlu0 %5112, %v5075
  %v5114 = vpop.permute.xlu0 %5113
  %5117 = vset.pattern.permute.xlu0 0
  %5118 = vperm.xlu0 %5117, %v5076
  %v5119 = vpop.permute.xlu0 %5118
  %5122 = vset.pattern.permute.xlu0 0
  %5123 = vperm.xlu0 %5122, %v5077
  %v5124 = vpop.permute.xlu0 %5123
  %5127 = vset.pattern.permute.xlu0 0
  %5128 = vperm.xlu0 %5127, %v5078
  %v5129 = vpop.permute.xlu0 %5128
  %5132 = vset.pattern.permute.xlu0 0
  %5133 = vperm.xlu0 %5132, %v5079
  %v5134 = vpop.permute.xlu0 %5133
  %5137 = vset.pattern.permute.xlu0 0
  %5138 = vperm.xlu0 %5137, %v5080
  %v5139 = vpop.permute.xlu0 %5138
  %5142 = vset.pattern.permute.xlu0 0
  %5143 = vperm.xlu0 %5142, %v5081
  %v5144 = vpop.permute.xlu0 %5143
  %5147 = vset.pattern.permute.xlu0 0
  %5148 = vperm.xlu0 %5147, %v5082
  %v5149 = vpop.permute.xlu0 %5148
  %5152 = vset.pattern.permute.xlu0 0
  %5153 = vperm.xlu0 %5152, %v5083
  %v5154 = vpop.permute.xlu0 %5153
  %5157 = vset.pattern.permute.xlu0 0
  %5158 = vperm.xlu0 %5157, %v5084
  %v5159 = vpop.permute.xlu0 %5158
  %5162 = vset.pattern.permute.xlu0 0
  %5163 = vperm.xlu0 %5162, %v5085
  %v5164 = vpop.permute.xlu0 %5163
  %v5166 = vmul.f32 %v5089, %v3174
  %v5167 = vmul.f32 %v5094, %v3175
  %v5168 = vmul.f32 %v5099, %v3178
  %v5169 = vmul.f32 %v5104, %v3179
  %v5170 = vmul.f32 %v5109, %v3182
  %v5171 = vmul.f32 %v5114, %v3183
  %v5172 = vmul.f32 %v5119, %v3186
  %v5173 = vmul.f32 %v5124, %v3187
  %v5174 = vmul.f32 %v5129, %v3190
  %v5175 = vmul.f32 %v5134, %v3191
  %v5176 = vmul.f32 %v5139, %v3194
  %v5177 = vmul.f32 %v5144, %v3195
  %v5178 = vmul.f32 %v5149, %v3198
  %v5179 = vmul.f32 %v5154, %v3199
  %v5180 = vmul.f32 %v5159, %v3202
  %v5181 = vmul.f32 %v5164, %v3203
  %v5182 = vsel %vm187, %v5166, 0.0
  %v5183 = vsel %vm187, %v5167, 0.0
  %v5184 = vadd.f32 %v5182, %v5183
  %v5185 = vrot.slane %v5184, 4
  %v5186 = vadd.f32 %v5184, %v5185
  %v5187 = vrot.slane %v5186, 2
  %v5188 = vadd.f32 %v5186, %v5187
  %v5189 = vrot.slane %v5188, 1
  %v5190 = vadd.f32 %v5188, %v5189
  %v5191 = vsel %vm187, %v5168, 0.0
  %v5192 = vsel %vm187, %v5169, 0.0
  %v5193 = vadd.f32 %v5191, %v5192
  %v5194 = vrot.slane %v5193, 4
  %v5195 = vadd.f32 %v5193, %v5194
  %v5196 = vrot.slane %v5195, 2
  %v5197 = vadd.f32 %v5195, %v5196
  %v5198 = vrot.slane %v5197, 1
  %v5199 = vadd.f32 %v5197, %v5198
  %v5200 = vsel %vm187, %v5170, 0.0
  %v5201 = vsel %vm187, %v5171, 0.0
  %v5202 = vadd.f32 %v5200, %v5201
  %v5203 = vrot.slane %v5202, 4
  %v5204 = vadd.f32 %v5202, %v5203
  %v5205 = vrot.slane %v5204, 2
  %v5206 = vadd.f32 %v5204, %v5205
  %v5207 = vrot.slane %v5206, 1
  %v5208 = vadd.f32 %v5206, %v5207
  %v5209 = vsel %vm187, %v5172, 0.0
  %v5210 = vsel %vm187, %v5173, 0.0
  %v5211 = vadd.f32 %v5209, %v5210
  %v5212 = vrot.slane %v5211, 4
  %v5213 = vadd.f32 %v5211, %v5212
  %v5214 = vrot.slane %v5213, 2
  %v5215 = vadd.f32 %v5213, %v5214
  %v5216 = vrot.slane %v5215, 1
  %v5217 = vadd.f32 %v5215, %v5216
  %v5218 = vsel %vm187, %v5174, 0.0
  %v5219 = vsel %vm187, %v5175, 0.0
  %v5220 = vadd.f32 %v5218, %v5219
  %v5221 = vrot.slane %v5220, 4
  %v5222 = vadd.f32 %v5220, %v5221
  %v5223 = vrot.slane %v5222, 2
  %v5224 = vadd.f32 %v5222, %v5223
  %v5225 = vrot.slane %v5224, 1
  %v5226 = vadd.f32 %v5224, %v5225
  %v5227 = vsel %vm187, %v5176, 0.0
  %v5228 = vsel %vm187, %v5177, 0.0
  %v5229 = vadd.f32 %v5227, %v5228
  %v5230 = vrot.slane %v5229, 4
  %v5231 = vadd.f32 %v5229, %v5230
  %v5232 = vrot.slane %v5231, 2
  %v5233 = vadd.f32 %v5231, %v5232
  %v5234 = vrot.slane %v5233, 1
  %v5235 = vadd.f32 %v5233, %v5234
  %v5236 = vsel %vm187, %v5178, 0.0
  %v5237 = vsel %vm187, %v5179, 0.0
  %v5238 = vadd.f32 %v5236, %v5237
  %v5239 = vrot.slane %v5238, 4
  %v5240 = vadd.f32 %v5238, %v5239
  %v5241 = vrot.slane %v5240, 2
  %v5242 = vadd.f32 %v5240, %v5241
  %v5243 = vrot.slane %v5242, 1
  %v5244 = vadd.f32 %v5242, %v5243
  %v5245 = vsel %vm187, %v5180, 0.0
  %v5246 = vsel %vm187, %v5181, 0.0
  %v5247 = vadd.f32 %v5245, %v5246
  %v5248 = vrot.slane %v5247, 4
  %v5249 = vadd.f32 %v5247, %v5248
  %v5250 = vrot.slane %v5249, 2
  %v5251 = vadd.f32 %v5249, %v5250
  %v5252 = vrot.slane %v5251, 1
  %v5253 = vadd.f32 %v5251, %v5252
  %5262 = vrot.lane.b32.xlu0 %v5190, 64
  %v5263 = vpop.permute.xlu0 %5262
  %5264 = vrot.lane.b32.xlu0 %v5199, 64
  %v5265 = vpop.permute.xlu0 %5264
  %5266 = vrot.lane.b32.xlu0 %v5208, 64
  %v5267 = vpop.permute.xlu0 %5266
  %5268 = vrot.lane.b32.xlu0 %v5217, 64
  %v5269 = vpop.permute.xlu0 %5268
  %5270 = vrot.lane.b32.xlu0 %v5226, 64
  %v5271 = vpop.permute.xlu0 %5270
  %5272 = vrot.lane.b32.xlu0 %v5235, 64
  %v5273 = vpop.permute.xlu0 %5272
  %5274 = vrot.lane.b32.xlu0 %v5244, 64
  %v5275 = vpop.permute.xlu0 %5274
  %5276 = vrot.lane.b32.xlu0 %v5253, 64
  %v5277 = vpop.permute.xlu0 %5276
  %v5286 = vadd.f32 %v4445, %v5263
  %v5287 = vadd.f32 %v4446, %v5265
  %v5288 = vadd.f32 %v4447, %v5267
  %v5289 = vadd.f32 %v4448, %v5269
  %v5290 = vadd.f32 %v4449, %v5271
  %v5291 = vadd.f32 %v4450, %v5273
  %v5292 = vadd.f32 %v4451, %v5275
  %v5293 = vadd.f32 %v4452, %v5277
  %v5294 = vlaneseq
  %v5295 = vshrl.u32 %v5294, 7
  %v5296 = vsub.s32 7, %v5295
  %v5297 = vrot.slane %v5286, %v5296
  %v5298 = vlaneseq
  %v5299 = vshrl.u32 %v5298, 7
  %v5300 = vsub.s32 7, %v5299
  %v5301 = vrot.slane %v5287, %v5300
  %v5302 = vlaneseq
  %v5303 = vshrl.u32 %v5302, 7
  %v5304 = vsub.s32 7, %v5303
  %v5305 = vrot.slane %v5288, %v5304
  %v5306 = vlaneseq
  %v5307 = vshrl.u32 %v5306, 7
  %v5308 = vsub.s32 7, %v5307
  %v5309 = vrot.slane %v5289, %v5308
  %v5310 = vlaneseq
  %v5311 = vshrl.u32 %v5310, 7
  %v5312 = vsub.s32 7, %v5311
  %v5313 = vrot.slane %v5290, %v5312
  %v5314 = vlaneseq
  %v5315 = vshrl.u32 %v5314, 7
  %v5316 = vsub.s32 7, %v5315
  %v5317 = vrot.slane %v5291, %v5316
  %v5318 = vlaneseq
  %v5319 = vshrl.u32 %v5318, 7
  %v5320 = vsub.s32 7, %v5319
  %v5321 = vrot.slane %v5292, %v5320
  %v5322 = vlaneseq
  %v5323 = vshrl.u32 %v5322, 7
  %v5324 = vsub.s32 7, %v5323
  %v5325 = vrot.slane %v5293, %v5324
  %v5326 = vmul.f32 %v5297, %v3488
  %v5327 = vmul.f32 %v5297, %v3490
  %v5328 = vmul.f32 %v5301, %v3492
  %v5329 = vmul.f32 %v5301, %v3494
  %v5330 = vmul.f32 %v5305, %v3496
  %v5331 = vmul.f32 %v5305, %v3498
  %v5332 = vmul.f32 %v5309, %v3500
  %v5333 = vmul.f32 %v5309, %v3502
  %v5334 = vmul.f32 %v5313, %v3504
  %v5335 = vmul.f32 %v5313, %v3506
  %v5336 = vmul.f32 %v5317, %v3508
  %v5337 = vmul.f32 %v5317, %v3510
  %v5338 = vmul.f32 %v5321, %v3512
  %v5339 = vmul.f32 %v5321, %v3514
  %v5340 = vmul.f32 %v5325, %v3516
  %v5341 = vmul.f32 %v5325, %v3518
  %5358 = vrot.lane.b32.xlu0 %v5326, 64
  %v5359 = vpop.permute.xlu0 %5358
  %5360 = vrot.lane.b32.xlu0 %v5327, 64
  %v5361 = vpop.permute.xlu0 %5360
  %5362 = vrot.lane.b32.xlu0 %v5328, 64
  %v5363 = vpop.permute.xlu0 %5362
  %5364 = vrot.lane.b32.xlu0 %v5329, 64
  %v5365 = vpop.permute.xlu0 %5364
  %5366 = vrot.lane.b32.xlu0 %v5330, 64
  %v5367 = vpop.permute.xlu0 %5366
  %5368 = vrot.lane.b32.xlu0 %v5331, 64
  %v5369 = vpop.permute.xlu0 %5368
  %5370 = vrot.lane.b32.xlu0 %v5332, 64
  %v5371 = vpop.permute.xlu0 %5370
  %5372 = vrot.lane.b32.xlu0 %v5333, 64
  %v5373 = vpop.permute.xlu0 %5372
  %5374 = vrot.lane.b32.xlu0 %v5334, 64
  %v5375 = vpop.permute.xlu0 %5374
  %5376 = vrot.lane.b32.xlu0 %v5335, 64
  %v5377 = vpop.permute.xlu0 %5376
  %5378 = vrot.lane.b32.xlu0 %v5336, 64
  %v5379 = vpop.permute.xlu0 %5378
  %5380 = vrot.lane.b32.xlu0 %v5337, 64
  %v5381 = vpop.permute.xlu0 %5380
  %5382 = vrot.lane.b32.xlu0 %v5338, 64
  %v5383 = vpop.permute.xlu0 %5382
  %5384 = vrot.lane.b32.xlu0 %v5339, 64
  %v5385 = vpop.permute.xlu0 %5384
  %5386 = vrot.lane.b32.xlu0 %v5340, 64
  %v5387 = vpop.permute.xlu0 %5386
  %5388 = vrot.lane.b32.xlu0 %v5341, 64
  %v5389 = vpop.permute.xlu0 %5388
  %v5406 = vsel %vm187, %v5359, 0.0
  %5407 = vadd.xlane.f32.xlu0 %v5406
  %v5408 = vpop.xlane.xlu0 %5407
  %v5409 = vsel %vm187, %v5361, 0.0
  %5410 = vadd.xlane.f32.xlu0 %v5409
  %v5411 = vpop.xlane.xlu0 %5410
  %v5412 = vsel %vm187, %v5363, 0.0
  %5413 = vadd.xlane.f32.xlu0 %v5412
  %v5414 = vpop.xlane.xlu0 %5413
  %v5415 = vsel %vm187, %v5365, 0.0
  %5416 = vadd.xlane.f32.xlu0 %v5415
  %v5417 = vpop.xlane.xlu0 %5416
  %v5418 = vsel %vm187, %v5367, 0.0
  %5419 = vadd.xlane.f32.xlu0 %v5418
  %v5420 = vpop.xlane.xlu0 %5419
  %v5421 = vsel %vm187, %v5369, 0.0
  %5422 = vadd.xlane.f32.xlu0 %v5421
  %v5423 = vpop.xlane.xlu0 %5422
  %v5424 = vsel %vm187, %v5371, 0.0
  %5425 = vadd.xlane.f32.xlu0 %v5424
  %v5426 = vpop.xlane.xlu0 %5425
  %v5427 = vsel %vm187, %v5373, 0.0
  %5428 = vadd.xlane.f32.xlu0 %v5427
  %v5429 = vpop.xlane.xlu0 %5428
  %v5430 = vsel %vm187, %v5375, 0.0
  %5431 = vadd.xlane.f32.xlu0 %v5430
  %v5432 = vpop.xlane.xlu0 %5431
  %v5433 = vsel %vm187, %v5377, 0.0
  %5434 = vadd.xlane.f32.xlu0 %v5433
  %v5435 = vpop.xlane.xlu0 %5434
  %v5436 = vsel %vm187, %v5379, 0.0
  %5437 = vadd.xlane.f32.xlu0 %v5436
  %v5438 = vpop.xlane.xlu0 %5437
  %v5439 = vsel %vm187, %v5381, 0.0
  %5440 = vadd.xlane.f32.xlu0 %v5439
  %v5441 = vpop.xlane.xlu0 %5440
  %v5442 = vsel %vm187, %v5383, 0.0
  %5443 = vadd.xlane.f32.xlu0 %v5442
  %v5444 = vpop.xlane.xlu0 %5443
  %v5445 = vsel %vm187, %v5385, 0.0
  %5446 = vadd.xlane.f32.xlu0 %v5445
  %v5447 = vpop.xlane.xlu0 %5446
  %v5448 = vsel %vm187, %v5387, 0.0
  %5449 = vadd.xlane.f32.xlu0 %v5448
  %v5450 = vpop.xlane.xlu0 %5449
  %v5451 = vsel %vm187, %v5389, 0.0
  %5452 = vadd.xlane.f32.xlu0 %v5451
  %v5453 = vpop.xlane.xlu0 %5452
  %v5454 = vadd.f32 %v5408, %v3670
  %v5455 = vadd.f32 %v5411, %v3674
  %v5456 = vadd.f32 %v5414, %v3681
  %v5457 = vadd.f32 %v5417, %v3685
  %v5458 = vadd.f32 %v5420, %v3692
  %v5459 = vadd.f32 %v5423, %v3696
  %v5460 = vadd.f32 %v5426, %v3703
  %v5461 = vadd.f32 %v5429, %v3707
  %v5462 = vadd.f32 %v5432, %v3714
  %v5463 = vadd.f32 %v5435, %v3718
  %v5464 = vadd.f32 %v5438, %v3725
  %v5465 = vadd.f32 %v5441, %v3729
  %v5466 = vadd.f32 %v5444, %v3736
  %v5467 = vadd.f32 %v5447, %v3740
  %v5468 = vadd.f32 %v5450, %v3747
  %v5469 = vadd.f32 %v5453, %v3751
  %v5470 = vmul.f32 %v5454, 0.17677669
  %v5471 = vmul.f32 %v5455, 0.17677669
  %v5472 = vmul.f32 %v5456, 0.17677669
  %v5473 = vmul.f32 %v5457, 0.17677669
  %v5474 = vmul.f32 %v5458, 0.17677669
  %v5475 = vmul.f32 %v5459, 0.17677669
  %v5476 = vmul.f32 %v5460, 0.17677669
  %v5477 = vmul.f32 %v5461, 0.17677669
  %v5478 = vmul.f32 %v5462, 0.17677669
  %v5479 = vmul.f32 %v5463, 0.17677669
  %v5480 = vmul.f32 %v5464, 0.17677669
  %v5481 = vmul.f32 %v5465, 0.17677669
  %v5482 = vmul.f32 %v5466, 0.17677669
  %v5483 = vmul.f32 %v5467, 0.17677669
  %v5484 = vmul.f32 %v5468, 0.17677669
  %v5485 = vmul.f32 %v5469, 0.17677669
  %5502 = vset.pattern.permute.xlu0 0
  %5503 = vperm.xlu0 %5502, %v5470
  %v5504 = vpop.permute.xlu0 %5503
  %5505 = vset.pattern.permute.xlu0 0
  %5506 = vperm.xlu0 %5505, %v5471
  %v5507 = vpop.permute.xlu0 %5506
  %5508 = vset.pattern.permute.xlu0 0
  %5509 = vperm.xlu0 %5508, %v5472
  %v5510 = vpop.permute.xlu0 %5509
  %5511 = vset.pattern.permute.xlu0 0
  %5512 = vperm.xlu0 %5511, %v5473
  %v5513 = vpop.permute.xlu0 %5512
  %5514 = vset.pattern.permute.xlu0 0
  %5515 = vperm.xlu0 %5514, %v5474
  %v5516 = vpop.permute.xlu0 %5515
  %5517 = vset.pattern.permute.xlu0 0
  %5518 = vperm.xlu0 %5517, %v5475
  %v5519 = vpop.permute.xlu0 %5518
  %5520 = vset.pattern.permute.xlu0 0
  %5521 = vperm.xlu0 %5520, %v5476
  %v5522 = vpop.permute.xlu0 %5521
  %5523 = vset.pattern.permute.xlu0 0
  %5524 = vperm.xlu0 %5523, %v5477
  %v5525 = vpop.permute.xlu0 %5524
  %5526 = vset.pattern.permute.xlu0 0
  %5527 = vperm.xlu0 %5526, %v5478
  %v5528 = vpop.permute.xlu0 %5527
  %5529 = vset.pattern.permute.xlu0 0
  %5530 = vperm.xlu0 %5529, %v5479
  %v5531 = vpop.permute.xlu0 %5530
  %5532 = vset.pattern.permute.xlu0 0
  %5533 = vperm.xlu0 %5532, %v5480
  %v5534 = vpop.permute.xlu0 %5533
  %5535 = vset.pattern.permute.xlu0 0
  %5536 = vperm.xlu0 %5535, %v5481
  %v5537 = vpop.permute.xlu0 %5536
  %5538 = vset.pattern.permute.xlu0 0
  %5539 = vperm.xlu0 %5538, %v5482
  %v5540 = vpop.permute.xlu0 %5539
  %5541 = vset.pattern.permute.xlu0 0
  %5542 = vperm.xlu0 %5541, %v5483
  %v5543 = vpop.permute.xlu0 %5542
  %5544 = vset.pattern.permute.xlu0 0
  %5545 = vperm.xlu0 %5544, %v5484
  %v5546 = vpop.permute.xlu0 %5545
  %5547 = vset.pattern.permute.xlu0 0
  %5548 = vperm.xlu0 %5547, %v5485
  %v5549 = vpop.permute.xlu0 %5548
  %v5550 = vlaneseq
  %v5551 = vshrl.u32 %v5550, 7
  %v5552 = vsub.s32 %v3865, %v5551
  %v5553 = vrot.slane %v5504, %v5552
  %v5554 = vlaneseq
  %v5555 = vshrl.u32 %v5554, 7
  %v5556 = vsub.s32 %v3870, %v5555
  %v5557 = vrot.slane %v5507, %v5556
  %v5558 = vsel %vm3875, %v5557, %v5553
  %v5559 = vlaneseq
  %v5560 = vshrl.u32 %v5559, 7
  %v5561 = vsub.s32 %v3865, %v5560
  %v5562 = vrot.slane %v5510, %v5561
  %v5563 = vlaneseq
  %v5564 = vshrl.u32 %v5563, 7
  %v5565 = vsub.s32 %v3870, %v5564
  %v5566 = vrot.slane %v5513, %v5565
  %v5567 = vsel %vm3875, %v5566, %v5562
  %v5568 = vlaneseq
  %v5569 = vshrl.u32 %v5568, 7
  %v5570 = vsub.s32 %v3865, %v5569
  %v5571 = vrot.slane %v5516, %v5570
  %v5572 = vlaneseq
  %v5573 = vshrl.u32 %v5572, 7
  %v5574 = vsub.s32 %v3870, %v5573
  %v5575 = vrot.slane %v5519, %v5574
  %v5576 = vsel %vm3875, %v5575, %v5571
  %v5577 = vlaneseq
  %v5578 = vshrl.u32 %v5577, 7
  %v5579 = vsub.s32 %v3865, %v5578
  %v5580 = vrot.slane %v5522, %v5579
  %v5581 = vlaneseq
  %v5582 = vshrl.u32 %v5581, 7
  %v5583 = vsub.s32 %v3870, %v5582
  %v5584 = vrot.slane %v5525, %v5583
  %v5585 = vsel %vm3875, %v5584, %v5580
  %v5586 = vlaneseq
  %v5587 = vshrl.u32 %v5586, 7
  %v5588 = vsub.s32 %v3865, %v5587
  %v5589 = vrot.slane %v5528, %v5588
  %v5590 = vlaneseq
  %v5591 = vshrl.u32 %v5590, 7
  %v5592 = vsub.s32 %v3870, %v5591
  %v5593 = vrot.slane %v5531, %v5592
  %v5594 = vsel %vm3875, %v5593, %v5589
  %v5595 = vlaneseq
  %v5596 = vshrl.u32 %v5595, 7
  %v5597 = vsub.s32 %v3865, %v5596
  %v5598 = vrot.slane %v5534, %v5597
  %v5599 = vlaneseq
  %v5600 = vshrl.u32 %v5599, 7
  %v5601 = vsub.s32 %v3870, %v5600
  %v5602 = vrot.slane %v5537, %v5601
  %v5603 = vsel %vm3875, %v5602, %v5598
  %v5604 = vlaneseq
  %v5605 = vshrl.u32 %v5604, 7
  %v5606 = vsub.s32 %v3865, %v5605
  %v5607 = vrot.slane %v5540, %v5606
  %v5608 = vlaneseq
  %v5609 = vshrl.u32 %v5608, 7
  %v5610 = vsub.s32 %v3870, %v5609
  %v5611 = vrot.slane %v5543, %v5610
  %v5612 = vsel %vm3875, %v5611, %v5607
  %v5613 = vlaneseq
  %v5614 = vshrl.u32 %v5613, 7
  %v5615 = vsub.s32 %v3865, %v5614
  %v5616 = vrot.slane %v5546, %v5615
  %v5617 = vlaneseq
  %v5618 = vshrl.u32 %v5617, 7
  %v5619 = vsub.s32 %v3870, %v5618
  %v5620 = vrot.slane %v5549, %v5619
  %v5621 = vsel %vm3875, %v5620, %v5616
  %v5622 = vsel %vm486, %v5567, %v5558
  %v5623 = vsel %vm489, %v5576, %v5622
  %v5624 = vsel %vm492, %v5585, %v5623
  %v5625 = vsel %vm495, %v5594, %v5624
  %v5626 = vsel %vm498, %v5603, %v5625
  %v5627 = vsel %vm501, %v5612, %v5626
  %v5628 = vsel %vm504, %v5621, %v5627
  %v5630 = vsel %vm90, %v5628, -inf
  %5631 = vmax.xlane.f32.xlu0 %v5630
  %v5632 = vpop.xlane.xlu0 %5631
  %v5634 = vlaneseq
  %v5635 = vshrl.u32 %v5634, 7
  %v5636 = vsub.s32 0, %v5635
  %v5637 = vrot.slane %v5632, %v5636
  %v5638 = vlaneseq
  %v5639 = vshrl.u32 %v5638, 7
  %v5640 = vsub.s32 1, %v5639
  %v5641 = vrot.slane %v5632, %v5640
  %v5642 = vlaneseq
  %v5643 = vshrl.u32 %v5642, 7
  %v5644 = vsub.s32 2, %v5643
  %v5645 = vrot.slane %v5632, %v5644
  %v5646 = vlaneseq
  %v5647 = vshrl.u32 %v5646, 7
  %v5648 = vsub.s32 3, %v5647
  %v5649 = vrot.slane %v5632, %v5648
  %v5650 = vlaneseq
  %v5651 = vshrl.u32 %v5650, 7
  %v5652 = vsub.s32 4, %v5651
  %v5653 = vrot.slane %v5632, %v5652
  %v5654 = vlaneseq
  %v5655 = vshrl.u32 %v5654, 7
  %v5656 = vsub.s32 5, %v5655
  %v5657 = vrot.slane %v5632, %v5656
  %v5658 = vlaneseq
  %v5659 = vshrl.u32 %v5658, 7
  %v5660 = vsub.s32 6, %v5659
  %v5661 = vrot.slane %v5632, %v5660
  %v5662 = vlaneseq
  %v5663 = vshrl.u32 %v5662, 7
  %v5664 = vsub.s32 7, %v5663
  %v5665 = vrot.slane %v5632, %v5664
  %v5674 = vsub.f32 %v5470, %v5637
  %v5675 = vsub.f32 %v5471, %v5637
  %v5676 = vsub.f32 %v5472, %v5641
  %v5677 = vsub.f32 %v5473, %v5641
  %v5678 = vsub.f32 %v5474, %v5645
  %v5679 = vsub.f32 %v5475, %v5645
  %v5680 = vsub.f32 %v5476, %v5649
  %v5681 = vsub.f32 %v5477, %v5649
  %v5682 = vsub.f32 %v5478, %v5653
  %v5683 = vsub.f32 %v5479, %v5653
  %v5684 = vsub.f32 %v5480, %v5657
  %v5685 = vsub.f32 %v5481, %v5657
  %v5686 = vsub.f32 %v5482, %v5661
  %v5687 = vsub.f32 %v5483, %v5661
  %v5688 = vsub.f32 %v5484, %v5665
  %v5689 = vsub.f32 %v5485, %v5665
  %v5690 = vmul.f32 %v5674, 1.442695
  %v5691 = vpow.pop %v5690
  %v5692 = vmul.f32 %v5675, 1.442695
  %v5693 = vpow.pop %v5692
  %v5694 = vmul.f32 %v5676, 1.442695
  %v5695 = vpow.pop %v5694
  %v5696 = vmul.f32 %v5677, 1.442695
  %v5697 = vpow.pop %v5696
  %v5698 = vmul.f32 %v5678, 1.442695
  %v5699 = vpow.pop %v5698
  %v5700 = vmul.f32 %v5679, 1.442695
  %v5701 = vpow.pop %v5700
  %v5702 = vmul.f32 %v5680, 1.442695
  %v5703 = vpow.pop %v5702
  %v5704 = vmul.f32 %v5681, 1.442695
  %v5705 = vpow.pop %v5704
  %v5706 = vmul.f32 %v5682, 1.442695
  %v5707 = vpow.pop %v5706
  %v5708 = vmul.f32 %v5683, 1.442695
  %v5709 = vpow.pop %v5708
  %v5710 = vmul.f32 %v5684, 1.442695
  %v5711 = vpow.pop %v5710
  %v5712 = vmul.f32 %v5685, 1.442695
  %v5713 = vpow.pop %v5712
  %v5714 = vmul.f32 %v5686, 1.442695
  %v5715 = vpow.pop %v5714
  %v5716 = vmul.f32 %v5687, 1.442695
  %v5717 = vpow.pop %v5716
  %v5718 = vmul.f32 %v5688, 1.442695
  %v5719 = vpow.pop %v5718
  %v5720 = vmul.f32 %v5689, 1.442695
  %v5721 = vpow.pop %v5720
  %5738 = vset.pattern.permute.xlu0 0
  %5739 = vperm.xlu0 %5738, %v5691
  %v5740 = vpop.permute.xlu0 %5739
  %5741 = vset.pattern.permute.xlu0 0
  %5742 = vperm.xlu0 %5741, %v5693
  %v5743 = vpop.permute.xlu0 %5742
  %5744 = vset.pattern.permute.xlu0 0
  %5745 = vperm.xlu0 %5744, %v5695
  %v5746 = vpop.permute.xlu0 %5745
  %5747 = vset.pattern.permute.xlu0 0
  %5748 = vperm.xlu0 %5747, %v5697
  %v5749 = vpop.permute.xlu0 %5748
  %5750 = vset.pattern.permute.xlu0 0
  %5751 = vperm.xlu0 %5750, %v5699
  %v5752 = vpop.permute.xlu0 %5751
  %5753 = vset.pattern.permute.xlu0 0
  %5754 = vperm.xlu0 %5753, %v5701
  %v5755 = vpop.permute.xlu0 %5754
  %5756 = vset.pattern.permute.xlu0 0
  %5757 = vperm.xlu0 %5756, %v5703
  %v5758 = vpop.permute.xlu0 %5757
  %5759 = vset.pattern.permute.xlu0 0
  %5760 = vperm.xlu0 %5759, %v5705
  %v5761 = vpop.permute.xlu0 %5760
  %5762 = vset.pattern.permute.xlu0 0
  %5763 = vperm.xlu0 %5762, %v5707
  %v5764 = vpop.permute.xlu0 %5763
  %5765 = vset.pattern.permute.xlu0 0
  %5766 = vperm.xlu0 %5765, %v5709
  %v5767 = vpop.permute.xlu0 %5766
  %5768 = vset.pattern.permute.xlu0 0
  %5769 = vperm.xlu0 %5768, %v5711
  %v5770 = vpop.permute.xlu0 %5769
  %5771 = vset.pattern.permute.xlu0 0
  %5772 = vperm.xlu0 %5771, %v5713
  %v5773 = vpop.permute.xlu0 %5772
  %5774 = vset.pattern.permute.xlu0 0
  %5775 = vperm.xlu0 %5774, %v5715
  %v5776 = vpop.permute.xlu0 %5775
  %5777 = vset.pattern.permute.xlu0 0
  %5778 = vperm.xlu0 %5777, %v5717
  %v5779 = vpop.permute.xlu0 %5778
  %5780 = vset.pattern.permute.xlu0 0
  %5781 = vperm.xlu0 %5780, %v5719
  %v5782 = vpop.permute.xlu0 %5781
  %5783 = vset.pattern.permute.xlu0 0
  %5784 = vperm.xlu0 %5783, %v5721
  %v5785 = vpop.permute.xlu0 %5784
  %v5786 = vlaneseq
  %v5787 = vshrl.u32 %v5786, 7
  %v5788 = vsub.s32 %v3865, %v5787
  %v5789 = vrot.slane %v5740, %v5788
  %v5790 = vlaneseq
  %v5791 = vshrl.u32 %v5790, 7
  %v5792 = vsub.s32 %v3870, %v5791
  %v5793 = vrot.slane %v5743, %v5792
  %v5794 = vsel %vm3875, %v5793, %v5789
  %v5795 = vlaneseq
  %v5796 = vshrl.u32 %v5795, 7
  %v5797 = vsub.s32 %v3865, %v5796
  %v5798 = vrot.slane %v5746, %v5797
  %v5799 = vlaneseq
  %v5800 = vshrl.u32 %v5799, 7
  %v5801 = vsub.s32 %v3870, %v5800
  %v5802 = vrot.slane %v5749, %v5801
  %v5803 = vsel %vm3875, %v5802, %v5798
  %v5804 = vlaneseq
  %v5805 = vshrl.u32 %v5804, 7
  %v5806 = vsub.s32 %v3865, %v5805
  %v5807 = vrot.slane %v5752, %v5806
  %v5808 = vlaneseq
  %v5809 = vshrl.u32 %v5808, 7
  %v5810 = vsub.s32 %v3870, %v5809
  %v5811 = vrot.slane %v5755, %v5810
  %v5812 = vsel %vm3875, %v5811, %v5807
  %v5813 = vlaneseq
  %v5814 = vshrl.u32 %v5813, 7
  %v5815 = vsub.s32 %v3865, %v5814
  %v5816 = vrot.slane %v5758, %v5815
  %v5817 = vlaneseq
  %v5818 = vshrl.u32 %v5817, 7
  %v5819 = vsub.s32 %v3870, %v5818
  %v5820 = vrot.slane %v5761, %v5819
  %v5821 = vsel %vm3875, %v5820, %v5816
  %v5822 = vlaneseq
  %v5823 = vshrl.u32 %v5822, 7
  %v5824 = vsub.s32 %v3865, %v5823
  %v5825 = vrot.slane %v5764, %v5824
  %v5826 = vlaneseq
  %v5827 = vshrl.u32 %v5826, 7
  %v5828 = vsub.s32 %v3870, %v5827
  %v5829 = vrot.slane %v5767, %v5828
  %v5830 = vsel %vm3875, %v5829, %v5825
  %v5831 = vlaneseq
  %v5832 = vshrl.u32 %v5831, 7
  %v5833 = vsub.s32 %v3865, %v5832
  %v5834 = vrot.slane %v5770, %v5833
  %v5835 = vlaneseq
  %v5836 = vshrl.u32 %v5835, 7
  %v5837 = vsub.s32 %v3870, %v5836
  %v5838 = vrot.slane %v5773, %v5837
  %v5839 = vsel %vm3875, %v5838, %v5834
  %v5840 = vlaneseq
  %v5841 = vshrl.u32 %v5840, 7
  %v5842 = vsub.s32 %v3865, %v5841
  %v5843 = vrot.slane %v5776, %v5842
  %v5844 = vlaneseq
  %v5845 = vshrl.u32 %v5844, 7
  %v5846 = vsub.s32 %v3870, %v5845
  %v5847 = vrot.slane %v5779, %v5846
  %v5848 = vsel %vm3875, %v5847, %v5843
  %v5849 = vlaneseq
  %v5850 = vshrl.u32 %v5849, 7
  %v5851 = vsub.s32 %v3865, %v5850
  %v5852 = vrot.slane %v5782, %v5851
  %v5853 = vlaneseq
  %v5854 = vshrl.u32 %v5853, 7
  %v5855 = vsub.s32 %v3870, %v5854
  %v5856 = vrot.slane %v5785, %v5855
  %v5857 = vsel %vm3875, %v5856, %v5852
  %v5858 = vsel %vm486, %v5803, %v5794
  %v5859 = vsel %vm489, %v5812, %v5858
  %v5860 = vsel %vm492, %v5821, %v5859
  %v5861 = vsel %vm495, %v5830, %v5860
  %v5862 = vsel %vm498, %v5839, %v5861
  %v5863 = vsel %vm501, %v5848, %v5862
  %v5864 = vsel %vm504, %v5857, %v5863
  %v5866 = vsel %vm90, %v5864, 0.0
  %5867 = vadd.xlane.f32.xlu0 %v5866
  %v5868 = vpop.xlane.xlu0 %5867
  %v5869 = vrcp.pop %v5868
  %v5871 = vlaneseq
  %v5872 = vshrl.u32 %v5871, 7
  %v5873 = vsub.s32 0, %v5872
  %v5874 = vrot.slane %v5869, %v5873
  %v5875 = vlaneseq
  %v5876 = vshrl.u32 %v5875, 7
  %v5877 = vsub.s32 1, %v5876
  %v5878 = vrot.slane %v5869, %v5877
  %v5879 = vlaneseq
  %v5880 = vshrl.u32 %v5879, 7
  %v5881 = vsub.s32 2, %v5880
  %v5882 = vrot.slane %v5869, %v5881
  %v5883 = vlaneseq
  %v5884 = vshrl.u32 %v5883, 7
  %v5885 = vsub.s32 3, %v5884
  %v5886 = vrot.slane %v5869, %v5885
  %v5887 = vlaneseq
  %v5888 = vshrl.u32 %v5887, 7
  %v5889 = vsub.s32 4, %v5888
  %v5890 = vrot.slane %v5869, %v5889
  %v5891 = vlaneseq
  %v5892 = vshrl.u32 %v5891, 7
  %v5893 = vsub.s32 5, %v5892
  %v5894 = vrot.slane %v5869, %v5893
  %v5895 = vlaneseq
  %v5896 = vshrl.u32 %v5895, 7
  %v5897 = vsub.s32 6, %v5896
  %v5898 = vrot.slane %v5869, %v5897
  %v5899 = vlaneseq
  %v5900 = vshrl.u32 %v5899, 7
  %v5901 = vsub.s32 7, %v5900
  %v5902 = vrot.slane %v5869, %v5901
  %v5911 = vmul.f32 %v5691, %v5874
  %v5912 = vmul.f32 %v5693, %v5874
  %v5913 = vmul.f32 %v5695, %v5878
  %v5914 = vmul.f32 %v5697, %v5878
  %v5915 = vmul.f32 %v5699, %v5882
  %v5916 = vmul.f32 %v5701, %v5882
  %v5917 = vmul.f32 %v5703, %v5886
  %v5918 = vmul.f32 %v5705, %v5886
  %v5919 = vmul.f32 %v5707, %v5890
  %v5920 = vmul.f32 %v5709, %v5890
  %v5921 = vmul.f32 %v5711, %v5894
  %v5922 = vmul.f32 %v5713, %v5894
  %v5923 = vmul.f32 %v5715, %v5898
  %v5924 = vmul.f32 %v5717, %v5898
  %v5925 = vmul.f32 %v5719, %v5902
  %v5926 = vmul.f32 %v5721, %v5902
  %5928 = vset.pattern.permute.xlu0 0
  %5929 = vperm.xlu0 %5928, %v5911
  %v5930 = vpop.permute.xlu0 %5929
  %5933 = vset.pattern.permute.xlu0 0
  %5934 = vperm.xlu0 %5933, %v5912
  %v5935 = vpop.permute.xlu0 %5934
  %5938 = vset.pattern.permute.xlu0 0
  %5939 = vperm.xlu0 %5938, %v5913
  %v5940 = vpop.permute.xlu0 %5939
  %5943 = vset.pattern.permute.xlu0 0
  %5944 = vperm.xlu0 %5943, %v5914
  %v5945 = vpop.permute.xlu0 %5944
  %5948 = vset.pattern.permute.xlu0 0
  %5949 = vperm.xlu0 %5948, %v5915
  %v5950 = vpop.permute.xlu0 %5949
  %5953 = vset.pattern.permute.xlu0 0
  %5954 = vperm.xlu0 %5953, %v5916
  %v5955 = vpop.permute.xlu0 %5954
  %5958 = vset.pattern.permute.xlu0 0
  %5959 = vperm.xlu0 %5958, %v5917
  %v5960 = vpop.permute.xlu0 %5959
  %5963 = vset.pattern.permute.xlu0 0
  %5964 = vperm.xlu0 %5963, %v5918
  %v5965 = vpop.permute.xlu0 %5964
  %5968 = vset.pattern.permute.xlu0 0
  %5969 = vperm.xlu0 %5968, %v5919
  %v5970 = vpop.permute.xlu0 %5969
  %5973 = vset.pattern.permute.xlu0 0
  %5974 = vperm.xlu0 %5973, %v5920
  %v5975 = vpop.permute.xlu0 %5974
  %5978 = vset.pattern.permute.xlu0 0
  %5979 = vperm.xlu0 %5978, %v5921
  %v5980 = vpop.permute.xlu0 %5979
  %5983 = vset.pattern.permute.xlu0 0
  %5984 = vperm.xlu0 %5983, %v5922
  %v5985 = vpop.permute.xlu0 %5984
  %5988 = vset.pattern.permute.xlu0 0
  %5989 = vperm.xlu0 %5988, %v5923
  %v5990 = vpop.permute.xlu0 %5989
  %5993 = vset.pattern.permute.xlu0 0
  %5994 = vperm.xlu0 %5993, %v5924
  %v5995 = vpop.permute.xlu0 %5994
  %5998 = vset.pattern.permute.xlu0 0
  %5999 = vperm.xlu0 %5998, %v5925
  %v6000 = vpop.permute.xlu0 %5999
  %6003 = vset.pattern.permute.xlu0 0
  %6004 = vperm.xlu0 %6003, %v5926
  %v6005 = vpop.permute.xlu0 %6004
  %v6007 = vmul.f32 %v5930, %v3174
  %v6008 = vmul.f32 %v5935, %v3175
  %v6009 = vmul.f32 %v5940, %v3178
  %v6010 = vmul.f32 %v5945, %v3179
  %v6011 = vmul.f32 %v5950, %v3182
  %v6012 = vmul.f32 %v5955, %v3183
  %v6013 = vmul.f32 %v5960, %v3186
  %v6014 = vmul.f32 %v5965, %v3187
  %v6015 = vmul.f32 %v5970, %v3190
  %v6016 = vmul.f32 %v5975, %v3191
  %v6017 = vmul.f32 %v5980, %v3194
  %v6018 = vmul.f32 %v5985, %v3195
  %v6019 = vmul.f32 %v5990, %v3198
  %v6020 = vmul.f32 %v5995, %v3199
  %v6021 = vmul.f32 %v6000, %v3202
  %v6022 = vmul.f32 %v6005, %v3203
  %v6023 = vsel %vm187, %v6007, 0.0
  %v6024 = vsel %vm187, %v6008, 0.0
  %v6025 = vadd.f32 %v6023, %v6024
  %v6026 = vrot.slane %v6025, 4
  %v6027 = vadd.f32 %v6025, %v6026
  %v6028 = vrot.slane %v6027, 2
  %v6029 = vadd.f32 %v6027, %v6028
  %v6030 = vrot.slane %v6029, 1
  %v6031 = vadd.f32 %v6029, %v6030
  %v6032 = vsel %vm187, %v6009, 0.0
  %v6033 = vsel %vm187, %v6010, 0.0
  %v6034 = vadd.f32 %v6032, %v6033
  %v6035 = vrot.slane %v6034, 4
  %v6036 = vadd.f32 %v6034, %v6035
  %v6037 = vrot.slane %v6036, 2
  %v6038 = vadd.f32 %v6036, %v6037
  %v6039 = vrot.slane %v6038, 1
  %v6040 = vadd.f32 %v6038, %v6039
  %v6041 = vsel %vm187, %v6011, 0.0
  %v6042 = vsel %vm187, %v6012, 0.0
  %v6043 = vadd.f32 %v6041, %v6042
  %v6044 = vrot.slane %v6043, 4
  %v6045 = vadd.f32 %v6043, %v6044
  %v6046 = vrot.slane %v6045, 2
  %v6047 = vadd.f32 %v6045, %v6046
  %v6048 = vrot.slane %v6047, 1
  %v6049 = vadd.f32 %v6047, %v6048
  %v6050 = vsel %vm187, %v6013, 0.0
  %v6051 = vsel %vm187, %v6014, 0.0
  %v6052 = vadd.f32 %v6050, %v6051
  %v6053 = vrot.slane %v6052, 4
  %v6054 = vadd.f32 %v6052, %v6053
  %v6055 = vrot.slane %v6054, 2
  %v6056 = vadd.f32 %v6054, %v6055
  %v6057 = vrot.slane %v6056, 1
  %v6058 = vadd.f32 %v6056, %v6057
  %v6059 = vsel %vm187, %v6015, 0.0
  %v6060 = vsel %vm187, %v6016, 0.0
  %v6061 = vadd.f32 %v6059, %v6060
  %v6062 = vrot.slane %v6061, 4
  %v6063 = vadd.f32 %v6061, %v6062
  %v6064 = vrot.slane %v6063, 2
  %v6065 = vadd.f32 %v6063, %v6064
  %v6066 = vrot.slane %v6065, 1
  %v6067 = vadd.f32 %v6065, %v6066
  %v6068 = vsel %vm187, %v6017, 0.0
  %v6069 = vsel %vm187, %v6018, 0.0
  %v6070 = vadd.f32 %v6068, %v6069
  %v6071 = vrot.slane %v6070, 4
  %v6072 = vadd.f32 %v6070, %v6071
  %v6073 = vrot.slane %v6072, 2
  %v6074 = vadd.f32 %v6072, %v6073
  %v6075 = vrot.slane %v6074, 1
  %v6076 = vadd.f32 %v6074, %v6075
  %v6077 = vsel %vm187, %v6019, 0.0
  %v6078 = vsel %vm187, %v6020, 0.0
  %v6079 = vadd.f32 %v6077, %v6078
  %v6080 = vrot.slane %v6079, 4
  %v6081 = vadd.f32 %v6079, %v6080
  %v6082 = vrot.slane %v6081, 2
  %v6083 = vadd.f32 %v6081, %v6082
  %v6084 = vrot.slane %v6083, 1
  %v6085 = vadd.f32 %v6083, %v6084
  %v6086 = vsel %vm187, %v6021, 0.0
  %v6087 = vsel %vm187, %v6022, 0.0
  %v6088 = vadd.f32 %v6086, %v6087
  %v6089 = vrot.slane %v6088, 4
  %v6090 = vadd.f32 %v6088, %v6089
  %v6091 = vrot.slane %v6090, 2
  %v6092 = vadd.f32 %v6090, %v6091
  %v6093 = vrot.slane %v6092, 1
  %v6094 = vadd.f32 %v6092, %v6093
  %6103 = vrot.lane.b32.xlu0 %v6031, 64
  %v6104 = vpop.permute.xlu0 %6103
  %6105 = vrot.lane.b32.xlu0 %v6040, 64
  %v6106 = vpop.permute.xlu0 %6105
  %6107 = vrot.lane.b32.xlu0 %v6049, 64
  %v6108 = vpop.permute.xlu0 %6107
  %6109 = vrot.lane.b32.xlu0 %v6058, 64
  %v6110 = vpop.permute.xlu0 %6109
  %6111 = vrot.lane.b32.xlu0 %v6067, 64
  %v6112 = vpop.permute.xlu0 %6111
  %6113 = vrot.lane.b32.xlu0 %v6076, 64
  %v6114 = vpop.permute.xlu0 %6113
  %6115 = vrot.lane.b32.xlu0 %v6085, 64
  %v6116 = vpop.permute.xlu0 %6115
  %6117 = vrot.lane.b32.xlu0 %v6094, 64
  %v6118 = vpop.permute.xlu0 %6117
  %v6127 = vadd.f32 %v5286, %v6104
  %v6128 = vadd.f32 %v5287, %v6106
  %v6129 = vadd.f32 %v5288, %v6108
  %v6130 = vadd.f32 %v5289, %v6110
  %v6131 = vadd.f32 %v5290, %v6112
  %v6132 = vadd.f32 %v5291, %v6114
  %v6133 = vadd.f32 %v5292, %v6116
  %v6134 = vadd.f32 %v5293, %v6118
  %v6135 = vld [vmem:[%s9] sm:$0xff]
  %v6136 = vld [vmem:[%s9 + $0x8] sm:$0xff]
  %v6137 = vld [vmem:[%s9 + $0x10] sm:$0xff]
  %v6138 = vld [vmem:[%s9 + $0x18] sm:$0xff]
  %v6147 = vrot.slane %v6127, 7
  %v6148 = vrot.slane %v6128, 6
  %v6149 = vsel %vm486, %v6148, %v6147
  %v6150 = vrot.slane %v6129, 5
  %v6151 = vsel %vm489, %v6150, %v6149
  %v6152 = vrot.slane %v6130, 4
  %v6153 = vsel %vm492, %v6152, %v6151
  %v6154 = vrot.slane %v6131, 3
  %v6155 = vsel %vm495, %v6154, %v6153
  %v6156 = vrot.slane %v6132, 2
  %v6157 = vsel %vm498, %v6156, %v6155
  %v6158 = vrot.slane %v6133, 1
  %v6159 = vsel %vm501, %v6158, %v6157
  %v6160 = vsel %vm504, %v6134, %v6159
  %6161 = vrot.lane.b32.xlu0 %v6160, 64
  %v6162 = vpop.permute.xlu0 %6161
  %v6163 = vsel %vm187, %v6162, 0
  %6165 = vmatprep.subr.mxu0 0.0
  %6166 = vmatpush1.msra.mxu0 0.0
  %6167 = vmatprep.subr.mxu0 0.0
  %6168 = vmatpush1.msra.mxu0 0.0
  %6169 = vmatprep.subr.mxu0 0.0
  %6170 = vmatpush1.msra.mxu0 0.0
  %6171 = vmatprep.subr.mxu0 0.0
  %6172 = vmatpush1.msra.mxu0 0.0
  %6173 = vmatprep.subr.mxu0 0.0
  %6174 = vmatpush1.msra.mxu0 0.0
  %6175 = vmatprep.subr.mxu0 0.0
  %6176 = vmatpush1.msra.mxu0 0.0
  %6177 = vmatprep.subr.mxu0 0.0
  %6178 = vmatpush1.msra.mxu0 0.0
  %6179 = vmatprep.subr.mxu0 0.0
  %6180 = vmatpush1.msra.mxu0 0.0
  %6181 = vmatprep.subr.mxu0 0.0
  %6182 = vmatpush1.msra.mxu0 0.0
  %6183 = vmatprep.subr.mxu0 0.0
  %6184 = vmatpush1.msra.mxu0 0.0
  %6185 = vmatprep.subr.mxu0 0.0
  %6186 = vmatpush1.msra.mxu0 0.0
  %6187 = vmatprep.subr.mxu0 0.0
  %6188 = vmatpush1.msra.mxu0 0.0
  %6189 = vmatprep.subr.mxu0 0.0
  %6190 = vmatpush1.msra.mxu0 %v6138
  %6191 = vmatprep.subr.mxu0 0.0
  %6192 = vmatpush1.msra.mxu0 %v6137
  %6193 = vmatprep.subr.mxu0 0.0
  %6194 = vmatpush1.msra.mxu0 %v6136
  %6195 = vmatprep.subr.mxu0 0.0
  %6196 = vmatpush1.msra.mxu0 %v6135
  %6197 = vmatprep.subr.mxu0 0.0
  %6198 = vmatpush2.msra.mxu0 0.0
  %6199 = vmatprep.subr.mxu0 0.0
  %6200 = vmatpush2.msra.mxu0 0.0
  %6201 = vmatprep.subr.mxu0 0.0
  %6202 = vmatpush2.msra.mxu0 0.0
  %6203 = vmatprep.subr.mxu0 0.0
  %6204 = vmatpush2.msra.mxu0 0.0
  %6205 = vmatprep.subr.mxu0 0.0
  %6206 = vmatpush2.msra.mxu0 0.0
  %6207 = vmatprep.subr.mxu0 0.0
  %6208 = vmatpush2.msra.mxu0 0.0
  %6209 = vmatprep.subr.mxu0 0.0
  %6210 = vmatpush2.msra.mxu0 0.0
  %6211 = vmatprep.subr.mxu0 0.0
  %6212 = vmatpush2.msra.mxu0 0.0
  %6213 = vmatprep.subr.mxu0 0.0
  %6214 = vmatpush2.msra.mxu0 0.0
  %6215 = vmatprep.subr.mxu0 0.0
  %6216 = vmatpush2.msra.mxu0 0.0
  %6217 = vmatprep.subr.mxu0 0.0
  %6218 = vmatpush2.msra.mxu0 0.0
  %6219 = vmatprep.subr.mxu0 0.0
  %6220 = vmatpush2.msra.mxu0 0.0
  %6221 = vmatprep.subr.mxu0 0.0
  %6222 = vmatpush2.msra.mxu0 0.0
  %6223 = vmatprep.subr.mxu0 0.0
  %6224 = vmatpush2.msra.mxu0 0.0
  %6225 = vmatprep.subr.mxu0 0.0
  %6226 = vmatpush2.msra.mxu0 0.0
  %6227 = vmatprep.subr.mxu0 0.0
  %6228 = vmatpush2.msra.mxu0 0.0
  %6229 = vmatprep.mubr.f32.mxu0 0.0
  %6230 = vmatmul.mubr.f32.gmra.mxu0 %v6163
  %v6231 = vpop.f32.mrf.mxu0
  %v6232 = vadd.f32 0.0, %v6231
  %v6233 = vpop.f32.mrf.mxu0
  %6234 = vdwg.mxu0
  %6235 = vrot.lane.b32.xlu0 %v3170, 64
  %v6236 = vpop.permute.xlu0 %6235
  %v6238 = vmul.f32 %v6127, %v6236
  %v6239 = vmul.f32 %v6128, %v6236
  %v6240 = vmul.f32 %v6129, %v6236
  %v6241 = vmul.f32 %v6130, %v6236
  %v6242 = vmul.f32 %v6131, %v6236
  %v6243 = vmul.f32 %v6132, %v6236
  %v6244 = vmul.f32 %v6133, %v6236
  %v6245 = vmul.f32 %v6134, %v6236
  %v6254 = vrot.slane %v6239, 7
  %v6255 = vrot.slane %v6240, 6
  %v6256 = vsel %vm486, %v6255, %v6254
  %v6257 = vrot.slane %v6241, 5
  %v6258 = vsel %vm489, %v6257, %v6256
  %v6259 = vrot.slane %v6242, 4
  %v6260 = vsel %vm492, %v6259, %v6258
  %v6261 = vrot.slane %v6243, 3
  %v6262 = vsel %vm495, %v6261, %v6260
  %v6263 = vrot.slane %v6244, 2
  %v6264 = vsel %vm498, %v6263, %v6262
  %v6265 = vrot.slane %v6245, 1
  %v6266 = vsel %vm501, %v6265, %v6264
  %6267 = vrot.lane.b32.xlu0 %v6238, 64
  %v6268 = vpop.permute.xlu0 %6267
  %6269 = vrot.lane.b32.xlu0 %v6266, 64
  %v6270 = vpop.permute.xlu0 %6269
  %vm6273 = vcmask 261127
  %v6274 = vsel %vm6273, %v6268, 0.0
  %6275 = vadd.xlane.f32.xlu0 %v6274
  %v6276 = vpop.xlane.xlu0 %6275
  %vm6277 = vcmask 260096
  %v6278 = vsel %vm6277, %v6270, 0.0
  %6279 = vadd.xlane.f32.xlu0 %v6278
  %v6280 = vpop.xlane.xlu0 %6279
  %v6281 = vld [vmem:[%s0] sm:$0xf]
  %v6282 = vld [vmem:[%s0 + $0x4] sm:$0xf]
  %v6283 = vld [vmem:[%s0 + $0x8] sm:$0xf]
  %v6284 = vld [vmem:[%s0 + $0xc] sm:$0xf]
  %v6285 = vld [vmem:[%s0 + $0x10] sm:$0xf]
  %v6286 = vld [vmem:[%s0 + $0x14] sm:$0xf]
  %v6287 = vld [vmem:[%s0 + $0x18] sm:$0xf]
  %v6288 = vld [vmem:[%s0 + $0x1c] sm:$0xf]
  %v6289 = vld [vmem:[%s0 + $0x20] sm:$0xf]
  %v6290 = vld [vmem:[%s0 + $0x24] sm:$0xf]
  %v6291 = vld [vmem:[%s0 + $0x28] sm:$0xf]
  %v6292 = vld [vmem:[%s0 + $0x2c] sm:$0xf]
  %v6293 = vld [vmem:[%s0 + $0x30] sm:$0xf]
  %v6294 = vld [vmem:[%s0 + $0x34] sm:$0xf]
  %v6295 = vld [vmem:[%s0 + $0x38] sm:$0xf]
  %v6296 = vld [vmem:[%s0 + $0x3c] sm:$0xf]
  %v6297 = vlaneseq
  %v6298 = vshrl.u32 %v6297, 7
  %v6299 = vsub.s32 0, %v6298
  %v6300 = vrot.slane %v6232, %v6299
  %6302 = vbcast.lane.b32.xlu0 %v6300, 256
  %v6303 = vpop.permute.xlu0 %6302
  %s6305 = sor.u32 256, 8
  %6306 = vbcast.lane.b32.xlu0 %v6300, %s6305
  %v6307 = vpop.permute.xlu0 %6306
  %v6308 = vlaneseq
  %v6309 = vshrl.u32 %v6308, 7
  %v6310 = vsub.s32 1, %v6309
  %v6311 = vrot.slane %v6232, %v6310
  %6313 = vbcast.lane.b32.xlu0 %v6311, 256
  %v6314 = vpop.permute.xlu0 %6313
  %s6316 = sor.u32 256, 8
  %6317 = vbcast.lane.b32.xlu0 %v6311, %s6316
  %v6318 = vpop.permute.xlu0 %6317
  %v6319 = vlaneseq
  %v6320 = vshrl.u32 %v6319, 7
  %v6321 = vsub.s32 2, %v6320
  %v6322 = vrot.slane %v6232, %v6321
  %6324 = vbcast.lane.b32.xlu0 %v6322, 256
  %v6325 = vpop.permute.xlu0 %6324
  %s6327 = sor.u32 256, 8
  %6328 = vbcast.lane.b32.xlu0 %v6322, %s6327
  %v6329 = vpop.permute.xlu0 %6328
  %v6330 = vlaneseq
  %v6331 = vshrl.u32 %v6330, 7
  %v6332 = vsub.s32 3, %v6331
  %v6333 = vrot.slane %v6232, %v6332
  %6335 = vbcast.lane.b32.xlu0 %v6333, 256
  %v6336 = vpop.permute.xlu0 %6335
  %s6338 = sor.u32 256, 8
  %6339 = vbcast.lane.b32.xlu0 %v6333, %s6338
  %v6340 = vpop.permute.xlu0 %6339
  %v6341 = vlaneseq
  %v6342 = vshrl.u32 %v6341, 7
  %v6343 = vsub.s32 4, %v6342
  %v6344 = vrot.slane %v6232, %v6343
  %6346 = vbcast.lane.b32.xlu0 %v6344, 256
  %v6347 = vpop.permute.xlu0 %6346
  %s6349 = sor.u32 256, 8
  %6350 = vbcast.lane.b32.xlu0 %v6344, %s6349
  %v6351 = vpop.permute.xlu0 %6350
  %v6352 = vlaneseq
  %v6353 = vshrl.u32 %v6352, 7
  %v6354 = vsub.s32 5, %v6353
  %v6355 = vrot.slane %v6232, %v6354
  %6357 = vbcast.lane.b32.xlu0 %v6355, 256
  %v6358 = vpop.permute.xlu0 %6357
  %s6360 = sor.u32 256, 8
  %6361 = vbcast.lane.b32.xlu0 %v6355, %s6360
  %v6362 = vpop.permute.xlu0 %6361
  %v6363 = vlaneseq
  %v6364 = vshrl.u32 %v6363, 7
  %v6365 = vsub.s32 6, %v6364
  %v6366 = vrot.slane %v6232, %v6365
  %6368 = vbcast.lane.b32.xlu0 %v6366, 256
  %v6369 = vpop.permute.xlu0 %6368
  %s6371 = sor.u32 256, 8
  %6372 = vbcast.lane.b32.xlu0 %v6366, %s6371
  %v6373 = vpop.permute.xlu0 %6372
  %v6374 = vlaneseq
  %v6375 = vshrl.u32 %v6374, 7
  %v6376 = vsub.s32 7, %v6375
  %v6377 = vrot.slane %v6232, %v6376
  %6379 = vbcast.lane.b32.xlu0 %v6377, 256
  %v6380 = vpop.permute.xlu0 %6379
  %s6382 = sor.u32 256, 8
  %6383 = vbcast.lane.b32.xlu0 %v6377, %s6382
  %v6384 = vpop.permute.xlu0 %6383
  %v6385 = vunpack.c.l.bf16 %v6281
  %v6386 = vunpack.c.l.bf16 %v6282
  %v6387 = vunpack.c.l.bf16 %v6283
  %v6388 = vunpack.c.l.bf16 %v6284
  %v6389 = vunpack.c.l.bf16 %v6285
  %v6390 = vunpack.c.l.bf16 %v6286
  %v6391 = vunpack.c.l.bf16 %v6287
  %v6392 = vunpack.c.l.bf16 %v6288
  %v6393 = vunpack.c.l.bf16 %v6289
  %v6394 = vunpack.c.l.bf16 %v6290
  %v6395 = vunpack.c.l.bf16 %v6291
  %v6396 = vunpack.c.l.bf16 %v6292
  %v6397 = vunpack.c.l.bf16 %v6293
  %v6398 = vunpack.c.l.bf16 %v6294
  %v6399 = vunpack.c.l.bf16 %v6295
  %v6400 = vunpack.c.l.bf16 %v6296
  %v6401 = vmul.f32 %v6385, %v6303
  %v6402 = vmul.f32 %v6386, %v6307
  %v6403 = vmul.f32 %v6387, %v6314
  %v6404 = vmul.f32 %v6388, %v6318
  %v6405 = vmul.f32 %v6389, %v6325
  %v6406 = vmul.f32 %v6390, %v6329
  %v6407 = vmul.f32 %v6391, %v6336
  %v6408 = vmul.f32 %v6392, %v6340
  %v6409 = vmul.f32 %v6393, %v6347
  %v6410 = vmul.f32 %v6394, %v6351
  %v6411 = vmul.f32 %v6395, %v6358
  %v6412 = vmul.f32 %v6396, %v6362
  %v6413 = vmul.f32 %v6397, %v6369
  %v6414 = vmul.f32 %v6398, %v6373
  %v6415 = vmul.f32 %v6399, %v6380
  %v6416 = vmul.f32 %v6400, %v6384
  %v6417 = vadd.f32 %v6401, %v6402
  %v6418 = vrot.slane %v6417, 4
  %v6419 = vadd.f32 %v6417, %v6418
  %v6420 = vrot.slane %v6419, 2
  %v6421 = vadd.f32 %v6419, %v6420
  %v6422 = vrot.slane %v6421, 1
  %v6423 = vadd.f32 %v6421, %v6422
  %v6424 = vadd.f32 %v6403, %v6404
  %v6425 = vrot.slane %v6424, 4
  %v6426 = vadd.f32 %v6424, %v6425
  %v6427 = vrot.slane %v6426, 2
  %v6428 = vadd.f32 %v6426, %v6427
  %v6429 = vrot.slane %v6428, 1
  %v6430 = vadd.f32 %v6428, %v6429
  %v6431 = vadd.f32 %v6405, %v6406
  %v6432 = vrot.slane %v6431, 4
  %v6433 = vadd.f32 %v6431, %v6432
  %v6434 = vrot.slane %v6433, 2
  %v6435 = vadd.f32 %v6433, %v6434
  %v6436 = vrot.slane %v6435, 1
  %v6437 = vadd.f32 %v6435, %v6436
  %v6438 = vadd.f32 %v6407, %v6408
  %v6439 = vrot.slane %v6438, 4
  %v6440 = vadd.f32 %v6438, %v6439
  %v6441 = vrot.slane %v6440, 2
  %v6442 = vadd.f32 %v6440, %v6441
  %v6443 = vrot.slane %v6442, 1
  %v6444 = vadd.f32 %v6442, %v6443
  %v6445 = vadd.f32 %v6409, %v6410
  %v6446 = vrot.slane %v6445, 4
  %v6447 = vadd.f32 %v6445, %v6446
  %v6448 = vrot.slane %v6447, 2
  %v6449 = vadd.f32 %v6447, %v6448
  %v6450 = vrot.slane %v6449, 1
  %v6451 = vadd.f32 %v6449, %v6450
  %v6452 = vadd.f32 %v6411, %v6412
  %v6453 = vrot.slane %v6452, 4
  %v6454 = vadd.f32 %v6452, %v6453
  %v6455 = vrot.slane %v6454, 2
  %v6456 = vadd.f32 %v6454, %v6455
  %v6457 = vrot.slane %v6456, 1
  %v6458 = vadd.f32 %v6456, %v6457
  %v6459 = vadd.f32 %v6413, %v6414
  %v6460 = vrot.slane %v6459, 4
  %v6461 = vadd.f32 %v6459, %v6460
  %v6462 = vrot.slane %v6461, 2
  %v6463 = vadd.f32 %v6461, %v6462
  %v6464 = vrot.slane %v6463, 1
  %v6465 = vadd.f32 %v6463, %v6464
  %v6466 = vadd.f32 %v6415, %v6416
  %v6467 = vrot.slane %v6466, 4
  %v6468 = vadd.f32 %v6466, %v6467
  %v6469 = vrot.slane %v6468, 2
  %v6470 = vadd.f32 %v6468, %v6469
  %v6471 = vrot.slane %v6470, 1
  %v6472 = vadd.f32 %v6470, %v6471
  %v6475 = vrot.slane %v6276, 7
  %v6476 = vrot.slane %v6280, 1
  %v6477 = vrot.slane %v6280, 2
  %v6478 = vrot.slane %v6280, 3
  %v6479 = vrot.slane %v6280, 4
  %v6480 = vrot.slane %v6280, 5
  %v6481 = vrot.slane %v6280, 6
  %v6490 = vadd.f32 %v6423, %v6475
  %v6491 = vadd.f32 %v6430, %v6280
  %v6492 = vadd.f32 %v6437, %v6476
  %v6493 = vadd.f32 %v6444, %v6477
  %v6494 = vadd.f32 %v6451, %v6478
  %v6495 = vadd.f32 %v6458, %v6479
  %v6496 = vadd.f32 %v6465, %v6480
  %v6497 = vadd.f32 %v6472, %v6481
  %v6498 = vld [vmem:[%s6] sm:$0xff]
  %v6499 = vld [vmem:[%s5] sm:$0xff]
  %v6500 = vand.u32 2147483647, %v6490
  %v6501 = vand.u32 2147483647, %v6491
  %v6502 = vand.u32 2147483647, %v6492
  %v6503 = vand.u32 2147483647, %v6493
  %v6504 = vand.u32 2147483647, %v6494
  %v6505 = vand.u32 2147483647, %v6495
  %v6506 = vand.u32 2147483647, %v6496
  %v6507 = vand.u32 2147483647, %v6497
  %v6508 = vsub.f32 0.0, %v6500
  %v6509 = vsub.f32 0.0, %v6501
  %v6510 = vsub.f32 0.0, %v6502
  %v6511 = vsub.f32 0.0, %v6503
  %v6512 = vsub.f32 0.0, %v6504
  %v6513 = vsub.f32 0.0, %v6505
  %v6514 = vsub.f32 0.0, %v6506
  %v6515 = vsub.f32 0.0, %v6507
  %v6516 = vmul.f32 %v6508, 1.442695
  %v6517 = vpow.pop %v6516
  %v6518 = vmul.f32 %v6509, 1.442695
  %v6519 = vpow.pop %v6518
  %v6520 = vmul.f32 %v6510, 1.442695
  %v6521 = vpow.pop %v6520
  %v6522 = vmul.f32 %v6511, 1.442695
  %v6523 = vpow.pop %v6522
  %v6524 = vmul.f32 %v6512, 1.442695
  %v6525 = vpow.pop %v6524
  %v6526 = vmul.f32 %v6513, 1.442695
  %v6527 = vpow.pop %v6526
  %v6528 = vmul.f32 %v6514, 1.442695
  %v6529 = vpow.pop %v6528
  %v6530 = vmul.f32 %v6515, 1.442695
  %v6531 = vpow.pop %v6530
  %v6532 = vmax.f32 %v6490, 0.0
  %v6533 = vmax.f32 %v6491, 0.0
  %v6534 = vmax.f32 %v6492, 0.0
  %v6535 = vmax.f32 %v6493, 0.0
  %v6536 = vmax.f32 %v6494, 0.0
  %v6537 = vmax.f32 %v6495, 0.0
  %v6538 = vmax.f32 %v6496, 0.0
  %v6539 = vmax.f32 %v6497, 0.0
  %v6541 = vrot.slane %v6498, 1
  %v6542 = vrot.slane %v6498, 2
  %v6543 = vrot.slane %v6498, 3
  %v6544 = vrot.slane %v6498, 4
  %v6545 = vrot.slane %v6498, 5
  %v6546 = vrot.slane %v6498, 6
  %v6547 = vrot.slane %v6498, 7
  %v6556 = vmul.f32 %v6490, %v6498
  %v6557 = vmul.f32 %v6491, %v6541
  %v6558 = vmul.f32 %v6492, %v6542
  %v6559 = vmul.f32 %v6493, %v6543
  %v6560 = vmul.f32 %v6494, %v6544
  %v6561 = vmul.f32 %v6495, %v6545
  %v6562 = vmul.f32 %v6496, %v6546
  %v6563 = vmul.f32 %v6497, %v6547
  %v6564 = vsub.f32 %v6532, %v6556
  %v6565 = vsub.f32 %v6533, %v6557
  %v6566 = vsub.f32 %v6534, %v6558
  %v6567 = vsub.f32 %v6535, %v6559
  %v6568 = vsub.f32 %v6536, %v6560
  %v6569 = vsub.f32 %v6537, %v6561
  %v6570 = vsub.f32 %v6538, %v6562
  %v6571 = vsub.f32 %v6539, %v6563
  %v6572 = vadd.f32 %v6517, 1.0
  %v6573 = vlog2.pop %v6572
  %v6574 = vmul.f32 %v6573, 0.6931472
  %v6575 = vmul.f32 -0.5, %v6517
  %v6576 = vadd.f32 %v6575, 1.0
  %v6577 = vmul.f32 %v6576, %v6517
  %v6578 = vand.u32 2147483647, %v6517
  %vm6579 = vcmp.lt.f32.partialorder %v6578, 0.0004427343
  %v6580 = vsel %vm6579, %v6577, %v6574
  %v6581 = vadd.f32 %v6519, 1.0
  %v6582 = vlog2.pop %v6581
  %v6583 = vmul.f32 %v6582, 0.6931472
  %v6584 = vmul.f32 -0.5, %v6519
  %v6585 = vadd.f32 %v6584, 1.0
  %v6586 = vmul.f32 %v6585, %v6519
  %v6587 = vand.u32 2147483647, %v6519
  %vm6588 = vcmp.lt.f32.partialorder %v6587, 0.0004427343
  %v6589 = vsel %vm6588, %v6586, %v6583
  %v6590 = vadd.f32 %v6521, 1.0
  %v6591 = vlog2.pop %v6590
  %v6592 = vmul.f32 %v6591, 0.6931472
  %v6593 = vmul.f32 -0.5, %v6521
  %v6594 = vadd.f32 %v6593, 1.0
  %v6595 = vmul.f32 %v6594, %v6521
  %v6596 = vand.u32 2147483647, %v6521
  %vm6597 = vcmp.lt.f32.partialorder %v6596, 0.0004427343
  %v6598 = vsel %vm6597, %v6595, %v6592
  %v6599 = vadd.f32 %v6523, 1.0
  %v6600 = vlog2.pop %v6599
  %v6601 = vmul.f32 %v6600, 0.6931472
  %v6602 = vmul.f32 -0.5, %v6523
  %v6603 = vadd.f32 %v6602, 1.0
  %v6604 = vmul.f32 %v6603, %v6523
  %v6605 = vand.u32 2147483647, %v6523
  %vm6606 = vcmp.lt.f32.partialorder %v6605, 0.0004427343
  %v6607 = vsel %vm6606, %v6604, %v6601
  %v6608 = vadd.f32 %v6525, 1.0
  %v6609 = vlog2.pop %v6608
  %v6610 = vmul.f32 %v6609, 0.6931472
  %v6611 = vmul.f32 -0.5, %v6525
  %v6612 = vadd.f32 %v6611, 1.0
  %v6613 = vmul.f32 %v6612, %v6525
  %v6614 = vand.u32 2147483647, %v6525
  %vm6615 = vcmp.lt.f32.partialorder %v6614, 0.0004427343
  %v6616 = vsel %vm6615, %v6613, %v6610
  %v6617 = vadd.f32 %v6527, 1.0
  %v6618 = vlog2.pop %v6617
  %v6619 = vmul.f32 %v6618, 0.6931472
  %v6620 = vmul.f32 -0.5, %v6527
  %v6621 = vadd.f32 %v6620, 1.0
  %v6622 = vmul.f32 %v6621, %v6527
  %v6623 = vand.u32 2147483647, %v6527
  %vm6624 = vcmp.lt.f32.partialorder %v6623, 0.0004427343
  %v6625 = vsel %vm6624, %v6622, %v6619
  %v6626 = vadd.f32 %v6529, 1.0
  %v6627 = vlog2.pop %v6626
  %v6628 = vmul.f32 %v6627, 0.6931472
  %v6629 = vmul.f32 -0.5, %v6529
  %v6630 = vadd.f32 %v6629, 1.0
  %v6631 = vmul.f32 %v6630, %v6529
  %v6632 = vand.u32 2147483647, %v6529
  %vm6633 = vcmp.lt.f32.partialorder %v6632, 0.0004427343
  %v6634 = vsel %vm6633, %v6631, %v6628
  %v6635 = vadd.f32 %v6531, 1.0
  %v6636 = vlog2.pop %v6635
  %v6637 = vmul.f32 %v6636, 0.6931472
  %v6638 = vmul.f32 -0.5, %v6531
  %v6639 = vadd.f32 %v6638, 1.0
  %v6640 = vmul.f32 %v6639, %v6531
  %v6641 = vand.u32 2147483647, %v6531
  %vm6642 = vcmp.lt.f32.partialorder %v6641, 0.0004427343
  %v6643 = vsel %vm6642, %v6640, %v6637
  %v6644 = vadd.f32 %v6564, %v6580
  %v6645 = vadd.f32 %v6565, %v6589
  %v6646 = vadd.f32 %v6566, %v6598
  %v6647 = vadd.f32 %v6567, %v6607
  %v6648 = vadd.f32 %v6568, %v6616
  %v6649 = vadd.f32 %v6569, %v6625
  %v6650 = vadd.f32 %v6570, %v6634
  %v6651 = vadd.f32 %v6571, %v6643
  %v6660 = vrot.slane %v6645, 7
  %v6661 = vsel %vm486, %v6660, %v6644
  %v6662 = vrot.slane %v6646, 6
  %v6663 = vsel %vm489, %v6662, %v6661
  %v6664 = vrot.slane %v6647, 5
  %v6665 = vsel %vm492, %v6664, %v6663
  %v6666 = vrot.slane %v6648, 4
  %v6667 = vsel %vm495, %v6666, %v6665
  %v6668 = vrot.slane %v6649, 3
  %v6669 = vsel %vm498, %v6668, %v6667
  %v6670 = vrot.slane %v6650, 2
  %v6671 = vsel %vm501, %v6670, %v6669
  %v6672 = vrot.slane %v6651, 1
  %v6673 = vsel %vm504, %v6672, %v6671
  %6675 = vst [vmem:[%s15] sm:$0xff] %v6673
  %v6676 = vsub.f32 1.0, %v6499
  %v6677 = vmul.f32 %v6676, -1e+11
  %v6679 = vrot.slane %v6677, 1
  %v6680 = vrot.slane %v6677, 2
  %v6681 = vrot.slane %v6677, 3
  %v6682 = vrot.slane %v6677, 4
  %v6683 = vrot.slane %v6677, 5
  %v6684 = vrot.slane %v6677, 6
  %v6685 = vrot.slane %v6677, 7
  %v6694 = vadd.f32 %v6490, %v6677
  %v6695 = vadd.f32 %v6491, %v6679
  %v6696 = vadd.f32 %v6492, %v6680
  %v6697 = vadd.f32 %v6493, %v6681
  %v6698 = vadd.f32 %v6494, %v6682
  %v6699 = vadd.f32 %v6495, %v6683
  %v6700 = vadd.f32 %v6496, %v6684
  %v6701 = vadd.f32 %v6497, %v6685
  %v6710 = vrot.slane %v6695, 7
  %v6711 = vsel %vm486, %v6710, %v6694
  %v6712 = vrot.slane %v6696, 6
  %v6713 = vsel %vm489, %v6712, %v6711
  %v6714 = vrot.slane %v6697, 5
  %v6715 = vsel %vm492, %v6714, %v6713
  %v6716 = vrot.slane %v6698, 4
  %v6717 = vsel %vm495, %v6716, %v6715
  %v6718 = vrot.slane %v6699, 3
  %v6719 = vsel %vm498, %v6718, %v6717
  %v6720 = vrot.slane %v6700, 2
  %v6721 = vsel %vm501, %v6720, %v6719
  %v6722 = vrot.slane %v6701, 1
  %v6723 = vsel %vm504, %v6722, %v6721
  %6725 = vst [vmem:[%s16] sm:$0xff] %v6723
  %v6726 = vadd.f32 %v6517, 1.0
  %v6727 = vadd.f32 %v6519, 1.0
  %v6728 = vadd.f32 %v6521, 1.0
  %v6729 = vadd.f32 %v6523, 1.0
  %v6730 = vadd.f32 %v6525, 1.0
  %v6731 = vadd.f32 %v6527, 1.0
  %v6732 = vadd.f32 %v6529, 1.0
  %v6733 = vadd.f32 %v6531, 1.0
  %v6734 = vrcp.pop %v6726
  %v6735 = vmul.f32 1.0, %v6734
  %v6736 = vrcp.pop %v6727
  %v6737 = vmul.f32 1.0, %v6736
  %v6738 = vrcp.pop %v6728
  %v6739 = vmul.f32 1.0, %v6738
  %v6740 = vrcp.pop %v6729
  %v6741 = vmul.f32 1.0, %v6740
  %v6742 = vrcp.pop %v6730
  %v6743 = vmul.f32 1.0, %v6742
  %v6744 = vrcp.pop %v6731
  %v6745 = vmul.f32 1.0, %v6744
  %v6746 = vrcp.pop %v6732
  %v6747 = vmul.f32 1.0, %v6746
  %v6748 = vrcp.pop %v6733
  %v6749 = vmul.f32 1.0, %v6748
  %vm6750 = vcmp.ge.f32.partialorder %v6490, 0.0
  %vm6751 = vcmp.ge.f32.partialorder %v6491, 0.0
  %vm6752 = vcmp.ge.f32.partialorder %v6492, 0.0
  %vm6753 = vcmp.ge.f32.partialorder %v6493, 0.0
  %vm6754 = vcmp.ge.f32.partialorder %v6494, 0.0
  %vm6755 = vcmp.ge.f32.partialorder %v6495, 0.0
  %vm6756 = vcmp.ge.f32.partialorder %v6496, 0.0
  %vm6757 = vcmp.ge.f32.partialorder %v6497, 0.0
  %v6758 = vmul.f32 %v6517, %v6735
  %v6759 = vmul.f32 %v6519, %v6737
  %v6760 = vmul.f32 %v6521, %v6739
  %v6761 = vmul.f32 %v6523, %v6741
  %v6762 = vmul.f32 %v6525, %v6743
  %v6763 = vmul.f32 %v6527, %v6745
  %v6764 = vmul.f32 %v6529, %v6747
  %v6765 = vmul.f32 %v6531, %v6749
  %v6766 = vsel %vm6750, %v6735, %v6758
  %v6767 = vsel %vm6751, %v6737, %v6759
  %v6768 = vsel %vm6752, %v6739, %v6760
  %v6769 = vsel %vm6753, %v6741, %v6761
  %v6770 = vsel %vm6754, %v6743, %v6762
  %v6771 = vsel %vm6755, %v6745, %v6763
  %v6772 = vsel %vm6756, %v6747, %v6764
  %v6773 = vsel %vm6757, %v6749, %v6765
  %v6775 = vrot.slane %v6499, 1
  %v6776 = vrot.slane %v6499, 2
  %v6777 = vrot.slane %v6499, 3
  %v6778 = vrot.slane %v6499, 4
  %v6779 = vrot.slane %v6499, 5
  %v6780 = vrot.slane %v6499, 6
  %v6781 = vrot.slane %v6499, 7
  %v6790 = vmul.f32 %v6766, %v6499
  %v6791 = vmul.f32 %v6767, %v6775
  %v6792 = vmul.f32 %v6768, %v6776
  %v6793 = vmul.f32 %v6769, %v6777
  %v6794 = vmul.f32 %v6770, %v6778
  %v6795 = vmul.f32 %v6771, %v6779
  %v6796 = vmul.f32 %v6772, %v6780
  %v6797 = vmul.f32 %v6773, %v6781
  %v6806 = vrot.slane %v6791, 7
  %v6807 = vsel %vm486, %v6806, %v6790
  %v6808 = vrot.slane %v6792, 6
  %v6809 = vsel %vm489, %v6808, %v6807
  %v6810 = vrot.slane %v6793, 5
  %v6811 = vsel %vm492, %v6810, %v6809
  %v6812 = vrot.slane %v6794, 4
  %v6813 = vsel %vm495, %v6812, %v6811
  %v6814 = vrot.slane %v6795, 3
  %v6815 = vsel %vm498, %v6814, %v6813
  %v6816 = vrot.slane %v6796, 2
  %v6817 = vsel %vm501, %v6816, %v6815
  %v6818 = vrot.slane %v6797, 1
  %v6819 = vsel %vm504, %v6818, %v6817
  %6821 = vst [vmem:[%s17] sm:$0xff] %v6819
  // Predicated region
  $region62: #{kvmem_forward.1} parent=0 // pred_check
    _
  $region63: #{kvmem_forward.1} parent=0 // pred_check_branch
    %6823 = sbr.rel (0) target = $region65
  $region64: #{kvmem_forward.1} parent=0 // pred_region
    _
  $region65: #{kvmem_forward.1} parent=0 // pred_fallthru
    _
  // Predicated region
  $region66: #{kvmem_forward.1} parent=0 // pred_check
    _
  $region67: #{kvmem_forward.1} parent=0 // pred_check_branch
    %6825 = sbr.rel (0) target = $region69
  $region68: #{kvmem_forward.1} parent=0 // pred_region
    _
  $region69: #{kvmem_forward.1} parent=0 // pred_fallthru
    _
  // Predicated region
  $region70: #{kvmem_forward.1} parent=0 // pred_check
    _
  $region71: #{kvmem_forward.1} parent=0 // pred_check_branch
    %6827 = sbr.rel (0) target = $region73
  $region72: #{kvmem_forward.1} parent=0 // pred_region
    _
  $region73: #{kvmem_forward.1} parent=0 // pred_fallthru
    _
  // Predicated region
  $region74: #{kvmem_forward.1} parent=0 // pred_check
    _
  $region75: #{kvmem_forward.1} parent=0 // pred_check_branch
    %6829 = sbr.rel (0) target = $region77
  $region76: #{kvmem_forward.1} parent=0 // pred_region
    _
  $region77: #{kvmem_forward.1} parent=0 // pred_fallthru
    _
  // Predicated region
  $region78: #{kvmem_forward.1} parent=0 // pred_check
    _
  $region79: #{kvmem_forward.1} parent=0 // pred_check_branch
    %6831 = sbr.rel (0) target = $region81
  $region80: #{kvmem_forward.1} parent=0 // pred_region
    _
  $region81: #{kvmem_forward.1} parent=0 // pred_fallthru
    _
  // Predicated region
  $region82: #{kvmem_forward.1} parent=0 // pred_check
    _
  $region83: #{kvmem_forward.1} parent=0 // pred_check_branch
    %6833 = sbr.rel (0) target = $region85
  $region84: #{kvmem_forward.1} parent=0 // pred_region
    _
  $region85: #{kvmem_forward.1} parent=0 // pred_fallthru
    _

</llo_original>
